<compile_context>
chip_gen: v5e
topology: v5e:2x2
jax: 0.10.0
libtpu: 0.0.40
codegen_flags: <defaults>
</compile_context>

<pallas_src>
import functools

import jax
import jax.numpy as jnp
from jax import lax
from jax.experimental import pallas as pl
from jax.experimental.pallas import tpu as pltpu


def _round_up(x, m):
    return ((x + m - 1) // m) * m


_VMEM_LIMIT = 40 * 1024 * 1024   # < 64 MiB physical on v7x, above v5e's 16 MiB default


# --------------------------------------------------------------------------- #
# Stage 1: conv_in + BN1 fused with the M grouped SK branch convs (+BN+LeakyReLU)
# --------------------------------------------------------------------------- #
def sk_branch_stage(x_body, x_halo, w_in, b_in, branch_ws, branch_bias, *,
                    B, nT, TH, H, W, Wp, Whp, M, mid, neg_slope=0.2):
    Cin = x_body.shape[-1]
    Cfe = M * mid                      # stacked branch channels (NOT padded to 128)
    halo = M - 1
    Hh = TH + 2 * halo
    has_halo = halo > 0

    def kernel(*refs):
        it = iter(refs)
        x_ref = next(it)
        xh_ref = next(it) if has_halo else None
        w_in_ref = next(it)
        b_in_ref = next(it)
        wb_refs = [next(it) for _ in range(M)]
        bb_ref = next(it)
        out_ref = next(it)
        psum_ref = next(it)
        h_scr = next(it)

        t = pl.program_id(1)
        row0 = t * TH

        # ---- 1x1 conv_in + folded BN1 over the body rows -> h (bf16) -------
        xb = x_ref[0].reshape(TH * Whp, Cin)
        hb = jnp.dot(xb, w_in_ref[...], preferred_element_type=jnp.float32)
        hb = hb + b_in_ref[...]
        # channel-invariant 2-D validity mask (broadcast over channels)
        rb = lax.broadcasted_iota(jnp.int32, (TH, Whp, 1), 0) + row0
        cb = lax.broadcasted_iota(jnp.int32, (TH, Whp, 1), 1) - halo
        vb = (rb < H) & (cb >= 0) & (cb < W)
        h_scr[halo:halo + TH] = jnp.where(
            vb, hb.reshape(TH, Whp, mid), 0.0).astype(h_scr.dtype)

        if has_halo:
            # tiny side input: the 2*halo halo rows of this tile
            xh = xh_ref[0].reshape(2 * halo * Whp, Cin)
            hh = jnp.dot(xh, w_in_ref[...], preferred_element_type=jnp.float32)
            hh = hh + b_in_ref[...]
            rh = lax.broadcasted_iota(jnp.int32, (2 * halo, Whp, 1), 0)
            rglob = row0 - halo + rh + jnp.where(rh >= halo, TH, 0)
            ch = lax.broadcasted_iota(jnp.int32, (2 * halo, Whp, 1), 1) - halo
            vh = (rglob >= 0) & (rglob < H) & (ch >= 0) & (ch < W)
            hh3 = jnp.where(vh, hh.reshape(2 * halo, Whp, mid),
                            0.0).astype(h_scr.dtype)
            h_scr[0:halo] = hh3[0:halo]
            h_scr[halo + TH:Hh] = hh3[halo:2 * halo]

        # output-pixel validity (for the GAP partial sums), channel-invariant
        rr = lax.broadcasted_iota(jnp.int32, (TH, Wp, 1), 0) + row0
        cc = lax.broadcasted_iota(jnp.int32, (TH, Wp, 1), 1)
        vmask = (rr < H) & (cc < W)

        # ---- M SK branch convs: tap-concat im2col + block-diag group weight -
        for i in range(M):
            k = 1 + 2 * i
            slabs = []
            for dy in range(k):
                for dx in range(k):
                    y0 = halo - i + dy
                    x0 = halo - i + dx
                    slabs.append(
                        h_scr[y0:y0 + TH, x0:x0 + Wp, :].reshape(TH * Wp, mid))
            hs = slabs[0] if len(slabs) == 1 else jnp.concatenate(slabs, axis=-1)
            y = jnp.dot(hs, wb_refs[i][...],
                        preferred_element_type=jnp.float32) + bb_ref[i]
            y = jnp.where(y > 0, y, neg_slope * y)           # LeakyReLU(0.2)
            y3 = y.reshape(TH, Wp, mid)
            # GAP partial sum from the f32 result, then store the bf16 slab
            psum_ref[0, 0, :, i * mid:(i + 1) * mid] = jnp.sum(
                jnp.where(vmask, y3, 0.0), axis=(0, 1))[None, :]
            out_ref[0, :, :, i * mid:(i + 1) * mid] = y3.astype(out_ref.dtype)

    in_specs = [pl.BlockSpec((1, TH, Whp, Cin), lambda b, t: (b, t, 0, 0))]
    operands = [x_body]
    if has_halo:
        in_specs.append(pl.BlockSpec((1, 2 * halo, Whp, Cin),
                                     lambda b, t: (b * nT + t, 0, 0, 0)))
        operands.append(x_halo)
    in_specs += [pl.BlockSpec((Cin, mid), lambda b, t: (0, 0)),
                 pl.BlockSpec((1, mid), lambda b, t: (0, 0))]
    operands += [w_in, b_in]
    for i in range(M):
        kk = (1 + 2 * i) ** 2
        in_specs.append(pl.BlockSpec((kk * mid, mid), lambda b, t: (0, 0)))
        operands.append(branch_ws[i])
    in_specs.append(pl.BlockSpec((M, 1, mid), lambda b, t: (0, 0, 0)))
    operands.append(branch_bias)

    out_shape = (jax.ShapeDtypeStruct((B * nT, TH, Wp, Cfe), jnp.bfloat16),
                 jax.ShapeDtypeStruct((B, nT, 1, Cfe), jnp.float32))
    out_specs = (pl.BlockSpec((1, TH, Wp, Cfe), lambda b, t: (b * nT + t, 0, 0, 0)),
                 pl.BlockSpec((1, 1, 1, Cfe), lambda b, t: (b, t, 0, 0)))

    return pl.pallas_call(
        kernel,
        out_shape=out_shape,
        grid_spec=pltpu.PrefetchScalarGridSpec(
            num_scalar_prefetch=0, grid=(B, nT),
            in_specs=in_specs, out_specs=out_specs,
            scratch_shapes=[pltpu.VMEM((Hh, Whp, mid), jnp.bfloat16)]),
        compiler_params=pltpu.CompilerParams(
            dimension_semantics=("parallel", "parallel"),
            vmem_limit_bytes=_VMEM_LIMIT),
    )(*operands)


# --------------------------------------------------------------------------- #
# Stage 2: GAP finalize + fc + fcs + branch softmax -> attention folded into
#          the conv_out weight: W_big[b] = diag(attn_i[b]) @ w3f, stacked over i.
# --------------------------------------------------------------------------- #
def sk_attention_stage(psum, fc_w, fc_b, fcs_w, fcs_b, w3f, *, M, mid, out_f, inv_n):
    B, nT = psum.shape[0], psum.shape[1]
    Cfe = M * mid
    d = fc_w.shape[1]

    def kernel(psum_ref, fcw_ref, fcb_ref, fcsw_ref, fcsb_ref, w3_ref, wbig_ref):
        ps = jnp.sum(psum_ref[...], axis=(1, 2))             # [B, Cfe]
        s = ps[:, 0:mid]
        for i in range(1, M):
            s = s + ps[:, i * mid:(i + 1) * mid]
        s = s * inv_n                                         # GAP = sum / (H*W)
        z = jnp.dot(s.astype(jnp.bfloat16), fcw_ref[...],
                    preferred_element_type=jnp.float32) + fcb_ref[...]
        zb = z.astype(jnp.bfloat16)
        logits = [jnp.dot(zb, fcsw_ref[i], preferred_element_type=jnp.float32)
                  + fcsb_ref[i] for i in range(M)]
        mx = logits[0]
        for i in range(1, M):
            mx = jnp.maximum(mx, logits[i])
        exps = [jnp.exp(l - mx) for l in logits]
        den = exps[0]
        for i in range(1, M):
            den = den + exps[i]
        inv = pl.reciprocal(den, approx=True)
        w3 = w3_ref[...]                                      # [mid, out_f] f32
        for i in range(M):
            attn_i = exps[i] * inv                            # [B, mid]
            wbig_ref[:, i * mid:(i + 1) * mid, :] = (
                attn_i[:, :, None] * w3[None, :, :]).astype(wbig_ref.dtype)

    return pl.pallas_call(
        kernel,
        out_shape=jax.ShapeDtypeStruct((B, Cfe, out_f), jnp.bfloat16),
        grid_spec=pltpu.PrefetchScalarGridSpec(
            num_scalar_prefetch=0, grid=(1,),
            in_specs=[pl.BlockSpec((B, nT, 1, Cfe), lambda i: (0, 0, 0, 0)),
                      pl.BlockSpec((mid, d), lambda i: (0, 0)),
                      pl.BlockSpec((1, d), lambda i: (0, 0)),
                      pl.BlockSpec((M, d, mid), lambda i: (0, 0, 0)),
                      pl.BlockSpec((M, 1, mid), lambda i: (0, 0, 0)),
                      pl.BlockSpec((mid, out_f), lambda i: (0, 0))],
            out_specs=pl.BlockSpec((B, Cfe, out_f), lambda i: (0, 0, 0))),
        compiler_params=pltpu.CompilerParams(dimension_semantics=("arbitrary",)),
    )(psum, fc_w, fc_b, fcs_w, fcs_b, w3f)


# --------------------------------------------------------------------------- #
# Stage 3: (attention-weighted sum + BN2 + conv_out + BN3) == one matmul + LeakyReLU
# --------------------------------------------------------------------------- #
def sk_fuse_out_stage(feas, w_big, b3, *, B, nT, TH, Wp, Cfe, out_f, neg_slope=0.2):
    def kernel(feas_ref, wbig_ref, b3_ref, o_ref):
        ft = feas_ref[0].reshape(TH * Wp, Cfe)
        y = jnp.dot(ft, wbig_ref[0],
                    preferred_element_type=jnp.float32) + b3_ref[...]
        y = jnp.where(y > 0, y, neg_slope * y)                # LeakyReLU(0.2)
        o_ref[...] = y.reshape(1, TH, Wp, out_f).astype(o_ref.dtype)

    return pl.pallas_call(
        kernel,
        out_shape=jax.ShapeDtypeStruct((B * nT, TH, Wp, out_f), jnp.float32),
        grid_spec=pltpu.PrefetchScalarGridSpec(
            num_scalar_prefetch=0, grid=(B, nT),
            in_specs=[pl.BlockSpec((1, TH, Wp, Cfe),
                                   lambda b, t: (b * nT + t, 0, 0, 0)),
                      pl.BlockSpec((1, Cfe, out_f), lambda b, t: (b, 0, 0)),
                      pl.BlockSpec((1, out_f), lambda b, t: (0, 0))],
            out_specs=pl.BlockSpec((1, TH, Wp, out_f),
                                   lambda b, t: (b * nT + t, 0, 0, 0))),
        compiler_params=pltpu.CompilerParams(
            dimension_semantics=("parallel", "parallel"),
            vmem_limit_bytes=_VMEM_LIMIT),
    )(feas, w_big, b3)


# ------------------------------- JAX glue ----------------------------------- #
def fold_bn(bn, eps=1e-5):
    scale = bn["gamma"] / jnp.sqrt(bn["var"] + eps)
    shift = bn["beta"] - bn["mean"] * scale
    return scale, shift


def init_params(key, in_f, out_f, mid_f, M, G, r, L):
    d = max(int(mid_f / r), L)
    keys = iter(jax.random.split(key, 128))

    def nrm(shape, s=0.1):
        return s * jax.random.normal(next(keys), shape, jnp.float32)

    def bn(c):
        return dict(
            gamma=jax.random.uniform(next(keys), (c,), jnp.float32, 0.5, 1.5),
            beta=nrm((c,)),
            mean=nrm((c,)),
            var=jax.random.uniform(next(keys), (c,), jnp.float32, 0.5, 1.5),
        )

    p = {}
    p["conv_in_w"] = nrm((mid_f, in_f, 1, 1))
    p["conv_in_b"] = nrm((mid_f,))
    p["bn1"] = bn(mid_f)
    for i in range(M):
        k = 1 + 2 * i
        p[f"sk_conv{i}_w"] = nrm((mid_f, mid_f // G, k, k))
        p[f"sk_conv{i}_b"] = nrm((mid_f,))
        p[f"sk_bn{i}"] = bn(mid_f)
    p["fc_w"] = nrm((d, mid_f))            # PyTorch Linear: [out, in]
    p["fc_b"] = nrm((d,))
    for i in range(M):
        p[f"fcs{i}_w"] = nrm((mid_f, d))
        p[f"fcs{i}_b"] = nrm((mid_f,))
    p["bn2"] = bn(mid_f)
    p["conv_out_w"] = nrm((out_f, mid_f, 1, 1))
    p["conv_out_b"] = nrm((out_f,))
    p["bn3"] = bn(out_f)
    return p, d


def _pick_tile_rows(H, Wp, Whp, Cin, mid, M, Cfe, *, row_target=2048,
                    budget_bytes=20 * 1024 * 1024):
    """Largest row tile whose per-step VMEM footprint stays within budget."""
    halo = M - 1
    kkmax = (2 * M - 1) ** 2

    def est(th):
        px = th * Wp
        b = 2 * th * Whp * Cin * 2              # x body tile (double-buffered, bf16)
        b += 2 * px * Cfe * 2                   # feas out tile (double-buffered, bf16)
        b += (th + 2 * halo) * Whp * mid * 2    # h scratch (bf16)
        b += th * Whp * mid * 4                 # conv_in f32 intermediate
        b += px * kkmax * mid * 2               # in-VMEM im2col for the widest branch
        b += 2 * px * mid * 4                   # branch f32 result + masked copy
        return b

    TH = max(1, min(H, pl.cdiv(row_target, Wp)))
    while TH > 1 and est(TH) > budget_bytes:
        TH = (TH + 1) // 2
    return TH


def sk_unit_forward(params, x_nchw, *, M, G, row_target=2048):
    x = jnp.transpose(x_nchw, (0, 2, 3, 1))              # NCHW -> NHWC
    B, H, W, Cin = x.shape
    mid = params["conv_in_w"].shape[0]
    out_f = params["conv_out_w"].shape[0]
    assert mid % G == 0
    cg = mid // G
    halo = M - 1
    Cfe = M * mid

    # ---------------- tiling constants (pad + mask, no divisibility asserts) --
    Wp = _round_up(W, 8)
    Whp = _round_up(Wp + 2 * halo, 8)
    TH = _pick_tile_rows(H, Wp, Whp, Cin, mid, M, Cfe, row_target=row_target)
    nT = pl.cdiv(H, TH)
    Hp = nT * TH

    # ---------------- fold BN + biases into bf16 matmul weights (static) -----
    s1, sh1 = fold_bn(params["bn1"])
    w_in = (jnp.transpose(params["conv_in_w"][:, :, 0, 0], (1, 0))
            * s1[None, :]).astype(jnp.bfloat16)                       # [Cin, mid]
    b_in = (s1 * params["conv_in_b"] + sh1)[None, :].astype(jnp.float32)

    branch_ws, branch_bias = [], []
    for i in range(M):
        k = 1 + 2 * i
        w = params[f"sk_conv{i}_w"]                                   # [mid, cg, k, k]
        s, sh = fold_bn(params[f"sk_bn{i}"])
        wt = jnp.transpose(w, (2, 3, 1, 0))                           # [k,k,cg,mid]
        # densify groups into a block-diagonal weight so the MXU contraction is
        # k^2*mid (tap-concat im2col) with a mid-wide output.  For large G this
        # wastes G-fold FLOPs; a per-group tap-concat path would avoid it.
        wd = jnp.zeros((k, k, mid, mid), jnp.float32)
        for g in range(G):
            wd = wd.at[:, :, g * cg:(g + 1) * cg, g * cg:(g + 1) * cg].set(
                wt[:, :, :, g * cg:(g + 1) * cg])
        wd = wd * s[None, None, None, :]
        branch_ws.append(wd.reshape(k * k * mid, mid).astype(jnp.bfloat16))
        branch_bias.append(s * params[f"sk_conv{i}_b"] + sh)
    branch_bias = jnp.stack(branch_bias, axis=0)[:, None, :].astype(jnp.float32)

    fc_w = jnp.transpose(params["fc_w"], (1, 0)).astype(jnp.bfloat16)  # [mid, d]
    fc_b = params["fc_b"][None, :].astype(jnp.float32)
    fcs_w = jnp.stack([jnp.transpose(params[f"fcs{i}_w"], (1, 0))
                       for i in range(M)], 0).astype(jnp.bfloat16)     # [M, d, mid]
    fcs_b = jnp.stack([params[f"fcs{i}_b"][None, :]
                       for i in range(M)], 0).astype(jnp.float32)      # [M, 1, mid]

    s2, sh2 = fold_bn(params["bn2"])
    s3, sh3 = fold_bn(params["bn3"])
    w3 = jnp.transpose(params["conv_out_w"][:, :, 0, 0], (1, 0))       # [mid, out]
    w3f = ((s2[:, None] * w3) * s3[None, :]).astype(jnp.float32)
    b3f = ((sh2 @ w3 + params["conv_out_b"]) * s3 + sh3)[None, :].astype(jnp.float32)

    # ---------------- inputs: body tiles read in place; tiny halo side-input --
    # TODO(synk): a memory_space=pl.ANY + manual make_async_copy path would also
    #             remove the body zero-padding copy; kept on BlockSpecs for robustness.
    x_body = jnp.pad(x, ((0, 0), (0, Hp - H), (halo, Whp - W - halo),
                         (0, 0))).astype(jnp.bfloat16)
    x_halo = None
    if halo > 0:
        xp = jnp.pad(x, ((0, 0), (halo, Hp - H + halo),
                         (halo, Whp - W - halo), (0, 0)))
        x_halo = jnp.stack(
            [jnp.concatenate(
                [xp[:, t * TH:t * TH + halo],
                 xp[:, t * TH + TH + halo:t * TH + TH + 2 * halo]], axis=1)
             for t in range(nT)], axis=1)                   # (B, nT, 2*halo, Whp, Cin)
        x_halo = x_halo.reshape(B * nT, 2 * halo, Whp, Cin).astype(jnp.bfloat16)

    # -------- stage 1: conv_in+BN1 fused with the M SK branch convolutions ---
    feas, psum = sk_branch_stage(
        x_body, x_halo, w_in, b_in, branch_ws, branch_bias,
        B=B, nT=nT, TH=TH, H=H, W=W, Wp=Wp, Whp=Whp, M=M, mid=mid)

    # -------- stage 2: SK attention folded into the conv_out weight ----------
    w_big = sk_attention_stage(psum, fc_w, fc_b, fcs_w, fcs_b, w3f,
                               M=M, mid=mid, out_f=out_f,
                               inv_n=1.0 / float(H * W))

    # -------- stage 3: single matmul = weighted sum + BN2 + conv_out + BN3 ---
    out = sk_fuse_out_stage(feas, w_big, b3f, B=B, nT=nT, TH=TH, Wp=Wp,
                            Cfe=Cfe, out_f=out_f)

    out = out.reshape(B, Hp, Wp, out_f)[:, :H, :W, :]
    return jnp.transpose(out, (0, 3, 1, 2))                 # back to NCHW


# --------------------------------- main -------------------------------------- #
if __name__ == "__main__":
    B, H, W = 2, 8, 8
    in_features, out_features = 32, 64
    mid_features = out_features // 2        # module default: out_features / 2 = 32
    M, G, r, L = 2, 2, 2, 16                # d = max(mid/r, L) = 16

    root = jax.random.PRNGKey(0)
    k_par, k_x = jax.random.split(root)
    params, d = init_params(k_par, in_features, out_features, mid_features, M, G, r, L)
    x = jax.random.normal(k_x, (B, in_features, H, W), jnp.float32)

    fwd = jax.jit(functools.partial(sk_unit_forward, M=M, G=G))
    out = jax.block_until_ready(fwd(params, x))
    assert out.shape == (B, out_features, H, W), out.shape
    assert bool(jnp.all(jnp.isfinite(out)))
    print("KERNEL_OK")
</pallas_src>

<mosaic_0001>
module attributes {stable_mosaic.version = 11 : i64} {
  func.func @kernel(%arg0: i32, %arg1: i32, %arg2: memref<1x8x16x32xbf16, #tpu.memory_space<vmem>>, %arg3: memref<1x2x16x32xbf16, #tpu.memory_space<vmem>>, %arg4: memref<32x32xbf16, #tpu.memory_space<vmem>>, %arg5: memref<1x32xf32, #tpu.memory_space<vmem>>, %arg6: memref<32x32xbf16, #tpu.memory_space<vmem>>, %arg7: memref<288x32xbf16, #tpu.memory_space<vmem>>, %arg8: memref<2x1x32xf32, #tpu.memory_space<vmem>>, %arg9: memref<1x8x8x64xbf16, #tpu.memory_space<vmem>>, %arg10: memref<1x1x1x64xf32, #tpu.memory_space<vmem>>, %arg11: memref<10x16x32xbf16, #tpu.memory_space<vmem>>) attributes {dimension_semantics = [#tpu.dimension_semantics<parallel>, #tpu.dimension_semantics<parallel>], iteration_bounds = array<i64: 2, 1>, scalar_prefetch = 0 : i64, scratch_operands = 1 : i64, tpu.core_type = #tpu.core_type<tc>, window_params = [{transform_indices = @transform_0, window_bounds = array<i64: 1, 8, 16, 32>}, {transform_indices = @transform_1, window_bounds = array<i64: 1, 2, 16, 32>}, {pipeline_mode = #tpu.pipeline_mode<synchronous>, transform_indices = @transform_2, window_bounds = array<i64: 32, 32>}, {pipeline_mode = #tpu.pipeline_mode<synchronous>, transform_indices = @transform_3, window_bounds = array<i64: 1, 32>}, {pipeline_mode = #tpu.pipeline_mode<synchronous>, transform_indices = @transform_4, window_bounds = array<i64: 32, 32>}, {pipeline_mode = #tpu.pipeline_mode<synchronous>, transform_indices = @transform_5, window_bounds = array<i64: 288, 32>}, {pipeline_mode = #tpu.pipeline_mode<synchronous>, transform_indices = @transform_6, window_bounds = array<i64: 2, 1, 32>}, {transform_indices = @transform_7, window_bounds = array<i64: 1, 8, 8, 64>}, {transform_indices = @transform_8, window_bounds = array<i64: 1, 1, 1, 64>}]} {
    %c8_i32 = arith.constant 8 : i32
    %0 = arith.muli %arg1, %c8_i32 : i32
    %c0 = arith.constant 0 : index
    %c0_0 = arith.constant 0 : index
    %c0_1 = arith.constant 0 : index
    %c0_2 = arith.constant 0 : index
    %1 = vector.load %arg2[%c0, %c0_0, %c0_1, %c0_2] : memref<1x8x16x32xbf16, #tpu.memory_space<vmem>>, vector<1x8x16x32xbf16>
    %2 = vector.shape_cast %1 : vector<1x8x16x32xbf16> to vector<8x16x32xbf16>
    %3 = vector.shape_cast %2 : vector<8x16x32xbf16> to vector<128x32xbf16>
    %c0_3 = arith.constant 0 : index
    %c0_4 = arith.constant 0 : index
    %4 = vector.load %arg4[%c0_3, %c0_4] : memref<32x32xbf16, #tpu.memory_space<vmem>>, vector<32x32xbf16>
    %cst = arith.constant dense<0.000000e+00> : vector<128x32xf32>
    %5 = tpu.matmul %3, %4, %cst {dimension_numbers = #tpu.dot_dimension_numbers<[1], [0], [0], [1], [0, 0, 1, 1], [], []>} : vector<128x32xbf16>, vector<32x32xbf16>, vector<128x32xf32> -> vector<128x32xf32>
    %c0_5 = arith.constant 0 : index
    %c0_6 = arith.constant 0 : index
    %6 = vector.load %arg5[%c0_5, %c0_6] : memref<1x32xf32, #tpu.memory_space<vmem>>, vector<1x32xf32>
    %7 = vector.broadcast %6 : vector<1x32xf32> to vector<128x32xf32>
    %8 = arith.addf %5, %7 : vector<128x32xf32>
    %9 = tpu.iota {dimensions = array<i32: 0>} : vector<8x16x1xi32>
    %10 = vector.broadcast %0 : i32 to vector<8x16x1xi32>
    %11 = arith.addi %9, %10 : vector<8x16x1xi32>
    %12 = tpu.iota {dimensions = array<i32: 1>} : vector<8x16x1xi32>
    %c1_i32 = arith.constant 1 : i32
    %13 = vector.broadcast %c1_i32 : i32 to vector<8x16x1xi32>
    %14 = arith.subi %12, %13 : vector<8x16x1xi32>
    %c8_i32_7 = arith.constant 8 : i32
    %15 = vector.broadcast %c8_i32_7 : i32 to vector<8x16x1xi32>
    %16 = arith.cmpi slt, %11, %15 : vector<8x16x1xi32>
    %c0_i32 = arith.constant 0 : i32
    %17 = vector.broadcast %c0_i32 : i32 to vector<8x16x1xi32>
    %18 = arith.cmpi sge, %14, %17 : vector<8x16x1xi32>
    %19 = arith.andi %16, %18 : vector<8x16x1xi1>
    %c8_i32_8 = arith.constant 8 : i32
    %20 = vector.broadcast %c8_i32_8 : i32 to vector<8x16x1xi32>
    %21 = arith.cmpi slt, %14, %20 : vector<8x16x1xi32>
    %22 = arith.andi %19, %21 : vector<8x16x1xi1>
    %23 = vector.shape_cast %8 : vector<128x32xf32> to vector<8x16x32xf32>
    %cst_9 = arith.constant 0.000000e+00 : f32
    %24 = vector.shape_cast %22 : vector<8x16x1xi1> to vector<8x16x1xi1>
    %25 = vector.broadcast %24 : vector<8x16x1xi1> to vector<8x16x32xi1>
    %26 = vector.broadcast %cst_9 : f32 to vector<8x16x32xf32>
    %27 = arith.select %25, %23, %26 : vector<8x16x32xi1>, vector<8x16x32xf32>
    %28 = arith.truncf %27 : vector<8x16x32xf32> to vector<8x16x32xbf16>
    %c1 = arith.constant 1 : index
    %c0_10 = arith.constant 0 : index
    %c0_11 = arith.constant 0 : index
    %29 = vector.load %arg11[%c1, %c0_10, %c0_11] : memref<10x16x32xbf16, #tpu.memory_space<vmem>>, vector<8x16x32xbf16>
    tpu.vector_store %arg11[%c1, %c0_10, %c0_11], %28 {strides = array<i32>} : memref<10x16x32xbf16, #tpu.memory_space<vmem>>, vector<8x16x32xbf16>,
    %c0_12 = arith.constant 0 : index
    %c0_13 = arith.constant 0 : index
    %c0_14 = arith.constant 0 : index
    %c0_15 = arith.constant 0 : index
    %30 = vector.load %arg3[%c0_12, %c0_13, %c0_14, %c0_15] : memref<1x2x16x32xbf16, #tpu.memory_space<vmem>>, vector<1x2x16x32xbf16>
    %31 = vector.shape_cast %30 : vector<1x2x16x32xbf16> to vector<2x16x32xbf16>
    %32 = vector.shape_cast %31 : vector<2x16x32xbf16> to vector<32x32xbf16>
    %c0_16 = arith.constant 0 : index
    %c0_17 = arith.constant 0 : index
    %33 = vector.load %arg4[%c0_16, %c0_17] : memref<32x32xbf16, #tpu.memory_space<vmem>>, vector<32x32xbf16>
    %cst_18 = arith.constant dense<0.000000e+00> : vector<32x32xf32>
    %34 = tpu.matmul %32, %33, %cst_18 {dimension_numbers = #tpu.dot_dimension_numbers<[1], [0], [0], [1], [0, 0, 1, 1], [], []>} : vector<32x32xbf16>, vector<32x32xbf16>, vector<32x32xf32> -> vector<32x32xf32>
    %c0_19 = arith.constant 0 : index
    %c0_20 = arith.constant 0 : index
    %35 = vector.load %arg5[%c0_19, %c0_20] : memref<1x32xf32, #tpu.memory_space<vmem>>, vector<1x32xf32>
    %36 = vector.broadcast %35 : vector<1x32xf32> to vector<32x32xf32>
    %37 = arith.addf %34, %36 : vector<32x32xf32>
    %38 = tpu.iota {dimensions = array<i32: 0>} : vector<2x16x1xi32>
    %c1_i32_21 = arith.constant 1 : i32
    %39 = arith.subi %0, %c1_i32_21 : i32
    %40 = vector.broadcast %39 : i32 to vector<2x16x1xi32>
    %41 = arith.addi %40, %38 : vector<2x16x1xi32>
    %c1_i32_22 = arith.constant 1 : i32
    %42 = vector.broadcast %c1_i32_22 : i32 to vector<2x16x1xi32>
    %43 = arith.cmpi sge, %38, %42 : vector<2x16x1xi32>
    %c8_i32_23 = arith.constant 8 : i32
    %c0_i32_24 = arith.constant 0 : i32
    %44 = vector.broadcast %c8_i32_23 : i32 to vector<2x16x1xi32>
    %45 = vector.broadcast %c0_i32_24 : i32 to vector<2x16x1xi32>
    %46 = arith.select %43, %44, %45 : vector<2x16x1xi1>, vector<2x16x1xi32>
    %47 = arith.addi %41, %46 : vector<2x16x1xi32>
    %48 = tpu.iota {dimensions = array<i32: 1>} : vector<2x16x1xi32>
    %c1_i32_25 = arith.constant 1 : i32
    %49 = vector.broadcast %c1_i32_25 : i32 to vector<2x16x1xi32>
    %50 = arith.subi %48, %49 : vector<2x16x1xi32>
    %c0_i32_26 = arith.constant 0 : i32
    %51 = vector.broadcast %c0_i32_26 : i32 to vector<2x16x1xi32>
    %52 = arith.cmpi sge, %47, %51 : vector<2x16x1xi32>
    %c8_i32_27 = arith.constant 8 : i32
    %53 = vector.broadcast %c8_i32_27 : i32 to vector<2x16x1xi32>
    %54 = arith.cmpi slt, %47, %53 : vector<2x16x1xi32>
    %55 = arith.andi %52, %54 : vector<2x16x1xi1>
    %c0_i32_28 = arith.constant 0 : i32
    %56 = vector.broadcast %c0_i32_28 : i32 to vector<2x16x1xi32>
    %57 = arith.cmpi sge, %50, %56 : vector<2x16x1xi32>
    %58 = arith.andi %55, %57 : vector<2x16x1xi1>
    %c8_i32_29 = arith.constant 8 : i32
    %59 = vector.broadcast %c8_i32_29 : i32 to vector<2x16x1xi32>
    %60 = arith.cmpi slt, %50, %59 : vector<2x16x1xi32>
    %61 = arith.andi %58, %60 : vector<2x16x1xi1>
    %62 = vector.shape_cast %37 : vector<32x32xf32> to vector<2x16x32xf32>
    %cst_30 = arith.constant 0.000000e+00 : f32
    %63 = vector.shape_cast %61 : vector<2x16x1xi1> to vector<2x16x1xi1>
    %64 = vector.broadcast %63 : vector<2x16x1xi1> to vector<2x16x32xi1>
    %65 = vector.broadcast %cst_30 : f32 to vector<2x16x32xf32>
    %66 = arith.select %64, %62, %65 : vector<2x16x32xi1>, vector<2x16x32xf32>
    %67 = arith.truncf %66 : vector<2x16x32xf32> to vector<2x16x32xbf16>
    %68 = vector.extract_strided_slice %67 {offsets = [0, 0, 0], sizes = [1, 16, 32], strides = [1, 1, 1]} : vector<2x16x32xbf16> to vector<1x16x32xbf16>
    %c0_31 = arith.constant 0 : index
    %c0_32 = arith.constant 0 : index
    %c0_33 = arith.constant 0 : index
    %69 = vector.load %arg11[%c0_31, %c0_32, %c0_33] : memref<10x16x32xbf16, #tpu.memory_space<vmem>>, vector<1x16x32xbf16>
    tpu.vector_store %arg11[%c0_31, %c0_32, %c0_33], %68 {strides = array<i32>} : memref<10x16x32xbf16, #tpu.memory_space<vmem>>, vector<1x16x32xbf16>,
    %70 = vector.extract_strided_slice %67 {offsets = [1, 0, 0], sizes = [1, 16, 32], strides = [1, 1, 1]} : vector<2x16x32xbf16> to vector<1x16x32xbf16>
    %c9 = arith.constant 9 : index
    %c0_34 = arith.constant 0 : index
    %c0_35 = arith.constant 0 : index
    %71 = vector.load %arg11[%c9, %c0_34, %c0_35] : memref<10x16x32xbf16, #tpu.memory_space<vmem>>, vector<1x16x32xbf16>
    tpu.vector_store %arg11[%c9, %c0_34, %c0_35], %70 {strides = array<i32>} : memref<10x16x32xbf16, #tpu.memory_space<vmem>>, vector<1x16x32xbf16>,
    %72 = tpu.iota {dimensions = array<i32: 0>} : vector<8x8x1xi32>
    %73 = vector.broadcast %0 : i32 to vector<8x8x1xi32>
    %74 = arith.addi %72, %73 : vector<8x8x1xi32>
    %75 = tpu.iota {dimensions = array<i32: 1>} : vector<8x8x1xi32>
    %c8_i32_36 = arith.constant 8 : i32
    %76 = vector.broadcast %c8_i32_36 : i32 to vector<8x8x1xi32>
    %77 = arith.cmpi slt, %74, %76 : vector<8x8x1xi32>
    %c8_i32_37 = arith.constant 8 : i32
    %78 = vector.broadcast %c8_i32_37 : i32 to vector<8x8x1xi32>
    %79 = arith.cmpi slt, %75, %78 : vector<8x8x1xi32>
    %80 = arith.andi %77, %79 : vector<8x8x1xi1>
    %c1_38 = arith.constant 1 : index
    %c1_39 = arith.constant 1 : index
    %c0_40 = arith.constant 0 : index
    %81 = vector.load %arg11[%c1_38, %c1_39, %c0_40] : memref<10x16x32xbf16, #tpu.memory_space<vmem>>, vector<8x8x32xbf16>
    %82 = vector.shape_cast %81 : vector<8x8x32xbf16> to vector<64x32xbf16>
    %c0_41 = arith.constant 0 : index
    %c0_42 = arith.constant 0 : index
    %83 = vector.load %arg6[%c0_41, %c0_42] : memref<32x32xbf16, #tpu.memory_space<vmem>>, vector<32x32xbf16>
    %cst_43 = arith.constant dense<0.000000e+00> : vector<64x32xf32>
    %84 = tpu.matmul %82, %83, %cst_43 {dimension_numbers = #tpu.dot_dimension_numbers<[1], [0], [0], [1], [0, 0, 1, 1], [], []>} : vector<64x32xbf16>, vector<32x32xbf16>, vector<64x32xf32> -> vector<64x32xf32>
    %c0_44 = arith.constant 0 : index
    %c0_45 = arith.constant 0 : index
    %c0_46 = arith.constant 0 : index
    %85 = vector.load %arg8[%c0_44, %c0_45, %c0_46] : memref<2x1x32xf32, #tpu.memory_space<vmem>>, vector<1x1x32xf32>
    %86 = vector.shape_cast %85 : vector<1x1x32xf32> to vector<1x32xf32>
    %87 = vector.broadcast %86 : vector<1x32xf32> to vector<64x32xf32>
    %88 = arith.addf %84, %87 : vector<64x32xf32>
    %cst_47 = arith.constant 0.000000e+00 : f32
    %89 = vector.broadcast %cst_47 : f32 to vector<64x32xf32>
    %90 = arith.cmpf ogt, %88, %89 : vector<64x32xf32>
    %cst_48 = arith.constant 2.000000e-01 : f32
    %91 = vector.broadcast %cst_48 : f32 to vector<64x32xf32>
    %92 = arith.mulf %91, %88 : vector<64x32xf32>
    %93 = arith.select %90, %88, %92 : vector<64x32xi1>, vector<64x32xf32>
    %94 = vector.shape_cast %93 : vector<64x32xf32> to vector<8x8x32xf32>
    %cst_49 = arith.constant 0.000000e+00 : f32
    %95 = vector.shape_cast %80 : vector<8x8x1xi1> to vector<8x8x1xi1>
    %96 = vector.broadcast %95 : vector<8x8x1xi1> to vector<8x8x32xi1>
    %97 = vector.broadcast %cst_49 : f32 to vector<8x8x32xf32>
    %98 = arith.select %96, %94, %97 : vector<8x8x32xi1>, vector<8x8x32xf32>
    %cst_50 = arith.constant dense<0.000000e+00> : vector<32xf32>
    %99 = vector.multi_reduction <add>, %98, %cst_50 [0, 1] : vector<8x8x32xf32> to vector<32xf32>
    %100 = vector.shape_cast %99 : vector<32xf32> to vector<1x32xf32>
    %c0_51 = arith.constant 0 : index
    %c0_52 = arith.constant 0 : index
    %c0_53 = arith.constant 0 : index
    %c0_54 = arith.constant 0 : index
    %101 = vector.load %arg10[%c0_51, %c0_52, %c0_53, %c0_54] : memref<1x1x1x64xf32, #tpu.memory_space<vmem>>, vector<1x1x1x32xf32>
    %102 = vector.shape_cast %101 : vector<1x1x1x32xf32> to vector<1x32xf32>
    %103 = vector.shape_cast %100 : vector<1x32xf32> to vector<1x1x1x32xf32>
    tpu.vector_store %arg10[%c0_51, %c0_52, %c0_53, %c0_54], %103 {strides = array<i32>} : memref<1x1x1x64xf32, #tpu.memory_space<vmem>>, vector<1x1x1x32xf32>,
    %104 = arith.truncf %94 : vector<8x8x32xf32> to vector<8x8x32xbf16>
    %c0_55 = arith.constant 0 : index
    %c0_56 = arith.constant 0 : index
    %c0_57 = arith.constant 0 : index
    %c0_58 = arith.constant 0 : index
    %105 = vector.load %arg9[%c0_55, %c0_56, %c0_57, %c0_58] : memref<1x8x8x64xbf16, #tpu.memory_space<vmem>>, vector<1x8x8x32xbf16>
    %106 = vector.shape_cast %105 : vector<1x8x8x32xbf16> to vector<8x8x32xbf16>
    %107 = vector.shape_cast %104 : vector<8x8x32xbf16> to vector<1x8x8x32xbf16>
    tpu.vector_store %arg9[%c0_55, %c0_56, %c0_57, %c0_58], %107 {strides = array<i32>} : memref<1x8x8x64xbf16, #tpu.memory_space<vmem>>, vector<1x8x8x32xbf16>,
    %c0_59 = arith.constant 0 : index
    %c0_60 = arith.constant 0 : index
    %c0_61 = arith.constant 0 : index
    %108 = vector.load %arg11[%c0_59, %c0_60, %c0_61] : memref<10x16x32xbf16, #tpu.memory_space<vmem>>, vector<8x8x32xbf16>
    %109 = vector.shape_cast %108 : vector<8x8x32xbf16> to vector<64x32xbf16>
    %c0_62 = arith.constant 0 : index
    %c1_63 = arith.constant 1 : index
    %c0_64 = arith.constant 0 : index
    %110 = vector.load %arg11[%c0_62, %c1_63, %c0_64] : memref<10x16x32xbf16, #tpu.memory_space<vmem>>, vector<8x8x32xbf16>
    %111 = vector.shape_cast %110 : vector<8x8x32xbf16> to vector<64x32xbf16>
    %c0_65 = arith.constant 0 : index
    %c2 = arith.constant 2 : index
    %c0_66 = arith.constant 0 : index
    %112 = vector.load %arg11[%c0_65, %c2, %c0_66] : memref<10x16x32xbf16, #tpu.memory_space<vmem>>, vector<8x8x32xbf16>
    %113 = vector.shape_cast %112 : vector<8x8x32xbf16> to vector<64x32xbf16>
    %c1_67 = arith.constant 1 : index
    %c0_68 = arith.constant 0 : index
    %c0_69 = arith.constant 0 : index
    %114 = vector.load %arg11[%c1_67, %c0_68, %c0_69] : memref<10x16x32xbf16, #tpu.memory_space<vmem>>, vector<8x8x32xbf16>
    %115 = vector.shape_cast %114 : vector<8x8x32xbf16> to vector<64x32xbf16>
    %c1_70 = arith.constant 1 : index
    %c1_71 = arith.constant 1 : index
    %c0_72 = arith.constant 0 : index
    %116 = vector.load %arg11[%c1_70, %c1_71, %c0_72] : memref<10x16x32xbf16, #tpu.memory_space<vmem>>, vector<8x8x32xbf16>
    %117 = vector.shape_cast %116 : vector<8x8x32xbf16> to vector<64x32xbf16>
    %c1_73 = arith.constant 1 : index
    %c2_74 = arith.constant 2 : index
    %c0_75 = arith.constant 0 : index
    %118 = vector.load %arg11[%c1_73, %c2_74, %c0_75] : memref<10x16x32xbf16, #tpu.memory_space<vmem>>, vector<8x8x32xbf16>
    %119 = vector.shape_cast %118 : vector<8x8x32xbf16> to vector<64x32xbf16>
    %c2_76 = arith.constant 2 : index
    %c0_77 = arith.constant 0 : index
    %c0_78 = arith.constant 0 : index
    %120 = vector.load %arg11[%c2_76, %c0_77, %c0_78] : memref<10x16x32xbf16, #tpu.memory_space<vmem>>, vector<8x8x32xbf16>
    %121 = vector.shape_cast %120 : vector<8x8x32xbf16> to vector<64x32xbf16>
    %c2_79 = arith.constant 2 : index
    %c1_80 = arith.constant 1 : index
    %c0_81 = arith.constant 0 : index
    %122 = vector.load %arg11[%c2_79, %c1_80, %c0_81] : memref<10x16x32xbf16, #tpu.memory_space<vmem>>, vector<8x8x32xbf16>
    %123 = vector.shape_cast %122 : vector<8x8x32xbf16> to vector<64x32xbf16>
    %c2_82 = arith.constant 2 : index
    %c2_83 = arith.constant 2 : index
    %c0_84 = arith.constant 0 : index
    %124 = vector.load %arg11[%c2_82, %c2_83, %c0_84] : memref<10x16x32xbf16, #tpu.memory_space<vmem>>, vector<8x8x32xbf16>
    %125 = vector.shape_cast %124 : vector<8x8x32xbf16> to vector<64x32xbf16>
    %126 = tpu.concatenate %109, %111, %113, %115, %117, %119, %121, %123, %125 in 1 : vector<64x32xbf16>, vector<64x32xbf16>, vector<64x32xbf16>, vector<64x32xbf16>, vector<64x32xbf16>, vector<64x32xbf16>, vector<64x32xbf16>, vector<64x32xbf16>, vector<64x32xbf16> -> vector<64x288xbf16>
    %c0_85 = arith.constant 0 : index
    %c0_86 = arith.constant 0 : index
    %127 = vector.load %arg7[%c0_85, %c0_86] : memref<288x32xbf16, #tpu.memory_space<vmem>>, vector<288x32xbf16>
    %cst_87 = arith.constant dense<0.000000e+00> : vector<64x32xf32>
    %128 = tpu.matmul %126, %127, %cst_87 {dimension_numbers = #tpu.dot_dimension_numbers<[1], [0], [0], [1], [0, 0, 1, 1], [], []>} : vector<64x288xbf16>, vector<288x32xbf16>, vector<64x32xf32> -> vector<64x32xf32>
    %c1_88 = arith.constant 1 : index
    %c0_89 = arith.constant 0 : index
    %c0_90 = arith.constant 0 : index
    %129 = vector.load %arg8[%c1_88, %c0_89, %c0_90] : memref<2x1x32xf32, #tpu.memory_space<vmem>>, vector<1x1x32xf32>
    %130 = vector.shape_cast %129 : vector<1x1x32xf32> to vector<1x32xf32>
    %131 = vector.broadcast %130 : vector<1x32xf32> to vector<64x32xf32>
    %132 = arith.addf %128, %131 : vector<64x32xf32>
    %cst_91 = arith.constant 0.000000e+00 : f32
    %133 = vector.broadcast %cst_91 : f32 to vector<64x32xf32>
    %134 = arith.cmpf ogt, %132, %133 : vector<64x32xf32>
    %cst_92 = arith.constant 2.000000e-01 : f32
    %135 = vector.broadcast %cst_92 : f32 to vector<64x32xf32>
    %136 = arith.mulf %135, %132 : vector<64x32xf32>
    %137 = arith.select %134, %132, %136 : vector<64x32xi1>, vector<64x32xf32>
    %138 = vector.shape_cast %137 : vector<64x32xf32> to vector<8x8x32xf32>
    %cst_93 = arith.constant 0.000000e+00 : f32
    %139 = vector.shape_cast %80 : vector<8x8x1xi1> to vector<8x8x1xi1>
    %140 = vector.broadcast %139 : vector<8x8x1xi1> to vector<8x8x32xi1>
    %141 = vector.broadcast %cst_93 : f32 to vector<8x8x32xf32>
    %142 = arith.select %140, %138, %141 : vector<8x8x32xi1>, vector<8x8x32xf32>
    %cst_94 = arith.constant dense<0.000000e+00> : vector<32xf32>
    %143 = vector.multi_reduction <add>, %142, %cst_94 [0, 1] : vector<8x8x32xf32> to vector<32xf32>
    %144 = vector.shape_cast %143 : vector<32xf32> to vector<1x32xf32>
    %c0_95 = arith.constant 0 : index
    %c0_96 = arith.constant 0 : index
    %c0_97 = arith.constant 0 : index
    %c32 = arith.constant 32 : index
    %145 = vector.load %arg10[%c0_95, %c0_96, %c0_97, %c32] : memref<1x1x1x64xf32, #tpu.memory_space<vmem>>, vector<1x1x1x32xf32>
    %146 = vector.shape_cast %145 : vector<1x1x1x32xf32> to vector<1x32xf32>
    %147 = vector.shape_cast %144 : vector<1x32xf32> to vector<1x1x1x32xf32>
    tpu.vector_store %arg10[%c0_95, %c0_96, %c0_97, %c32], %147 {strides = array<i32>} : memref<1x1x1x64xf32, #tpu.memory_space<vmem>>, vector<1x1x1x32xf32>,
    %148 = arith.truncf %138 : vector<8x8x32xf32> to vector<8x8x32xbf16>
    %c0_98 = arith.constant 0 : index
    %c0_99 = arith.constant 0 : index
    %c0_100 = arith.constant 0 : index
    %c32_101 = arith.constant 32 : index
    %149 = vector.load %arg9[%c0_98, %c0_99, %c0_100, %c32_101] : memref<1x8x8x64xbf16, #tpu.memory_space<vmem>>, vector<1x8x8x32xbf16>
    %150 = vector.shape_cast %149 : vector<1x8x8x32xbf16> to vector<8x8x32xbf16>
    %151 = vector.shape_cast %148 : vector<8x8x32xbf16> to vector<1x8x8x32xbf16>
    tpu.vector_store %arg9[%c0_98, %c0_99, %c0_100, %c32_101], %151 {strides = array<i32>} : memref<1x8x8x64xbf16, #tpu.memory_space<vmem>>, vector<1x8x8x32xbf16>,
    return
  }
  func.func @transform_0(%arg0: i32, %arg1: i32) -> (i32, i32, i32, i32) {
    %c0_i32 = arith.constant 0 : i32
    %c0_i32_0 = arith.constant 0 : i32
    %c0_i32_1 = arith.constant 0 : i32
    return %arg0, %arg1, %c0_i32, %c0_i32_0 : i32, i32, i32, i32
  }
  func.func @transform_1(%arg0: i32, %arg1: i32) -> (i32, i32, i32, i32) {
    %c1_i32 = arith.constant 1 : i32
    %0 = arith.muli %arg0, %c1_i32 : i32
    %1 = arith.addi %0, %arg1 : i32
    %c0_i32 = arith.constant 0 : i32
    %c0_i32_0 = arith.constant 0 : i32
    %c0_i32_1 = arith.constant 0 : i32
    %c0_i32_2 = arith.constant 0 : i32
    return %1, %c0_i32, %c0_i32_0, %c0_i32_1 : i32, i32, i32, i32
  }
  func.func @transform_2(%arg0: i32, %arg1: i32) -> (i32, i32) {
    %c0_i32 = arith.constant 0 : i32
    %c0_i32_0 = arith.constant 0 : i32
    %c0_i32_1 = arith.constant 0 : i32
    return %c0_i32, %c0_i32_0 : i32, i32
  }
  func.func @transform_3(%arg0: i32, %arg1: i32) -> (i32, i32) {
    %c0_i32 = arith.constant 0 : i32
    %c0_i32_0 = arith.constant 0 : i32
    %c0_i32_1 = arith.constant 0 : i32
    return %c0_i32, %c0_i32_0 : i32, i32
  }
  func.func @transform_4(%arg0: i32, %arg1: i32) -> (i32, i32) {
    %c0_i32 = arith.constant 0 : i32
    %c0_i32_0 = arith.constant 0 : i32
    %c0_i32_1 = arith.constant 0 : i32
    return %c0_i32, %c0_i32_0 : i32, i32
  }
  func.func @transform_5(%arg0: i32, %arg1: i32) -> (i32, i32) {
    %c0_i32 = arith.constant 0 : i32
    %c0_i32_0 = arith.constant 0 : i32
    %c0_i32_1 = arith.constant 0 : i32
    return %c0_i32, %c0_i32_0 : i32, i32
  }
  func.func @transform_6(%arg0: i32, %arg1: i32) -> (i32, i32, i32) {
    %c0_i32 = arith.constant 0 : i32
    %c0_i32_0 = arith.constant 0 : i32
    %c0_i32_1 = arith.constant 0 : i32
    %c0_i32_2 = arith.constant 0 : i32
    return %c0_i32, %c0_i32_0, %c0_i32_1 : i32, i32, i32
  }
  func.func @transform_7(%arg0: i32, %arg1: i32) -> (i32, i32, i32, i32) {
    %c1_i32 = arith.constant 1 : i32
    %0 = arith.muli %arg0, %c1_i32 : i32
    %1 = arith.addi %0, %arg1 : i32
    %c0_i32 = arith.constant 0 : i32
    %c0_i32_0 = arith.constant 0 : i32
    %c0_i32_1 = arith.constant 0 : i32
    %c0_i32_2 = arith.constant 0 : i32
    return %1, %c0_i32, %c0_i32_0, %c0_i32_1 : i32, i32, i32, i32
  }
  func.func @transform_8(%arg0: i32, %arg1: i32) -> (i32, i32, i32, i32) {
    %c0_i32 = arith.constant 0 : i32
    %c0_i32_0 = arith.constant 0 : i32
    %c0_i32_1 = arith.constant 0 : i32
    return %arg0, %arg1, %c0_i32, %c0_i32_0 : i32, i32, i32, i32
  }
}

module attributes {stable_mosaic.version = 11 : i64} {
  func.func @kernel(%arg0: i32, %arg1: memref<2x1x1x64xf32, #tpu.memory_space<vmem>>, %arg2: memref<32x16xbf16, #tpu.memory_space<vmem>>, %arg3: memref<1x16xf32, #tpu.memory_space<vmem>>, %arg4: memref<2x16x32xbf16, #tpu.memory_space<vmem>>, %arg5: memref<2x1x32xf32, #tpu.memory_space<vmem>>, %arg6: memref<32x64xf32, #tpu.memory_space<vmem>>, %arg7: memref<2x64x64xbf16, #tpu.memory_space<vmem>>) attributes {dimension_semantics = [#tpu.dimension_semantics<arbitrary>], iteration_bounds = array<i64: 1>, scalar_prefetch = 0 : i64, scratch_operands = 0 : i64, tpu.core_type = #tpu.core_type<tc>, window_params = [{pipeline_mode = #tpu.pipeline_mode<synchronous>, transform_indices = @transform_0, window_bounds = array<i64: 2, 1, 1, 64>}, {pipeline_mode = #tpu.pipeline_mode<synchronous>, transform_indices = @transform_1, window_bounds = array<i64: 32, 16>}, {pipeline_mode = #tpu.pipeline_mode<synchronous>, transform_indices = @transform_2, window_bounds = array<i64: 1, 16>}, {pipeline_mode = #tpu.pipeline_mode<synchronous>, transform_indices = @transform_3, window_bounds = array<i64: 2, 16, 32>}, {pipeline_mode = #tpu.pipeline_mode<synchronous>, transform_indices = @transform_4, window_bounds = array<i64: 2, 1, 32>}, {pipeline_mode = #tpu.pipeline_mode<synchronous>, transform_indices = @transform_5, window_bounds = array<i64: 32, 64>}, {pipeline_mode = #tpu.pipeline_mode<synchronous>, transform_indices = @transform_6, window_bounds = array<i64: 2, 64, 64>}]} {
    %c0 = arith.constant 0 : index
    %c0_0 = arith.constant 0 : index
    %c0_1 = arith.constant 0 : index
    %c0_2 = arith.constant 0 : index
    %0 = vector.load %arg1[%c0, %c0_0, %c0_1, %c0_2] : memref<2x1x1x64xf32, #tpu.memory_space<vmem>>, vector<2x1x1x64xf32>
    %cst = arith.constant dense<0.000000e+00> : vector<2x64xf32>
    %1 = vector.multi_reduction <add>, %0, %cst [1, 2] : vector<2x1x1x64xf32> to vector<2x64xf32>
    %2 = vector.extract_strided_slice %1 {offsets = [0, 0], sizes = [2, 32], strides = [1, 1]} : vector<2x64xf32> to vector<2x32xf32>
    %3 = vector.extract_strided_slice %1 {offsets = [0, 32], sizes = [2, 32], strides = [1, 1]} : vector<2x64xf32> to vector<2x32xf32>
    %4 = arith.addf %2, %3 : vector<2x32xf32>
    %cst_3 = arith.constant 1.562500e-02 : f32
    %5 = vector.broadcast %cst_3 : f32 to vector<2x32xf32>
    %6 = arith.mulf %4, %5 : vector<2x32xf32>
    %7 = arith.truncf %6 : vector<2x32xf32> to vector<2x32xbf16>
    %c0_4 = arith.constant 0 : index
    %c0_5 = arith.constant 0 : index
    %8 = vector.load %arg2[%c0_4, %c0_5] : memref<32x16xbf16, #tpu.memory_space<vmem>>, vector<32x16xbf16>
    %cst_6 = arith.constant dense<0.000000e+00> : vector<2x16xf32>
    %9 = tpu.matmul %7, %8, %cst_6 {dimension_numbers = #tpu.dot_dimension_numbers<[1], [0], [0], [1], [0, 0, 1, 1], [], []>} : vector<2x32xbf16>, vector<32x16xbf16>, vector<2x16xf32> -> vector<2x16xf32>
    %c0_7 = arith.constant 0 : index
    %c0_8 = arith.constant 0 : index
    %10 = vector.load %arg3[%c0_7, %c0_8] : memref<1x16xf32, #tpu.memory_space<vmem>>, vector<1x16xf32>
    %11 = vector.broadcast %10 : vector<1x16xf32> to vector<2x16xf32>
    %12 = arith.addf %9, %11 : vector<2x16xf32>
    %13 = arith.truncf %12 : vector<2x16xf32> to vector<2x16xbf16>
    %c0_9 = arith.constant 0 : index
    %c0_10 = arith.constant 0 : index
    %c0_11 = arith.constant 0 : index
    %14 = vector.load %arg4[%c0_9, %c0_10, %c0_11] : memref<2x16x32xbf16, #tpu.memory_space<vmem>>, vector<1x16x32xbf16>
    %15 = vector.shape_cast %14 : vector<1x16x32xbf16> to vector<16x32xbf16>
    %cst_12 = arith.constant dense<0.000000e+00> : vector<2x32xf32>
    %16 = tpu.matmul %13, %15, %cst_12 {dimension_numbers = #tpu.dot_dimension_numbers<[1], [0], [0], [1], [0, 0, 1, 1], [], []>} : vector<2x16xbf16>, vector<16x32xbf16>, vector<2x32xf32> -> vector<2x32xf32>
    %c0_13 = arith.constant 0 : index
    %c0_14 = arith.constant 0 : index
    %c0_15 = arith.constant 0 : index
    %17 = vector.load %arg5[%c0_13, %c0_14, %c0_15] : memref<2x1x32xf32, #tpu.memory_space<vmem>>, vector<1x1x32xf32>
    %18 = vector.shape_cast %17 : vector<1x1x32xf32> to vector<1x32xf32>
    %19 = vector.broadcast %18 : vector<1x32xf32> to vector<2x32xf32>
    %20 = arith.addf %16, %19 : vector<2x32xf32>
    %c1 = arith.constant 1 : index
    %c0_16 = arith.constant 0 : index
    %c0_17 = arith.constant 0 : index
    %21 = vector.load %arg4[%c1, %c0_16, %c0_17] : memref<2x16x32xbf16, #tpu.memory_space<vmem>>, vector<1x16x32xbf16>
    %22 = vector.shape_cast %21 : vector<1x16x32xbf16> to vector<16x32xbf16>
    %cst_18 = arith.constant dense<0.000000e+00> : vector<2x32xf32>
    %23 = tpu.matmul %13, %22, %cst_18 {dimension_numbers = #tpu.dot_dimension_numbers<[1], [0], [0], [1], [0, 0, 1, 1], [], []>} : vector<2x16xbf16>, vector<16x32xbf16>, vector<2x32xf32> -> vector<2x32xf32>
    %c1_19 = arith.constant 1 : index
    %c0_20 = arith.constant 0 : index
    %c0_21 = arith.constant 0 : index
    %24 = vector.load %arg5[%c1_19, %c0_20, %c0_21] : memref<2x1x32xf32, #tpu.memory_space<vmem>>, vector<1x1x32xf32>
    %25 = vector.shape_cast %24 : vector<1x1x32xf32> to vector<1x32xf32>
    %26 = vector.broadcast %25 : vector<1x32xf32> to vector<2x32xf32>
    %27 = arith.addf %23, %26 : vector<2x32xf32>
    %28 = arith.maximumf %20, %27 : vector<2x32xf32>
    %29 = arith.subf %20, %28 : vector<2x32xf32>
    %30 = math.exp %29 : vector<2x32xf32>
    %31 = arith.subf %27, %28 : vector<2x32xf32>
    %32 = math.exp %31 : vector<2x32xf32>
    %33 = arith.addf %30, %32 : vector<2x32xf32>
    %34 = tpu.reciprocal %33 {approx = true} : vector<2x32xf32> -> vector<2x32xf32>
    %c0_22 = arith.constant 0 : index
    %c0_23 = arith.constant 0 : index
    %35 = vector.load %arg6[%c0_22, %c0_23] : memref<32x64xf32, #tpu.memory_space<vmem>>, vector<32x64xf32>
    %36 = arith.mulf %30, %34 : vector<2x32xf32>
    %37 = vector.shape_cast %36 : vector<2x32xf32> to vector<2x32x1xf32>
    %38 = vector.shape_cast %35 : vector<32x64xf32> to vector<1x32x64xf32>
    %39 = vector.broadcast %37 : vector<2x32x1xf32> to vector<2x32x64xf32>
    %40 = vector.broadcast %38 : vector<1x32x64xf32> to vector<2x32x64xf32>
    %41 = arith.mulf %39, %40 : vector<2x32x64xf32>
    %42 = arith.truncf %41 : vector<2x32x64xf32> to vector<2x32x64xbf16>
    %c0_24 = arith.constant 0 : index
    %c0_25 = arith.constant 0 : index
    %c0_26 = arith.constant 0 : index
    %43 = vector.load %arg7[%c0_24, %c0_25, %c0_26] : memref<2x64x64xbf16, #tpu.memory_space<vmem>>, vector<2x32x64xbf16>
    tpu.vector_store %arg7[%c0_24, %c0_25, %c0_26], %42 {strides = array<i32>} : memref<2x64x64xbf16, #tpu.memory_space<vmem>>, vector<2x32x64xbf16>,
    %44 = arith.mulf %32, %34 : vector<2x32xf32>
    %45 = vector.shape_cast %44 : vector<2x32xf32> to vector<2x32x1xf32>
    %46 = vector.shape_cast %35 : vector<32x64xf32> to vector<1x32x64xf32>
    %47 = vector.broadcast %45 : vector<2x32x1xf32> to vector<2x32x64xf32>
    %48 = vector.broadcast %46 : vector<1x32x64xf32> to vector<2x32x64xf32>
    %49 = arith.mulf %47, %48 : vector<2x32x64xf32>
    %50 = arith.truncf %49 : vector<2x32x64xf32> to vector<2x32x64xbf16>
    %c0_27 = arith.constant 0 : index
    %c32 = arith.constant 32 : index
    %c0_28 = arith.constant 0 : index
    %51 = vector.load %arg7[%c0_27, %c32, %c0_28] : memref<2x64x64xbf16, #tpu.memory_space<vmem>>, vector<2x32x64xbf16>
    tpu.vector_store %arg7[%c0_27, %c32, %c0_28], %50 {strides = array<i32>} : memref<2x64x64xbf16, #tpu.memory_space<vmem>>, vector<2x32x64xbf16>,
    return
  }
  func.func @transform_0(%arg0: i32) -> (i32, i32, i32, i32) {
    %c0_i32 = arith.constant 0 : i32
    %c0_i32_0 = arith.constant 0 : i32
    %c0_i32_1 = arith.constant 0 : i32
    %c0_i32_2 = arith.constant 0 : i32
    %c0_i32_3 = arith.constant 0 : i32
    return %c0_i32, %c0_i32_0, %c0_i32_1, %c0_i32_2 : i32, i32, i32, i32
  }
  func.func @transform_1(%arg0: i32) -> (i32, i32) {
    %c0_i32 = arith.constant 0 : i32
    %c0_i32_0 = arith.constant 0 : i32
    %c0_i32_1 = arith.constant 0 : i32
    return %c0_i32, %c0_i32_0 : i32, i32
  }
  func.func @transform_2(%arg0: i32) -> (i32, i32) {
    %c0_i32 = arith.constant 0 : i32
    %c0_i32_0 = arith.constant 0 : i32
    %c0_i32_1 = arith.constant 0 : i32
    return %c0_i32, %c0_i32_0 : i32, i32
  }
  func.func @transform_3(%arg0: i32) -> (i32, i32, i32) {
    %c0_i32 = arith.constant 0 : i32
    %c0_i32_0 = arith.constant 0 : i32
    %c0_i32_1 = arith.constant 0 : i32
    %c0_i32_2 = arith.constant 0 : i32
    return %c0_i32, %c0_i32_0, %c0_i32_1 : i32, i32, i32
  }
  func.func @transform_4(%arg0: i32) -> (i32, i32, i32) {
    %c0_i32 = arith.constant 0 : i32
    %c0_i32_0 = arith.constant 0 : i32
    %c0_i32_1 = arith.constant 0 : i32
    %c0_i32_2 = arith.constant 0 : i32
    return %c0_i32, %c0_i32_0, %c0_i32_1 : i32, i32, i32
  }
  func.func @transform_5(%arg0: i32) -> (i32, i32) {
    %c0_i32 = arith.constant 0 : i32
    %c0_i32_0 = arith.constant 0 : i32
    %c0_i32_1 = arith.constant 0 : i32
    return %c0_i32, %c0_i32_0 : i32, i32
  }
  func.func @transform_6(%arg0: i32) -> (i32, i32, i32) {
    %c0_i32 = arith.constant 0 : i32
    %c0_i32_0 = arith.constant 0 : i32
    %c0_i32_1 = arith.constant 0 : i32
    %c0_i32_2 = arith.constant 0 : i32
    return %c0_i32, %c0_i32_0, %c0_i32_1 : i32, i32, i32
  }
}

module attributes {stable_mosaic.version = 11 : i64} {
  func.func @kernel(%arg0: i32, %arg1: i32, %arg2: memref<1x8x8x64xbf16, #tpu.memory_space<vmem>>, %arg3: memref<1x64x64xbf16, #tpu.memory_space<vmem>>, %arg4: memref<1x64xf32, #tpu.memory_space<vmem>>, %arg5: memref<1x8x8x64xf32, #tpu.memory_space<vmem>>) attributes {dimension_semantics = [#tpu.dimension_semantics<parallel>, #tpu.dimension_semantics<parallel>], iteration_bounds = array<i64: 2, 1>, scalar_prefetch = 0 : i64, scratch_operands = 0 : i64, tpu.core_type = #tpu.core_type<tc>, window_params = [{transform_indices = @transform_0, window_bounds = array<i64: 1, 8, 8, 64>}, {transform_indices = @transform_1, window_bounds = array<i64: 1, 64, 64>}, {pipeline_mode = #tpu.pipeline_mode<synchronous>, transform_indices = @transform_2, window_bounds = array<i64: 1, 64>}, {transform_indices = @transform_3, window_bounds = array<i64: 1, 8, 8, 64>}]} {
    %c0 = arith.constant 0 : index
    %c0_0 = arith.constant 0 : index
    %c0_1 = arith.constant 0 : index
    %c0_2 = arith.constant 0 : index
    %0 = vector.load %arg2[%c0, %c0_0, %c0_1, %c0_2] : memref<1x8x8x64xbf16, #tpu.memory_space<vmem>>, vector<1x8x8x64xbf16>
    %1 = vector.shape_cast %0 : vector<1x8x8x64xbf16> to vector<8x8x64xbf16>
    %2 = vector.shape_cast %1 : vector<8x8x64xbf16> to vector<64x64xbf16>
    %c0_3 = arith.constant 0 : index
    %c0_4 = arith.constant 0 : index
    %c0_5 = arith.constant 0 : index
    %3 = vector.load %arg3[%c0_3, %c0_4, %c0_5] : memref<1x64x64xbf16, #tpu.memory_space<vmem>>, vector<1x64x64xbf16>
    %4 = vector.shape_cast %3 : vector<1x64x64xbf16> to vector<64x64xbf16>
    %cst = arith.constant dense<0.000000e+00> : vector<64x64xf32>
    %5 = tpu.matmul %2, %4, %cst {dimension_numbers = #tpu.dot_dimension_numbers<[1], [0], [0], [1], [0, 0, 1, 1], [], []>} : vector<64x64xbf16>, vector<64x64xbf16>, vector<64x64xf32> -> vector<64x64xf32>
    %c0_6 = arith.constant 0 : index
    %c0_7 = arith.constant 0 : index
    %6 = vector.load %arg4[%c0_6, %c0_7] : memref<1x64xf32, #tpu.memory_space<vmem>>, vector<1x64xf32>
    %7 = vector.broadcast %6 : vector<1x64xf32> to vector<64x64xf32>
    %8 = arith.addf %5, %7 : vector<64x64xf32>
    %cst_8 = arith.constant 0.000000e+00 : f32
    %9 = vector.broadcast %cst_8 : f32 to vector<64x64xf32>
    %10 = arith.cmpf ogt, %8, %9 : vector<64x64xf32>
    %cst_9 = arith.constant 2.000000e-01 : f32
    %11 = vector.broadcast %cst_9 : f32 to vector<64x64xf32>
    %12 = arith.mulf %11, %8 : vector<64x64xf32>
    %13 = arith.select %10, %8, %12 : vector<64x64xi1>, vector<64x64xf32>
    %14 = vector.shape_cast %13 : vector<64x64xf32> to vector<1x8x8x64xf32>
    %c0_10 = arith.constant 0 : index
    %c0_11 = arith.constant 0 : index
    %c0_12 = arith.constant 0 : index
    %c0_13 = arith.constant 0 : index
    %15 = vector.load %arg5[%c0_10, %c0_11, %c0_12, %c0_13] : memref<1x8x8x64xf32, #tpu.memory_space<vmem>>, vector<1x8x8x64xf32>
    tpu.vector_store %arg5[%c0_10, %c0_11, %c0_12, %c0_13], %14 {strides = array<i32>} : memref<1x8x8x64xf32, #tpu.memory_space<vmem>>, vector<1x8x8x64xf32>,
    return
  }
  func.func @transform_0(%arg0: i32, %arg1: i32) -> (i32, i32, i32, i32) {
    %c1_i32 = arith.constant 1 : i32
    %0 = arith.muli %arg0, %c1_i32 : i32
    %1 = arith.addi %0, %arg1 : i32
    %c0_i32 = arith.constant 0 : i32
    %c0_i32_0 = arith.constant 0 : i32
    %c0_i32_1 = arith.constant 0 : i32
    %c0_i32_2 = arith.constant 0 : i32
    return %1, %c0_i32, %c0_i32_0, %c0_i32_1 : i32, i32, i32, i32
  }
  func.func @transform_1(%arg0: i32, %arg1: i32) -> (i32, i32, i32) {
    %c0_i32 = arith.constant 0 : i32
    %c0_i32_0 = arith.constant 0 : i32
    %c0_i32_1 = arith.constant 0 : i32
    return %arg0, %c0_i32, %c0_i32_0 : i32, i32, i32
  }
  func.func @transform_2(%arg0: i32, %arg1: i32) -> (i32, i32) {
    %c0_i32 = arith.constant 0 : i32
    %c0_i32_0 = arith.constant 0 : i32
    %c0_i32_1 = arith.constant 0 : i32
    return %c0_i32, %c0_i32_0 : i32, i32
  }
  func.func @transform_3(%arg0: i32, %arg1: i32) -> (i32, i32, i32, i32) {
    %c1_i32 = arith.constant 1 : i32
    %0 = arith.muli %arg0, %c1_i32 : i32
    %1 = arith.addi %0, %arg1 : i32
    %c0_i32 = arith.constant 0 : i32
    %c0_i32_0 = arith.constant 0 : i32
    %c0_i32_1 = arith.constant 0 : i32
    %c0_i32_2 = arith.constant 0 : i32
    return %1, %c0_i32, %c0_i32_0, %c0_i32_1 : i32, i32, i32, i32
  }
}

</mosaic_0001>

<llo_original>
// kernel: sk_unit_forward.5
$region0: #{sk_unit_forward.5}
  #allocation0 [shape = 'u32[]', space=smem, size = 0x4, offset = 0x4, fixed_abs, tag = 'smem constant byte address 0x4 - core index']
  #allocation1 [shape = 'u32[72,128]{1,0:T(1,128)}', space=vmem, size = 0x9000, scoped, tag = 'internal scratch']
  %s0 = inlined_call_operand.vmem [shape: bf16[2,8,8,64], index: 0, kind: input, shape index: {}]
  %s1 = inlined_call_operand.vmem [shape: bf16[2,64,64], index: 1, kind: input, shape index: {}]
  %s2 = inlined_call_operand.vmem [shape: f32[1,64], index: 2, kind: input, shape index: {}]
  %s3 = inlined_call_operand.hbm [shape: f32[2,8,8,64], index: 3, kind: output, shape index: {}]
  %s4 = sld [smem:[#allocation0]]
  $region45: #{sk_unit_forward.5} parent=0
    _
  %s6 = ssub.s32 1, %s4
  %s7 = scalar_select 0, %s6, %s4
  $region1: #{sk_unit_forward.5} parent=0
    #allocation2 [shape = 'u8[65536]{0}', space=vmem, size = 0x10000, scoped, tag = 'output window, operand 0']
    #allocation3 [shape = 's32[2]{0}', space=sflag, size = 0x8, scoped, tag = 'scoped memory for sk_unit_forward.5']
    %8 = vsyncpa [#allocation3], 0
    %s9 = scalar_lea.sflag [#allocation3], 1
    %10 = vsyncpa %s9, 0
    loop: start=0, step=1, limit=4
    $region2: #{sk_unit_forward.5} parent=1 // loop_pre_header
      _
    $region3: #{sk_unit_forward.5} parent=1 // loop_header
      %s12 = sphi 0, %s16
      %p13 = scmp.ge.s32.totalorder %s12, 4
      %s19 = sphi 0, %s31
      %s20 = sphi 0, %s27
      %s21 = sphi 0, %s19
      %s22 = sphi 0, %s20
      %s23 = sphi 0, %s21
      %s24 = sphi 0, %s22
      %s36 = sphi 0, %s38
      %s39 = sphi 0, %s36
      %s40 = sphi 0, %s39
      %s56 = sphi 0, %s40
      %s62 = sphi 0, %s64
      %s65 = sphi 0, %s62
      %s66 = sphi 0, %s65
      %s82 = sphi 0, %s66
      %s86 = sphi 0, %s86
      %s88 = sphi 0, %s86
      %s89 = sphi 0, %s88
      %s103 = sphi 0, %s89
      %s111 = sphi 0, %s113
      %s114 = sphi 0, %s111
      %s115 = sphi 0, %s114
      %s131 = sphi 0, %s115
    $region4: #{sk_unit_forward.5} parent=1 // loop_header_branch
      %15 = sbr.rel (%p13) target = $region8
    $region5: #{sk_unit_forward.5} parent=1 // loop_body
      %s17 = ssub.s32 %s12, 1
      %s18 = ssub.s32 %s12, 2
      %s25 = sadd.s32 1, %s20
      %p26 = scmp.ge.s32.totalorder %s25, 1
      %s27 = scalar_select %p26, 0, %s25
      %s28 = sadd.s32 1, %s19
      %s29 = scalar_select %p26, %s28, %s19
      %p30 = scmp.ge.s32.totalorder %s29, 2
      %s31 = scalar_select %p30, 0, %s29
      %s32 = sadd.s32 %s19, %s20
      %s33 = sadd.s32 %s31, %s27
      %s34 = ssub.s32 %s32, %s33
      %p35 = scmp.eq.s32.totalorder %s34, 0
      %s37 = sadd.s32 %s36, 1
      %s38 = scalar_select %p35, %s36, %s37
      %p41 = pneg %p35
      %p42 = scmp.eq.s32.totalorder %s12, 1
      %p43 = por %p41, %p42
      %p44 = scmp.ne.s32.totalorder %s36, %s39
      %p45 = scmp.eq.s32.totalorder %s12, 0
      %p46 = por %p44, %p45
      %p47 = scmp.ne.s32.totalorder %s36, %s39
      %p48 = scmp.eq.s32.totalorder %s17, 1
      %p49 = por %p47, %p48
      %p50 = scmp.ne.s32.totalorder %s39, %s40
      %p51 = scmp.eq.s32.totalorder %s17, 0
      %p52 = por %p50, %p51
      %p53 = scmp.ne.s32.totalorder %s39, %s40
      %p54 = scmp.eq.s32.totalorder %s18, 1
      %p55 = por %p53, %p54
      %p57 = scmp.ne.s32.totalorder %s40, %s56
      %p58 = scmp.eq.s32.totalorder %s18, 0
      %p59 = por %p57, %p58
      %s60 = ssub.s32 %s19, %s31
      %p61 = scmp.eq.s32.totalorder %s60, 0
      %s63 = sadd.s32 %s62, 1
      %s64 = scalar_select %p61, %s62, %s63
      %p67 = pneg %p61
      %p68 = scmp.eq.s32.totalorder %s12, 1
      %p69 = por %p67, %p68
      %p70 = scmp.ne.s32.totalorder %s62, %s65
      %p71 = scmp.eq.s32.totalorder %s12, 0
      %p72 = por %p70, %p71
      %p73 = scmp.ne.s32.totalorder %s62, %s65
      %p74 = scmp.eq.s32.totalorder %s17, 1
      %p75 = por %p73, %p74
      %p76 = scmp.ne.s32.totalorder %s65, %s66
      %p77 = scmp.eq.s32.totalorder %s17, 0
      %p78 = por %p76, %p77
      %p79 = scmp.ne.s32.totalorder %s65, %s66
      %p80 = scmp.eq.s32.totalorder %s18, 1
      %p81 = por %p79, %p80
      %p83 = scmp.ne.s32.totalorder %s66, %s82
      %p84 = scmp.eq.s32.totalorder %s18, 0
      %p85 = por %p83, %p84
      %s87 = sadd.s32 %s86, 1
      %p90 = scmp.eq.s32.totalorder %s12, 1
      %p91 = scmp.ne.s32.totalorder %s86, %s88
      %p92 = scmp.eq.s32.totalorder %s12, 0
      %p93 = por %p91, %p92
      %p94 = scmp.ne.s32.totalorder %s86, %s88
      %p95 = scmp.eq.s32.totalorder %s17, 1
      %p96 = por %p94, %p95
      %p97 = scmp.ne.s32.totalorder %s88, %s89
      %p98 = scmp.eq.s32.totalorder %s17, 0
      %p99 = por %p97, %p98
      %p100 = scmp.ne.s32.totalorder %s88, %s89
      %p101 = scmp.eq.s32.totalorder %s18, 1
      %p102 = por %p100, %p101
      %p104 = scmp.ne.s32.totalorder %s89, %s103
      %p105 = scmp.eq.s32.totalorder %s18, 0
      %p106 = por %p104, %p105
      %s107 = sadd.s32 %s19, %s20
      %s108 = sadd.s32 %s31, %s27
      %s109 = ssub.s32 %s107, %s108
      %p110 = scmp.eq.s32.totalorder %s109, 0
      %s112 = sadd.s32 %s111, 1
      %s113 = scalar_select %p110, %s111, %s112
      %p116 = pneg %p110
      %p117 = scmp.eq.s32.totalorder %s12, 1
      %p118 = por %p116, %p117
      %p119 = scmp.ne.s32.totalorder %s111, %s114
      %p120 = scmp.eq.s32.totalorder %s12, 0
      %p121 = por %p119, %p120
      %p122 = scmp.ne.s32.totalorder %s111, %s114
      %p123 = scmp.eq.s32.totalorder %s17, 1
      %p124 = por %p122, %p123
      %p125 = scmp.ne.s32.totalorder %s114, %s115
      %p126 = scmp.eq.s32.totalorder %s17, 0
      %p127 = por %p125, %p126
      %p128 = scmp.ne.s32.totalorder %s114, %s115
      %p129 = scmp.eq.s32.totalorder %s18, 1
      %p130 = por %p128, %p129
      %p132 = scmp.ne.s32.totalorder %s115, %s131
      %p133 = scmp.eq.s32.totalorder %s18, 0
      %p134 = por %p132, %p133
      %p135 = scmp.le.s32.totalorder 1, %s12
      %p136 = scmp.lt.s32.totalorder %s12, 3
      %p137 = pnand %p135, %p136
      %p138 = pneg %p137
      // Predicated region
      $region9: #{sk_unit_forward.5} parent=5 // pred_check
        _
      $region10: #{sk_unit_forward.5} parent=5 // pred_check_branch
        %140 = sbr.rel (%p137) target = $region12
      $region11: #{sk_unit_forward.5} parent=5 // pred_region
        %s141 = ssub.s32 %s12, 1
        // Predicated region
        $region13: #{sk_unit_forward.5} parent=11 // pred_check
          %p142 = pneg %p99
        $region14: #{sk_unit_forward.5} parent=11 // pred_check_branch
          %144 = sbr.rel (%p142) target = $region16
        $region15: #{sk_unit_forward.5} parent=11 // pred_region
          _
        $region16: #{sk_unit_forward.5} parent=11 // pred_fallthru
          _
      $region12: #{sk_unit_forward.5} parent=5 // pred_fallthru
        _
      %p145 = scmp.lt.s32.totalorder %s12, 2
      // Predicated region
      $region17: #{sk_unit_forward.5} parent=5 // pred_check
        %p146 = pneg %p145
      $region18: #{sk_unit_forward.5} parent=5 // pred_check_branch
        %148 = sbr.rel (%p146) target = $region20
      $region19: #{sk_unit_forward.5} parent=5 // pred_region
        // Predicated region
        $region21: #{sk_unit_forward.5} parent=19 // pred_check
          %p149 = pneg %p46
        $region22: #{sk_unit_forward.5} parent=19 // pred_check_branch
          %151 = sbr.rel (%p149) target = $region24
        $region23: #{sk_unit_forward.5} parent=19 // pred_region
          %s152 = sadd.s32 %s19, %s20
          %p153 = scmp.lt.s32.totalorder %s152, 1
          %s154 = scalar_select %p153, %s152, 1
          %s155 = smul.addr %s154, 8
          %s156 = smul.addr %s155, 4
          %s157 = scalar_lea.vmem %s0, %s156
          %s158 = sadd.s32 %s19, %s20
        $region24: #{sk_unit_forward.5} parent=19 // pred_fallthru
          _
        // Predicated region
        $region25: #{sk_unit_forward.5} parent=19 // pred_check
          %p159 = pneg %p72
        $region26: #{sk_unit_forward.5} parent=19 // pred_check_branch
          %161 = sbr.rel (%p159) target = $region28
        $region27: #{sk_unit_forward.5} parent=19 // pred_region
          %p162 = scmp.lt.s32.totalorder %s19, 1
          %s163 = scalar_select %p162, %s19, 1
          %s164 = smul.addr %s163, 8
          %s165 = smul.addr %s164, 4
          %s166 = scalar_lea.vmem %s1, %s165
        $region28: #{sk_unit_forward.5} parent=19 // pred_fallthru
          _
      $region20: #{sk_unit_forward.5} parent=5 // pred_fallthru
        _
      %p167 = scmp.le.s32.totalorder 1, %s12
      %p168 = scmp.lt.s32.totalorder %s12, 3
      %p169 = pnand %p167, %p168
      %p170 = pneg %p169
      // Predicated region
      $region29: #{sk_unit_forward.5} parent=5 // pred_check
        _
      $region30: #{sk_unit_forward.5} parent=5 // pred_check_branch
        %172 = sbr.rel (%p169) target = $region32
      $region31: #{sk_unit_forward.5} parent=5 // pred_region
        %s173 = ssub.s32 %s12, 1
        %s174 = sadd.s32 %s21, %s22
        %p175 = scmp.lt.s32.totalorder %s174, 1
        %s176 = scalar_select %p175, %s174, 1
        %s177 = smul.addr %s176, 8
        %s178 = smul.addr %s177, 4
        %s179 = scalar_lea.vmem %s0, %s178
        %p180 = pneg %p52
        %p181 = pneg %p49
        %p182 = scmp.lt.s32.totalorder %s21, 1
        %s183 = scalar_select %p182, %s21, 1
        %s184 = smul.addr %s183, 8
        %s185 = smul.addr %s184, 4
        %s186 = scalar_lea.vmem %s1, %s185
        %p187 = pneg %p78
        %p188 = pneg %p75
        %p189 = pneg %p99
        %p190 = pneg %p96
        %p191 = pneg %p127
        %p192 = pneg %p124
        %s193 = sand.u32 %s114, 1
        %s194 = scalar_lea.sflag [#allocation3], %s193
        %s195 = sand.u32 %s114, 1
        %s196 = smul.addr %s195, 64
        %s197 = scalar_lea.vmem [#allocation2], %s196
        %s198 = sadd.s32 %s21, %s22
        %p199 = scmp.lt.s32.totalorder %s198, 1
        %s200 = scalar_select %p199, %s198, 1
        %s201 = smul.addr %s200, 8
        %s202 = smul.addr %s201, 4
        %s203 = scalar_lea.vmem %s0, %s202
        %s204 = sadd.s32 %s21, %s22
        %p205 = scmp.lt.s32.totalorder %s21, 1
        %s206 = scalar_select %p205, %s21, 1
        %s207 = smul.addr %s206, 8
        %s208 = smul.addr %s207, 4
        %s209 = scalar_lea.vmem %s1, %s208
        %s210 = sadd.s32 %s21, %s22
        %v212 = vld [vmem:[%s203] sm:$0xf]
        %v213 = vld [vmem:[%s203 + $0x4] sm:$0xf]
        %v214 = vld [vmem:[%s203 + $0x8] sm:$0xf]
        %v215 = vld [vmem:[%s203 + $0xc] sm:$0xf]
        %v216 = vld [vmem:[%s203 + $0x10] sm:$0xf]
        %v217 = vld [vmem:[%s203 + $0x14] sm:$0xf]
        %v218 = vld [vmem:[%s203 + $0x18] sm:$0xf]
        %v219 = vld [vmem:[%s203 + $0x1c] sm:$0xf]
        %v220 = vld [vmem:[%s209] sm:$0xf]
        %v221 = vld [vmem:[%s209 + $0x4] sm:$0xf]
        %v222 = vld [vmem:[%s209 + $0x8] sm:$0xf]
        %v223 = vld [vmem:[%s209 + $0xc] sm:$0xf]
        %v224 = vld [vmem:[%s209 + $0x10] sm:$0xf]
        %v225 = vld [vmem:[%s209 + $0x14] sm:$0xf]
        %v226 = vld [vmem:[%s209 + $0x18] sm:$0xf]
        %v227 = vld [vmem:[%s209 + $0x1c] sm:$0xf]
        %v228 = vld [vmem:[%s2] sm:$0x1]
        %v230 = vperm.slane %v228, 0
        %v240 = vunpack.c.l.b16 %v212
        %v241 = vunpack.c.l.b16 %v213
        %v242 = vunpack.c.l.b16 %v214
        %v243 = vunpack.c.l.b16 %v215
        %v244 = vunpack.c.l.b16 %v216
        %v245 = vunpack.c.l.b16 %v217
        %v246 = vunpack.c.l.b16 %v218
        %v247 = vunpack.c.l.b16 %v219
        %v248 = vpack.c.b16 %v241, %v240
        %v249 = vpack.c.b16 %v243, %v242
        %v250 = vpack.c.b16 %v245, %v244
        %v251 = vpack.c.b16 %v247, %v246
        %v260 = vunpack.c.l.b16 %v220
        %v261 = vunpack.c.l.b16 %v221
        %v262 = vunpack.c.l.b16 %v222
        %v263 = vunpack.c.l.b16 %v223
        %v264 = vunpack.c.l.b16 %v224
        %v265 = vunpack.c.l.b16 %v225
        %v266 = vunpack.c.l.b16 %v226
        %v267 = vunpack.c.l.b16 %v227
        %v268 = vpack.c.b16 %v261, %v260
        %v269 = vpack.c.b16 %v263, %v262
        %v270 = vpack.c.b16 %v265, %v264
        %v271 = vpack.c.b16 %v267, %v266
        %vm276 = vcmask 523264
        %v278 = vsel %vm276, %v248, 0
        %v281 = vsel %vm276, %v249, 0
        %v284 = vsel %vm276, %v250, 0
        %v287 = vsel %vm276, %v251, 0
        %289 = vmatpush.bf16.msra.mxu0 0
        %290 = vmatpush.bf16.msra.mxu0 0
        %291 = vmatpush.bf16.msra.mxu0 0
        %292 = vmatpush.bf16.msra.mxu0 0
        %293 = vmatpush.bf16.msra.mxu0 %v271
        %294 = vmatpush.bf16.msra.mxu0 %v270
        %295 = vmatpush.bf16.msra.mxu0 %v269
        %296 = vmatpush.bf16.msra.mxu0 %v268
        %297 = vmatmul.bf16.gmra.mxu0 %v278
        %v298 = vpop.f32.mrf.mxu0
        %v299 = vadd.f32 %v230, %v298
        %v300 = vpop.f32.mrf.mxu0
        %v301 = vadd.f32 %v230, %v300
        %302 = vmatmul.bf16.gmra.mxu0 %v281
        %v303 = vpop.f32.mrf.mxu0
        %v304 = vadd.f32 %v230, %v303
        %v305 = vpop.f32.mrf.mxu0
        %v306 = vadd.f32 %v230, %v305
        %307 = vmatmul.bf16.gmra.mxu0 %v284
        %v308 = vpop.f32.mrf.mxu0
        %v309 = vadd.f32 %v230, %v308
        %v310 = vpop.f32.mrf.mxu0
        %v311 = vadd.f32 %v230, %v310
        %312 = vmatmul.bf16.gmra.mxu0 %v287
        %v313 = vpop.f32.mrf.mxu0
        %v314 = vadd.f32 %v230, %v313
        %v315 = vpop.f32.mrf.mxu0
        %v316 = vadd.f32 %v230, %v315
        %317 = vdwg.mxu0
        %vm318 = vcmp.gt.f32.partialorder %v299, 0.0
        %vm319 = vcmp.gt.f32.partialorder %v301, 0.0
        %vm320 = vcmp.gt.f32.partialorder %v304, 0.0
        %vm321 = vcmp.gt.f32.partialorder %v306, 0.0
        %vm322 = vcmp.gt.f32.partialorder %v309, 0.0
        %vm323 = vcmp.gt.f32.partialorder %v311, 0.0
        %vm324 = vcmp.gt.f32.partialorder %v314, 0.0
        %vm325 = vcmp.gt.f32.partialorder %v316, 0.0
        %v326 = vmul.f32 %v299, 0.2
        %v327 = vmul.f32 %v301, 0.2
        %v328 = vmul.f32 %v304, 0.2
        %v329 = vmul.f32 %v306, 0.2
        %v330 = vmul.f32 %v309, 0.2
        %v331 = vmul.f32 %v311, 0.2
        %v332 = vmul.f32 %v314, 0.2
        %v333 = vmul.f32 %v316, 0.2
        %v334 = vsel %vm318, %v299, %v326
        %v335 = vsel %vm319, %v301, %v327
        %v336 = vsel %vm320, %v304, %v328
        %v337 = vsel %vm321, %v306, %v329
        %v338 = vsel %vm322, %v309, %v330
        %v339 = vsel %vm323, %v311, %v331
        %v340 = vsel %vm324, %v314, %v332
        %v341 = vsel %vm325, %v316, %v333
        %342 = vst.msk [vmem:[%s197] sm:$0xff] %vm276, %v334
        %343 = vst.msk [vmem:[%s197 + $0x8] sm:$0xff] %vm276, %v335
        %344 = vst.msk [vmem:[%s197 + $0x10] sm:$0xff] %vm276, %v336
        %345 = vst.msk [vmem:[%s197 + $0x18] sm:$0xff] %vm276, %v337
        %346 = vst.msk [vmem:[%s197 + $0x20] sm:$0xff] %vm276, %v338
        %347 = vst.msk [vmem:[%s197 + $0x28] sm:$0xff] %vm276, %v339
        %348 = vst.msk [vmem:[%s197 + $0x30] sm:$0xff] %vm276, %v340
        %349 = vst.msk [vmem:[%s197 + $0x38] sm:$0xff] %vm276, %v341
        %s350 = sand.u32 %s114, 1
        %s351 = scalar_lea.sflag [#allocation3], %s350
        %s352 = sand.u32 %s114, 1
        %s353 = smul.addr %s352, 64
        %s354 = scalar_lea.vmem [#allocation2], %s353
        // Predicated region
        $region33: #{sk_unit_forward.5} parent=31 // pred_check
          %p355 = pneg %p124
        $region34: #{sk_unit_forward.5} parent=31 // pred_check_branch
          %357 = sbr.rel (%p355) target = $region36
        $region35: #{sk_unit_forward.5} parent=31 // pred_region
          %s358 = sadd.s32 %s21, %s22
          %360 = vsyncadd %s351, 0
          %s361 = smul.addr %s358, 8
          %s362 = smul.addr %s361, 8
          %s363 = scalar_lea.hbm %s3, %s362
          %s364 = sshll.u32 %s354, 4
          %s365 = int_to_ptr.vmem [resolvable:$true] %s364
          %s366 = sshll.u32 %s363, 4
          %s367 = int_to_ptr.hbm [resolvable:$true] %s366
          %372 = dma.vmem_to_hbm [thread:$0]  %s365, 1024, %s367, %s351, 128, 128, 8
        $region36: #{sk_unit_forward.5} parent=31 // pred_fallthru
          _
      $region32: #{sk_unit_forward.5} parent=5 // pred_fallthru
        _
      %p373 = scmp.le.s32.totalorder 2, %s12
      // Predicated region
      $region37: #{sk_unit_forward.5} parent=5 // pred_check
        %p374 = pneg %p373
      $region38: #{sk_unit_forward.5} parent=5 // pred_check_branch
        %376 = sbr.rel (%p374) target = $region40
      $region39: #{sk_unit_forward.5} parent=5 // pred_region
        %s377 = ssub.s32 %s12, 2
        // Predicated region
        $region41: #{sk_unit_forward.5} parent=39 // pred_check
          %p378 = pneg %p130
        $region42: #{sk_unit_forward.5} parent=39 // pred_check_branch
          %380 = sbr.rel (%p378) target = $region44
        $region43: #{sk_unit_forward.5} parent=39 // pred_region
          %s381 = sand.u32 %s115, 1
          %s382 = scalar_lea.sflag [#allocation3], %s381
          %s383 = sand.u32 %s115, 1
          %s384 = smul.addr %s383, 64
          %s385 = scalar_lea.vmem [#allocation2], %s384
          %387 = dma.done %s382, 1024
        $region44: #{sk_unit_forward.5} parent=39 // pred_fallthru
          _
      $region40: #{sk_unit_forward.5} parent=5 // pred_fallthru
        _
    $region6: #{sk_unit_forward.5} parent=1 // loop_footer
      %s16 = sadd.s32 1, %s12
    $region7: #{sk_unit_forward.5} parent=1 // loop_footer_branch
      %11 = sbr.rel target = $region3
    $region8: #{sk_unit_forward.5} parent=1 // loop_exit
      _
    %388 = vsyncpa [#allocation3], 1
    %s389 = scalar_lea.sflag [#allocation3], 1
    %390 = vsyncpa %s389, 1

// kernel: sk_unit_forward.4
$region0: #{sk_unit_forward.4}
  #allocation0 [shape = 'u32[]', space=smem, size = 0x4, offset = 0x4, fixed_abs, tag = 'smem constant byte address 0x4 - core index']
  #allocation1 [shape = 'u32[72,128]{1,0:T(1,128)}', space=vmem, size = 0x9000, scoped, tag = 'internal scratch']
  %s0 = inlined_call_operand.vmem [shape: f32[2,1,1,64], index: 0, kind: input, shape index: {}]
  %s1 = inlined_call_operand.vmem [shape: bf16[32,16], index: 1, kind: input, shape index: {}]
  %s2 = inlined_call_operand.vmem [shape: f32[1,16], index: 2, kind: input, shape index: {}]
  %s3 = inlined_call_operand.vmem [shape: bf16[2,16,32], index: 3, kind: input, shape index: {}]
  %s4 = inlined_call_operand.vmem [shape: f32[2,1,32], index: 4, kind: input, shape index: {}]
  %s5 = inlined_call_operand.vmem [shape: f32[32,64], index: 5, kind: input, shape index: {}]
  %s6 = inlined_call_operand.vmem [shape: bf16[2,64,64], index: 6, kind: output, shape index: {}]
  %s7 = sld [smem:[#allocation0]]
  $region34: #{sk_unit_forward.4} parent=0
    _
  %s9 = ssub.s32 1, %s7
  %s10 = scalar_select 0, %s9, %s7
  // Predicated region
  $region2: #{sk_unit_forward.4} parent=0 // pred_check
    _
  $region3: #{sk_unit_forward.4} parent=0 // pred_check_branch
    %12 = sbr.rel (0) target = $region5
  $region4: #{sk_unit_forward.4} parent=0 // pred_region
    _
  $region5: #{sk_unit_forward.4} parent=0 // pred_fallthru
    _
  // Predicated region
  $region6: #{sk_unit_forward.4} parent=0 // pred_check
    _
  $region7: #{sk_unit_forward.4} parent=0 // pred_check_branch
    %14 = sbr.rel (0) target = $region9
  $region8: #{sk_unit_forward.4} parent=0 // pred_region
    _
  $region9: #{sk_unit_forward.4} parent=0 // pred_fallthru
    _
  // Predicated region
  $region10: #{sk_unit_forward.4} parent=0 // pred_check
    _
  $region11: #{sk_unit_forward.4} parent=0 // pred_check_branch
    %16 = sbr.rel (0) target = $region13
  $region12: #{sk_unit_forward.4} parent=0 // pred_region
    _
  $region13: #{sk_unit_forward.4} parent=0 // pred_fallthru
    _
  // Predicated region
  $region14: #{sk_unit_forward.4} parent=0 // pred_check
    _
  $region15: #{sk_unit_forward.4} parent=0 // pred_check_branch
    %18 = sbr.rel (0) target = $region17
  $region16: #{sk_unit_forward.4} parent=0 // pred_region
    _
  $region17: #{sk_unit_forward.4} parent=0 // pred_fallthru
    _
  // Predicated region
  $region18: #{sk_unit_forward.4} parent=0 // pred_check
    _
  $region19: #{sk_unit_forward.4} parent=0 // pred_check_branch
    %20 = sbr.rel (0) target = $region21
  $region20: #{sk_unit_forward.4} parent=0 // pred_region
    _
  $region21: #{sk_unit_forward.4} parent=0 // pred_fallthru
    _
  // Predicated region
  $region22: #{sk_unit_forward.4} parent=0 // pred_check
    _
  $region23: #{sk_unit_forward.4} parent=0 // pred_check_branch
    %22 = sbr.rel (0) target = $region25
  $region24: #{sk_unit_forward.4} parent=0 // pred_region
    _
  $region25: #{sk_unit_forward.4} parent=0 // pred_fallthru
    _
  %v24 = vld [vmem:[%s0] sm:$0x1]
  %v25 = vld [vmem:[%s0 + $0x1] sm:$0x1]
  %v26 = vadd.f32 %v24, 0.0
  %v27 = vadd.f32 %v25, 0.0
  %30 = vrot.lane.b32.xlu0 %v26, 96
  %v31 = vpop.permute.xlu0 %30
  %32 = vrot.lane.b32.xlu0 %v27, 96
  %v33 = vpop.permute.xlu0 %32
  %v36 = vadd.f32 %v26, %v31
  %v37 = vadd.f32 %v27, %v33
  %v38 = vmul.f32 %v36, 0.015625
  %v39 = vmul.f32 %v37, 0.015625
  %v40 = vpack.c.bf16 %v38, %v38
  %v41 = vpack.c.bf16 %v39, %v39
  %v42 = vld [vmem:[%s1] sm:$0xf]
  %v43 = vld [vmem:[%s1 + $0x4] sm:$0xf]
  %v44 = vld [vmem:[%s1 + $0x8] sm:$0xf]
  %v45 = vld [vmem:[%s1 + $0xc] sm:$0xf]
  %v46 = vld [vmem:[%s2] sm:$0x1]
  %v48 = vperm.slane %v46, 0
  %v52 = vunpack.c.l.b16 %v40
  %v53 = vunpack.c.l.b16 %v41
  %v54 = vrot.slane %v53, 7
  %vm55 = vcmask 1041409
  %v56 = vsel %vm55, %v54, %v52
  %v57 = vpack.c.b16 %v56, %v56
  %v62 = vunpack.c.l.b16 %v42
  %v63 = vunpack.c.l.b16 %v43
  %v64 = vunpack.c.l.b16 %v44
  %v65 = vunpack.c.l.b16 %v45
  %v66 = vpack.c.b16 %v63, %v62
  %v67 = vpack.c.b16 %v65, %v64
  %vm70 = vcmask 261120
  %v72 = vsel %vm70, %v57, 0
  %74 = vmatpush.bf16.msra.mxu0 0
  %75 = vmatpush.bf16.msra.mxu0 0
  %76 = vmatpush.bf16.msra.mxu0 0
  %77 = vmatpush.bf16.msra.mxu0 0
  %78 = vmatpush.bf16.msra.mxu0 0
  %79 = vmatpush.bf16.msra.mxu0 0
  %80 = vmatpush.bf16.msra.mxu0 %v67
  %81 = vmatpush.bf16.msra.mxu0 %v66
  %82 = vmatmul.bf16.gmra.mxu0 %v72
  %v83 = vpop.f32.mrf.mxu0
  %v84 = vadd.f32 %v48, %v83
  %v85 = vpop.f32.mrf.mxu0
  %86 = vdwg.mxu0
  %v87 = vpack.c.bf16 %v84, %v84
  %v88 = vld [vmem:[%s3] sm:$0xf]
  %v89 = vld [vmem:[%s3 + $0x4] sm:$0xf]
  %v90 = vld [vmem:[%s4] sm:$0x1]
  %v92 = vperm.slane %v90, 0
  %v96 = vunpack.c.l.b16 %v88
  %v97 = vunpack.c.l.b16 %v89
  %v98 = vpack.c.b16 %v97, %v96
  %vm100 = vcmask 130048
  %v102 = vsel %vm100, %v87, 0
  %104 = vmatpush.bf16.msra.mxu0 0
  %105 = vmatpush.bf16.msra.mxu0 0
  %106 = vmatpush.bf16.msra.mxu0 0
  %107 = vmatpush.bf16.msra.mxu0 0
  %108 = vmatpush.bf16.msra.mxu0 0
  %109 = vmatpush.bf16.msra.mxu0 0
  %110 = vmatpush.bf16.msra.mxu0 0
  %111 = vmatpush.bf16.msra.mxu0 %v98
  %112 = vmatmul.bf16.gmra.mxu0 %v102
  %v113 = vpop.f32.mrf.mxu0
  %v114 = vadd.f32 %v92, %v113
  %v115 = vpop.f32.mrf.mxu0
  %116 = vdwg.mxu0
  %s117 = scalar_lea.vmem %s3, 8
  %v118 = vld [vmem:[%s117] sm:$0xf]
  %v119 = vld [vmem:[%s117 + $0x4] sm:$0xf]
  %s120 = scalar_lea.vmem %s4, 1
  %v121 = vld [vmem:[%s120] sm:$0x1]
  %v123 = vperm.slane %v121, 0
  %v127 = vunpack.c.l.b16 %v118
  %v128 = vunpack.c.l.b16 %v119
  %v129 = vpack.c.b16 %v128, %v127
  %131 = vmatpush.bf16.msra.mxu0 0
  %132 = vmatpush.bf16.msra.mxu0 0
  %133 = vmatpush.bf16.msra.mxu0 0
  %134 = vmatpush.bf16.msra.mxu0 0
  %135 = vmatpush.bf16.msra.mxu0 0
  %136 = vmatpush.bf16.msra.mxu0 0
  %137 = vmatpush.bf16.msra.mxu0 0
  %138 = vmatpush.bf16.msra.mxu0 %v129
  %139 = vmatmul.bf16.gmra.mxu0 %v102
  %v140 = vpop.f32.mrf.mxu0
  %v141 = vadd.f32 %v123, %v140
  %v142 = vpop.f32.mrf.mxu0
  %143 = vdwg.mxu0
  %v144 = vmax.f32 %v114, %v141
  %v145 = vsub.f32 %v114, %v144
  %v146 = vmul.f32 %v145, 1.442695
  %v147 = vpow.pop %v146
  %v148 = vsub.f32 %v141, %v144
  %v149 = vmul.f32 %v148, 1.442695
  %v150 = vpow.pop %v149
  %v151 = vadd.f32 %v147, %v150
  %v152 = vrcp.pop %v151
  %v153 = vld [vmem:[%s5] sm:$0xff]
  %v154 = vld [vmem:[%s5 + $0x8] sm:$0xff]
  %v155 = vld [vmem:[%s5 + $0x10] sm:$0xff]
  %v156 = vld [vmem:[%s5 + $0x18] sm:$0xff]
  %v157 = vmul.f32 %v147, %v152
  %v158 = vperm.slane %v157, 0
  %v159 = vlaneseq
  %v160 = vshrl.u32 %v159, 7
  %162 = vset.pattern.permute.xlu0 %v160
  %163 = vperm.xlu0 %162, %v158
  %v164 = vpop.permute.xlu0 %163
  %v165 = vlaneseq
  %v166 = vshrl.u32 %v165, 7
  %v167 = vadd.s32 %v166, 8
  %168 = vset.pattern.permute.xlu0 %v167
  %169 = vperm.xlu0 %168, %v158
  %v170 = vpop.permute.xlu0 %169
  %v171 = vlaneseq
  %v172 = vshrl.u32 %v171, 7
  %v173 = vadd.s32 %v172, 16
  %174 = vset.pattern.permute.xlu0 %v173
  %175 = vperm.xlu0 %174, %v158
  %v176 = vpop.permute.xlu0 %175
  %v177 = vlaneseq
  %v178 = vshrl.u32 %v177, 7
  %v179 = vadd.s32 %v178, 24
  %180 = vset.pattern.permute.xlu0 %v179
  %181 = vperm.xlu0 %180, %v158
  %v182 = vpop.permute.xlu0 %181
  %v183 = vperm.slane %v157, 1
  %v184 = vlaneseq
  %v185 = vshrl.u32 %v184, 7
  %187 = vset.pattern.permute.xlu0 %v185
  %188 = vperm.xlu0 %187, %v183
  %v189 = vpop.permute.xlu0 %188
  %v190 = vlaneseq
  %v191 = vshrl.u32 %v190, 7
  %v192 = vadd.s32 %v191, 8
  %193 = vset.pattern.permute.xlu0 %v192
  %194 = vperm.xlu0 %193, %v183
  %v195 = vpop.permute.xlu0 %194
  %v196 = vlaneseq
  %v197 = vshrl.u32 %v196, 7
  %v198 = vadd.s32 %v197, 16
  %199 = vset.pattern.permute.xlu0 %v198
  %200 = vperm.xlu0 %199, %v183
  %v201 = vpop.permute.xlu0 %200
  %v202 = vlaneseq
  %v203 = vshrl.u32 %v202, 7
  %v204 = vadd.s32 %v203, 24
  %205 = vset.pattern.permute.xlu0 %v204
  %206 = vperm.xlu0 %205, %v183
  %v207 = vpop.permute.xlu0 %206
  %v208 = vmul.f32 %v164, %v153
  %v209 = vmul.f32 %v170, %v154
  %v210 = vmul.f32 %v176, %v155
  %v211 = vmul.f32 %v182, %v156
  %v212 = vmul.f32 %v189, %v153
  %v213 = vmul.f32 %v195, %v154
  %v214 = vmul.f32 %v201, %v155
  %v215 = vmul.f32 %v207, %v156
  %v216 = vpack.c.bf16 %v208, %v208
  %v217 = vpack.c.bf16 %v209, %v209
  %v218 = vpack.c.bf16 %v210, %v210
  %v219 = vpack.c.bf16 %v211, %v211
  %v220 = vpack.c.bf16 %v212, %v212
  %v221 = vpack.c.bf16 %v213, %v213
  %v222 = vpack.c.bf16 %v214, %v214
  %v223 = vpack.c.bf16 %v215, %v215
  %vm224 = vcmask 519168
  %225 = vst.msk [vmem:[%s6] sm:$0xf] %vm224, %v216
  %226 = vst.msk [vmem:[%s6 + $0x4] sm:$0xf] %vm224, %v217
  %227 = vst.msk [vmem:[%s6 + $0x8] sm:$0xf] %vm224, %v218
  %228 = vst.msk [vmem:[%s6 + $0xc] sm:$0xf] %vm224, %v219
  %229 = vst.msk [vmem:[%s6 + $0x20] sm:$0xf] %vm224, %v220
  %230 = vst.msk [vmem:[%s6 + $0x24] sm:$0xf] %vm224, %v221
  %231 = vst.msk [vmem:[%s6 + $0x28] sm:$0xf] %vm224, %v222
  %232 = vst.msk [vmem:[%s6 + $0x2c] sm:$0xf] %vm224, %v223
  %v233 = vmul.f32 %v150, %v152
  %v234 = vperm.slane %v233, 0
  %v235 = vlaneseq
  %v236 = vshrl.u32 %v235, 7
  %238 = vset.pattern.permute.xlu0 %v236
  %239 = vperm.xlu0 %238, %v234
  %v240 = vpop.permute.xlu0 %239
  %v241 = vlaneseq
  %v242 = vshrl.u32 %v241, 7
  %v243 = vadd.s32 %v242, 8
  %244 = vset.pattern.permute.xlu0 %v243
  %245 = vperm.xlu0 %244, %v234
  %v246 = vpop.permute.xlu0 %245
  %v247 = vlaneseq
  %v248 = vshrl.u32 %v247, 7
  %v249 = vadd.s32 %v248, 16
  %250 = vset.pattern.permute.xlu0 %v249
  %251 = vperm.xlu0 %250, %v234
  %v252 = vpop.permute.xlu0 %251
  %v253 = vlaneseq
  %v254 = vshrl.u32 %v253, 7
  %v255 = vadd.s32 %v254, 24
  %256 = vset.pattern.permute.xlu0 %v255
  %257 = vperm.xlu0 %256, %v234
  %v258 = vpop.permute.xlu0 %257
  %v259 = vperm.slane %v233, 1
  %v260 = vlaneseq
  %v261 = vshrl.u32 %v260, 7
  %263 = vset.pattern.permute.xlu0 %v261
  %264 = vperm.xlu0 %263, %v259
  %v265 = vpop.permute.xlu0 %264
  %v266 = vlaneseq
  %v267 = vshrl.u32 %v266, 7
  %v268 = vadd.s32 %v267, 8
  %269 = vset.pattern.permute.xlu0 %v268
  %270 = vperm.xlu0 %269, %v259
  %v271 = vpop.permute.xlu0 %270
  %v272 = vlaneseq
  %v273 = vshrl.u32 %v272, 7
  %v274 = vadd.s32 %v273, 16
  %275 = vset.pattern.permute.xlu0 %v274
  %276 = vperm.xlu0 %275, %v259
  %v277 = vpop.permute.xlu0 %276
  %v278 = vlaneseq
  %v279 = vshrl.u32 %v278, 7
  %v280 = vadd.s32 %v279, 24
  %281 = vset.pattern.permute.xlu0 %v280
  %282 = vperm.xlu0 %281, %v259
  %v283 = vpop.permute.xlu0 %282
  %v284 = vmul.f32 %v240, %v153
  %v285 = vmul.f32 %v246, %v154
  %v286 = vmul.f32 %v252, %v155
  %v287 = vmul.f32 %v258, %v156
  %v288 = vmul.f32 %v265, %v153
  %v289 = vmul.f32 %v271, %v154
  %v290 = vmul.f32 %v277, %v155
  %v291 = vmul.f32 %v283, %v156
  %v292 = vpack.c.bf16 %v284, %v284
  %v293 = vpack.c.bf16 %v285, %v285
  %v294 = vpack.c.bf16 %v286, %v286
  %v295 = vpack.c.bf16 %v287, %v287
  %v296 = vpack.c.bf16 %v288, %v288
  %v297 = vpack.c.bf16 %v289, %v289
  %v298 = vpack.c.bf16 %v290, %v290
  %v299 = vpack.c.bf16 %v291, %v291
  %300 = vst.msk [vmem:[%s6 + $0x10] sm:$0xf] %vm224, %v292
  %301 = vst.msk [vmem:[%s6 + $0x14] sm:$0xf] %vm224, %v293
  %302 = vst.msk [vmem:[%s6 + $0x18] sm:$0xf] %vm224, %v294
  %303 = vst.msk [vmem:[%s6 + $0x1c] sm:$0xf] %vm224, %v295
  %304 = vst.msk [vmem:[%s6 + $0x30] sm:$0xf] %vm224, %v296
  %305 = vst.msk [vmem:[%s6 + $0x34] sm:$0xf] %vm224, %v297
  %306 = vst.msk [vmem:[%s6 + $0x38] sm:$0xf] %vm224, %v298
  %307 = vst.msk [vmem:[%s6 + $0x3c] sm:$0xf] %vm224, %v299
  // Predicated region
  $region26: #{sk_unit_forward.4} parent=0 // pred_check
    _
  $region27: #{sk_unit_forward.4} parent=0 // pred_check_branch
    %309 = sbr.rel (0) target = $region29
  $region28: #{sk_unit_forward.4} parent=0 // pred_region
    _
  $region29: #{sk_unit_forward.4} parent=0 // pred_fallthru
    _
  // Predicated region
  $region30: #{sk_unit_forward.4} parent=0 // pred_check
    _
  $region31: #{sk_unit_forward.4} parent=0 // pred_check_branch
    %311 = sbr.rel (0) target = $region33
  $region32: #{sk_unit_forward.4} parent=0 // pred_region
    _
  $region33: #{sk_unit_forward.4} parent=0 // pred_fallthru
    _

// kernel: sk_unit_forward.3
$region0: #{sk_unit_forward.3}
  #allocation0 [shape = 'u32[]', space=smem, size = 0x4, offset = 0x4, fixed_abs, tag = 'smem constant byte address 0x4 - core index']
  #allocation1 [shape = 'u32[72,128]{1,0:T(1,128)}', space=vmem, size = 0x9000, scoped, tag = 'internal scratch']
  #allocation2 [shape = 'bf16[10,16,32]{2,1,0:T(8,128)(2,1)}', space=vmem, size = 0xa000, scoped, tag = 'scratch operand']
  %s0 = inlined_call_operand.vmem [shape: bf16[2,8,16,32], index: 0, kind: input, shape index: {}]
  %s1 = inlined_call_operand.vmem [shape: bf16[2,2,16,32], index: 1, kind: input, shape index: {}]
  %s2 = inlined_call_operand.vmem [shape: bf16[32,32], index: 2, kind: input, shape index: {}]
  %s3 = inlined_call_operand.vmem [shape: f32[1,32], index: 3, kind: input, shape index: {}]
  %s4 = inlined_call_operand.vmem [shape: bf16[32,32], index: 4, kind: input, shape index: {}]
  %s5 = inlined_call_operand.vmem [shape: bf16[288,32], index: 5, kind: input, shape index: {}]
  %s6 = inlined_call_operand.vmem [shape: f32[2,1,32], index: 6, kind: input, shape index: {}]
  %s7 = inlined_call_operand.vmem [shape: bf16[2,8,8,64], index: 7, kind: output, shape index: {0}]
  %s8 = inlined_call_operand.vmem [shape: f32[2,1,1,64], index: 8, kind: output, shape index: {1}]
  %9 = xla_tuple %s7, %s8
  %s10 = sld [smem:[#allocation0]]
  $region69: #{sk_unit_forward.3} parent=0
    _
  %s12 = ssub.s32 1, %s10
  %s13 = scalar_select 0, %s12, %s10
  loop: start=0, step=1, limit=4
  $region2: #{sk_unit_forward.3} parent=0 // loop_pre_header
    _
  $region3: #{sk_unit_forward.3} parent=0 // loop_header
    %s15 = sphi 0, %s19
    %p16 = scmp.ge.s32.totalorder %s15, 4
    %s22 = sphi 0, %s34
    %s23 = sphi 0, %s30
    %s24 = sphi 0, %s22
    %s25 = sphi 0, %s23
    %s26 = sphi 0, %s24
    %s27 = sphi 0, %s25
    %s39 = sphi 0, %s41
    %s42 = sphi 0, %s39
    %s43 = sphi 0, %s42
    %s59 = sphi 0, %s43
    %s67 = sphi 0, %s69
    %s70 = sphi 0, %s67
    %s71 = sphi 0, %s70
    %s87 = sphi 0, %s71
    %s91 = sphi 0, %s91
    %s93 = sphi 0, %s91
    %s94 = sphi 0, %s93
    %s108 = sphi 0, %s94
    %s112 = sphi 0, %s112
    %s114 = sphi 0, %s112
    %s115 = sphi 0, %s114
    %s129 = sphi 0, %s115
    %s133 = sphi 0, %s133
    %s135 = sphi 0, %s133
    %s136 = sphi 0, %s135
    %s150 = sphi 0, %s136
    %s154 = sphi 0, %s154
    %s156 = sphi 0, %s154
    %s157 = sphi 0, %s156
    %s171 = sphi 0, %s157
    %s175 = sphi 0, %s175
    %s177 = sphi 0, %s175
    %s178 = sphi 0, %s177
    %s192 = sphi 0, %s178
    %s200 = sphi 0, %s202
    %s203 = sphi 0, %s200
    %s204 = sphi 0, %s203
    %s220 = sphi 0, %s204
    %s228 = sphi 0, %s230
    %s231 = sphi 0, %s228
    %s232 = sphi 0, %s231
    %s248 = sphi 0, %s232
  $region4: #{sk_unit_forward.3} parent=0 // loop_header_branch
    %18 = sbr.rel (%p16) target = $region8
  $region5: #{sk_unit_forward.3} parent=0 // loop_body
    %s20 = ssub.s32 %s15, 1
    %s21 = ssub.s32 %s15, 2
    %s28 = sadd.s32 1, %s23
    %p29 = scmp.ge.s32.totalorder %s28, 1
    %s30 = scalar_select %p29, 0, %s28
    %s31 = sadd.s32 1, %s22
    %s32 = scalar_select %p29, %s31, %s22
    %p33 = scmp.ge.s32.totalorder %s32, 2
    %s34 = scalar_select %p33, 0, %s32
    %s35 = ssub.s32 %s22, %s34
    %s36 = ssub.s32 %s23, %s30
    %s37 = sor.u32 %s35, %s36
    %p38 = scmp.eq.s32.totalorder %s37, 0
    %s40 = sadd.s32 %s39, 1
    %s41 = scalar_select %p38, %s39, %s40
    %p44 = pneg %p38
    %p45 = scmp.eq.s32.totalorder %s15, 1
    %p46 = por %p44, %p45
    %p47 = scmp.ne.s32.totalorder %s39, %s42
    %p48 = scmp.eq.s32.totalorder %s15, 0
    %p49 = por %p47, %p48
    %p50 = scmp.ne.s32.totalorder %s39, %s42
    %p51 = scmp.eq.s32.totalorder %s20, 1
    %p52 = por %p50, %p51
    %p53 = scmp.ne.s32.totalorder %s42, %s43
    %p54 = scmp.eq.s32.totalorder %s20, 0
    %p55 = por %p53, %p54
    %p56 = scmp.ne.s32.totalorder %s42, %s43
    %p57 = scmp.eq.s32.totalorder %s21, 1
    %p58 = por %p56, %p57
    %p60 = scmp.ne.s32.totalorder %s43, %s59
    %p61 = scmp.eq.s32.totalorder %s21, 0
    %p62 = por %p60, %p61
    %s63 = sadd.s32 %s22, %s23
    %s64 = sadd.s32 %s34, %s30
    %s65 = ssub.s32 %s63, %s64
    %p66 = scmp.eq.s32.totalorder %s65, 0
    %s68 = sadd.s32 %s67, 1
    %s69 = scalar_select %p66, %s67, %s68
    %p72 = pneg %p66
    %p73 = scmp.eq.s32.totalorder %s15, 1
    %p74 = por %p72, %p73
    %p75 = scmp.ne.s32.totalorder %s67, %s70
    %p76 = scmp.eq.s32.totalorder %s15, 0
    %p77 = por %p75, %p76
    %p78 = scmp.ne.s32.totalorder %s67, %s70
    %p79 = scmp.eq.s32.totalorder %s20, 1
    %p80 = por %p78, %p79
    %p81 = scmp.ne.s32.totalorder %s70, %s71
    %p82 = scmp.eq.s32.totalorder %s20, 0
    %p83 = por %p81, %p82
    %p84 = scmp.ne.s32.totalorder %s70, %s71
    %p85 = scmp.eq.s32.totalorder %s21, 1
    %p86 = por %p84, %p85
    %p88 = scmp.ne.s32.totalorder %s71, %s87
    %p89 = scmp.eq.s32.totalorder %s21, 0
    %p90 = por %p88, %p89
    %s92 = sadd.s32 %s91, 1
    %p95 = scmp.eq.s32.totalorder %s15, 1
    %p96 = scmp.ne.s32.totalorder %s91, %s93
    %p97 = scmp.eq.s32.totalorder %s15, 0
    %p98 = por %p96, %p97
    %p99 = scmp.ne.s32.totalorder %s91, %s93
    %p100 = scmp.eq.s32.totalorder %s20, 1
    %p101 = por %p99, %p100
    %p102 = scmp.ne.s32.totalorder %s93, %s94
    %p103 = scmp.eq.s32.totalorder %s20, 0
    %p104 = por %p102, %p103
    %p105 = scmp.ne.s32.totalorder %s93, %s94
    %p106 = scmp.eq.s32.totalorder %s21, 1
    %p107 = por %p105, %p106
    %p109 = scmp.ne.s32.totalorder %s94, %s108
    %p110 = scmp.eq.s32.totalorder %s21, 0
    %p111 = por %p109, %p110
    %s113 = sadd.s32 %s112, 1
    %p116 = scmp.eq.s32.totalorder %s15, 1
    %p117 = scmp.ne.s32.totalorder %s112, %s114
    %p118 = scmp.eq.s32.totalorder %s15, 0
    %p119 = por %p117, %p118
    %p120 = scmp.ne.s32.totalorder %s112, %s114
    %p121 = scmp.eq.s32.totalorder %s20, 1
    %p122 = por %p120, %p121
    %p123 = scmp.ne.s32.totalorder %s114, %s115
    %p124 = scmp.eq.s32.totalorder %s20, 0
    %p125 = por %p123, %p124
    %p126 = scmp.ne.s32.totalorder %s114, %s115
    %p127 = scmp.eq.s32.totalorder %s21, 1
    %p128 = por %p126, %p127
    %p130 = scmp.ne.s32.totalorder %s115, %s129
    %p131 = scmp.eq.s32.totalorder %s21, 0
    %p132 = por %p130, %p131
    %s134 = sadd.s32 %s133, 1
    %p137 = scmp.eq.s32.totalorder %s15, 1
    %p138 = scmp.ne.s32.totalorder %s133, %s135
    %p139 = scmp.eq.s32.totalorder %s15, 0
    %p140 = por %p138, %p139
    %p141 = scmp.ne.s32.totalorder %s133, %s135
    %p142 = scmp.eq.s32.totalorder %s20, 1
    %p143 = por %p141, %p142
    %p144 = scmp.ne.s32.totalorder %s135, %s136
    %p145 = scmp.eq.s32.totalorder %s20, 0
    %p146 = por %p144, %p145
    %p147 = scmp.ne.s32.totalorder %s135, %s136
    %p148 = scmp.eq.s32.totalorder %s21, 1
    %p149 = por %p147, %p148
    %p151 = scmp.ne.s32.totalorder %s136, %s150
    %p152 = scmp.eq.s32.totalorder %s21, 0
    %p153 = por %p151, %p152
    %s155 = sadd.s32 %s154, 1
    %p158 = scmp.eq.s32.totalorder %s15, 1
    %p159 = scmp.ne.s32.totalorder %s154, %s156
    %p160 = scmp.eq.s32.totalorder %s15, 0
    %p161 = por %p159, %p160
    %p162 = scmp.ne.s32.totalorder %s154, %s156
    %p163 = scmp.eq.s32.totalorder %s20, 1
    %p164 = por %p162, %p163
    %p165 = scmp.ne.s32.totalorder %s156, %s157
    %p166 = scmp.eq.s32.totalorder %s20, 0
    %p167 = por %p165, %p166
    %p168 = scmp.ne.s32.totalorder %s156, %s157
    %p169 = scmp.eq.s32.totalorder %s21, 1
    %p170 = por %p168, %p169
    %p172 = scmp.ne.s32.totalorder %s157, %s171
    %p173 = scmp.eq.s32.totalorder %s21, 0
    %p174 = por %p172, %p173
    %s176 = sadd.s32 %s175, 1
    %p179 = scmp.eq.s32.totalorder %s15, 1
    %p180 = scmp.ne.s32.totalorder %s175, %s177
    %p181 = scmp.eq.s32.totalorder %s15, 0
    %p182 = por %p180, %p181
    %p183 = scmp.ne.s32.totalorder %s175, %s177
    %p184 = scmp.eq.s32.totalorder %s20, 1
    %p185 = por %p183, %p184
    %p186 = scmp.ne.s32.totalorder %s177, %s178
    %p187 = scmp.eq.s32.totalorder %s20, 0
    %p188 = por %p186, %p187
    %p189 = scmp.ne.s32.totalorder %s177, %s178
    %p190 = scmp.eq.s32.totalorder %s21, 1
    %p191 = por %p189, %p190
    %p193 = scmp.ne.s32.totalorder %s178, %s192
    %p194 = scmp.eq.s32.totalorder %s21, 0
    %p195 = por %p193, %p194
    %s196 = sadd.s32 %s22, %s23
    %s197 = sadd.s32 %s34, %s30
    %s198 = ssub.s32 %s196, %s197
    %p199 = scmp.eq.s32.totalorder %s198, 0
    %s201 = sadd.s32 %s200, 1
    %s202 = scalar_select %p199, %s200, %s201
    %p205 = pneg %p199
    %p206 = scmp.eq.s32.totalorder %s15, 1
    %p207 = por %p205, %p206
    %p208 = scmp.ne.s32.totalorder %s200, %s203
    %p209 = scmp.eq.s32.totalorder %s15, 0
    %p210 = por %p208, %p209
    %p211 = scmp.ne.s32.totalorder %s200, %s203
    %p212 = scmp.eq.s32.totalorder %s20, 1
    %p213 = por %p211, %p212
    %p214 = scmp.ne.s32.totalorder %s203, %s204
    %p215 = scmp.eq.s32.totalorder %s20, 0
    %p216 = por %p214, %p215
    %p217 = scmp.ne.s32.totalorder %s203, %s204
    %p218 = scmp.eq.s32.totalorder %s21, 1
    %p219 = por %p217, %p218
    %p221 = scmp.ne.s32.totalorder %s204, %s220
    %p222 = scmp.eq.s32.totalorder %s21, 0
    %p223 = por %p221, %p222
    %s224 = ssub.s32 %s22, %s34
    %s225 = ssub.s32 %s23, %s30
    %s226 = sor.u32 %s224, %s225
    %p227 = scmp.eq.s32.totalorder %s226, 0
    %s229 = sadd.s32 %s228, 1
    %s230 = scalar_select %p227, %s228, %s229
    %p233 = pneg %p227
    %p234 = scmp.eq.s32.totalorder %s15, 1
    %p235 = por %p233, %p234
    %p236 = scmp.ne.s32.totalorder %s228, %s231
    %p237 = scmp.eq.s32.totalorder %s15, 0
    %p238 = por %p236, %p237
    %p239 = scmp.ne.s32.totalorder %s228, %s231
    %p240 = scmp.eq.s32.totalorder %s20, 1
    %p241 = por %p239, %p240
    %p242 = scmp.ne.s32.totalorder %s231, %s232
    %p243 = scmp.eq.s32.totalorder %s20, 0
    %p244 = por %p242, %p243
    %p245 = scmp.ne.s32.totalorder %s231, %s232
    %p246 = scmp.eq.s32.totalorder %s21, 1
    %p247 = por %p245, %p246
    %p249 = scmp.ne.s32.totalorder %s232, %s248
    %p250 = scmp.eq.s32.totalorder %s21, 0
    %p251 = por %p249, %p250
    %p252 = scmp.le.s32.totalorder 1, %s15
    %p253 = scmp.lt.s32.totalorder %s15, 3
    %p254 = pnand %p252, %p253
    %p255 = pneg %p254
    // Predicated region
    $region9: #{sk_unit_forward.3} parent=5 // pred_check
      _
    $region10: #{sk_unit_forward.3} parent=5 // pred_check_branch
      %257 = sbr.rel (%p254) target = $region12
    $region11: #{sk_unit_forward.3} parent=5 // pred_region
      %s258 = ssub.s32 %s15, 1
      // Predicated region
      $region13: #{sk_unit_forward.3} parent=11 // pred_check
        %p259 = pneg %p104
      $region14: #{sk_unit_forward.3} parent=11 // pred_check_branch
        %261 = sbr.rel (%p259) target = $region16
      $region15: #{sk_unit_forward.3} parent=11 // pred_region
        _
      $region16: #{sk_unit_forward.3} parent=11 // pred_fallthru
        _
      // Predicated region
      $region17: #{sk_unit_forward.3} parent=11 // pred_check
        %p262 = pneg %p125
      $region18: #{sk_unit_forward.3} parent=11 // pred_check_branch
        %264 = sbr.rel (%p262) target = $region20
      $region19: #{sk_unit_forward.3} parent=11 // pred_region
        _
      $region20: #{sk_unit_forward.3} parent=11 // pred_fallthru
        _
      // Predicated region
      $region21: #{sk_unit_forward.3} parent=11 // pred_check
        %p265 = pneg %p146
      $region22: #{sk_unit_forward.3} parent=11 // pred_check_branch
        %267 = sbr.rel (%p265) target = $region24
      $region23: #{sk_unit_forward.3} parent=11 // pred_region
        _
      $region24: #{sk_unit_forward.3} parent=11 // pred_fallthru
        _
      // Predicated region
      $region25: #{sk_unit_forward.3} parent=11 // pred_check
        %p268 = pneg %p167
      $region26: #{sk_unit_forward.3} parent=11 // pred_check_branch
        %270 = sbr.rel (%p268) target = $region28
      $region27: #{sk_unit_forward.3} parent=11 // pred_region
        _
      $region28: #{sk_unit_forward.3} parent=11 // pred_fallthru
        _
      // Predicated region
      $region29: #{sk_unit_forward.3} parent=11 // pred_check
        %p271 = pneg %p188
      $region30: #{sk_unit_forward.3} parent=11 // pred_check_branch
        %273 = sbr.rel (%p271) target = $region32
      $region31: #{sk_unit_forward.3} parent=11 // pred_region
        _
      $region32: #{sk_unit_forward.3} parent=11 // pred_fallthru
        _
    $region12: #{sk_unit_forward.3} parent=5 // pred_fallthru
      _
    %p274 = scmp.lt.s32.totalorder %s15, 2
    // Predicated region
    $region33: #{sk_unit_forward.3} parent=5 // pred_check
      %p275 = pneg %p274
    $region34: #{sk_unit_forward.3} parent=5 // pred_check_branch
      %277 = sbr.rel (%p275) target = $region36
    $region35: #{sk_unit_forward.3} parent=5 // pred_region
      // Predicated region
      $region37: #{sk_unit_forward.3} parent=35 // pred_check
        %p278 = pneg %p49
      $region38: #{sk_unit_forward.3} parent=35 // pred_check_branch
        %280 = sbr.rel (%p278) target = $region40
      $region39: #{sk_unit_forward.3} parent=35 // pred_region
        %s281 = smul.u32 8, %s23
        %p282 = scmp.lt.s32.totalorder %s22, 1
        %s283 = scalar_select %p282, %s22, 1
        %p284 = scmp.lt.s32.totalorder %s281, 7
        %s285 = scalar_select %p284, %s281, 7
        %s286 = smul.addr %s285, 2
        %s287 = smul.addr %s283, 16
        %s288 = sadd.s32 %s286, %s287
        %s289 = smul.addr %s288, 4
        %s290 = scalar_lea.vmem %s0, %s289
        %s291 = smul.u32 8, %s23
      $region40: #{sk_unit_forward.3} parent=35 // pred_fallthru
        _
      // Predicated region
      $region41: #{sk_unit_forward.3} parent=35 // pred_check
        %p292 = pneg %p77
      $region42: #{sk_unit_forward.3} parent=35 // pred_check_branch
        %294 = sbr.rel (%p292) target = $region44
      $region43: #{sk_unit_forward.3} parent=35 // pred_region
        %s295 = sadd.s32 %s22, %s23
        %p296 = scmp.lt.s32.totalorder %s295, 1
        %s297 = scalar_select %p296, %s295, 1
        %s298 = smul.addr %s297, 4
        %s299 = smul.addr %s298, 4
        %s300 = scalar_lea.vmem %s1, %s299
        %s301 = sadd.s32 %s22, %s23
      $region44: #{sk_unit_forward.3} parent=35 // pred_fallthru
        _
    $region36: #{sk_unit_forward.3} parent=5 // pred_fallthru
      _
    %p302 = scmp.le.s32.totalorder 1, %s15
    %p303 = scmp.lt.s32.totalorder %s15, 3
    %p304 = pnand %p302, %p303
    %p305 = pneg %p304
    // Predicated region
    $region45: #{sk_unit_forward.3} parent=5 // pred_check
      _
    $region46: #{sk_unit_forward.3} parent=5 // pred_check_branch
      %307 = sbr.rel (%p304) target = $region48
    $region47: #{sk_unit_forward.3} parent=5 // pred_region
      %s308 = ssub.s32 %s15, 1
      %s309 = smul.u32 8, %s25
      %p310 = scmp.lt.s32.totalorder %s24, 1
      %s311 = scalar_select %p310, %s24, 1
      %p312 = scmp.lt.s32.totalorder %s309, 7
      %s313 = scalar_select %p312, %s309, 7
      %s314 = smul.addr %s313, 2
      %s315 = smul.addr %s311, 16
      %s316 = sadd.s32 %s314, %s315
      %s317 = smul.addr %s316, 4
      %s318 = scalar_lea.vmem %s0, %s317
      %p319 = pneg %p55
      %p320 = pneg %p52
      %s321 = sadd.s32 %s24, %s25
      %p322 = scmp.lt.s32.totalorder %s321, 1
      %s323 = scalar_select %p322, %s321, 1
      %s324 = smul.addr %s323, 4
      %s325 = smul.addr %s324, 4
      %s326 = scalar_lea.vmem %s1, %s325
      %p327 = pneg %p83
      %p328 = pneg %p80
      %p329 = pneg %p104
      %p330 = pneg %p101
      %p331 = pneg %p125
      %p332 = pneg %p122
      %p333 = pneg %p146
      %p334 = pneg %p143
      %p335 = pneg %p167
      %p336 = pneg %p164
      %p337 = pneg %p188
      %p338 = pneg %p185
      %p339 = pneg %p216
      %p340 = pneg %p213
      %s341 = sadd.s32 %s24, %s25
      %p342 = scmp.lt.s32.totalorder %s341, 1
      %s343 = scalar_select %p342, %s341, 1
      %s344 = smul.addr %s343, 8
      %s345 = smul.addr %s344, 4
      %s346 = scalar_lea.vmem %s7, %s345
      %p347 = pneg %p244
      %p348 = pneg %p241
      %p349 = scmp.lt.s32.totalorder %s24, 1
      %s350 = scalar_select %p349, %s24, 1
      %p351 = scmp.lt.s32.totalorder %s25, 0
      %s352 = scalar_select %p351, %s25, 0
      %s353 = sadd.s32 %s352, %s350
      %s354 = scalar_lea.vmem %s8, %s353
      %s355 = smul.u32 8, %s25
      %p356 = scmp.lt.s32.totalorder %s24, 1
      %s357 = scalar_select %p356, %s24, 1
      %p358 = scmp.lt.s32.totalorder %s355, 7
      %s359 = scalar_select %p358, %s355, 7
      %s360 = smul.addr %s359, 2
      %s361 = smul.addr %s357, 16
      %s362 = sadd.s32 %s360, %s361
      %s363 = smul.addr %s362, 4
      %s364 = scalar_lea.vmem %s0, %s363
      %s365 = smul.u32 8, %s25
      %s366 = sadd.s32 %s24, %s25
      %p367 = scmp.lt.s32.totalorder %s366, 1
      %s368 = scalar_select %p367, %s366, 1
      %s369 = smul.addr %s368, 4
      %s370 = smul.addr %s369, 4
      %s371 = scalar_lea.vmem %s1, %s370
      %s372 = sadd.s32 %s24, %s25
      %s373 = sadd.s32 %s24, %s25
      %p374 = scmp.lt.s32.totalorder %s373, 1
      %s375 = scalar_select %p374, %s373, 1
      %s376 = smul.addr %s375, 8
      %s377 = smul.addr %s376, 4
      %s378 = scalar_lea.vmem %s7, %s377
      %s379 = sadd.s32 %s24, %s25
      %p380 = scmp.lt.s32.totalorder %s24, 1
      %s381 = scalar_select %p380, %s24, 1
      %p382 = scmp.lt.s32.totalorder %s25, 0
      %s383 = scalar_select %p382, %s25, 0
      %s384 = sadd.s32 %s383, %s381
      %s385 = scalar_lea.vmem %s8, %s384
      %s387 = smul.u32 %s25, 8
      %v388 = vld [vmem:[%s364] sm:$0xf]
      %v389 = vld [vmem:[%s364 + $0x4] sm:$0xf]
      %v390 = vld [vmem:[%s364 + $0x8] sm:$0xf]
      %v391 = vld [vmem:[%s364 + $0xc] sm:$0xf]
      %v392 = vld [vmem:[%s364 + $0x10] sm:$0xf]
      %v393 = vld [vmem:[%s364 + $0x14] sm:$0xf]
      %v394 = vld [vmem:[%s364 + $0x18] sm:$0xf]
      %v395 = vld [vmem:[%s364 + $0x1c] sm:$0xf]
      %v396 = vld [vmem:[%s364 + $0x20] sm:$0xf]
      %v397 = vld [vmem:[%s364 + $0x24] sm:$0xf]
      %v398 = vld [vmem:[%s364 + $0x28] sm:$0xf]
      %v399 = vld [vmem:[%s364 + $0x2c] sm:$0xf]
      %v400 = vld [vmem:[%s364 + $0x30] sm:$0xf]
      %v401 = vld [vmem:[%s364 + $0x34] sm:$0xf]
      %v402 = vld [vmem:[%s364 + $0x38] sm:$0xf]
      %v403 = vld [vmem:[%s364 + $0x3c] sm:$0xf]
      %v404 = vld [vmem:[%s2] sm:$0xf]
      %v405 = vld [vmem:[%s2 + $0x4] sm:$0xf]
      %v406 = vld [vmem:[%s2 + $0x8] sm:$0xf]
      %v407 = vld [vmem:[%s2 + $0xc] sm:$0xf]
      %v408 = vld [vmem:[%s3] sm:$0x1]
      %v410 = vperm.slane %v408, 0
      %v428 = vunpack.c.l.b16 %v388
      %v429 = vunpack.c.l.b16 %v389
      %v430 = vunpack.c.l.b16 %v390
      %v431 = vunpack.c.l.b16 %v391
      %v432 = vunpack.c.l.b16 %v392
      %v433 = vunpack.c.l.b16 %v393
      %v434 = vunpack.c.l.b16 %v394
      %v435 = vunpack.c.l.b16 %v395
      %v436 = vunpack.c.l.b16 %v396
      %v437 = vunpack.c.l.b16 %v397
      %v438 = vunpack.c.l.b16 %v398
      %v439 = vunpack.c.l.b16 %v399
      %v440 = vunpack.c.l.b16 %v400
      %v441 = vunpack.c.l.b16 %v401
      %v442 = vunpack.c.l.b16 %v402
      %v443 = vunpack.c.l.b16 %v403
      %v444 = vpack.c.b16 %v429, %v428
      %v445 = vpack.c.b16 %v431, %v430
      %v446 = vpack.c.b16 %v433, %v432
      %v447 = vpack.c.b16 %v435, %v434
      %v448 = vpack.c.b16 %v437, %v436
      %v449 = vpack.c.b16 %v439, %v438
      %v450 = vpack.c.b16 %v441, %v440
      %v451 = vpack.c.b16 %v443, %v442
      %v456 = vunpack.c.l.b16 %v404
      %v457 = vunpack.c.l.b16 %v405
      %v458 = vunpack.c.l.b16 %v406
      %v459 = vunpack.c.l.b16 %v407
      %v460 = vpack.c.b16 %v457, %v456
      %v461 = vpack.c.b16 %v459, %v458
      %vm464 = vcmask 261120
      %v466 = vsel %vm464, %v444, 0
      %v469 = vsel %vm464, %v445, 0
      %v472 = vsel %vm464, %v446, 0
      %v475 = vsel %vm464, %v447, 0
      %v478 = vsel %vm464, %v448, 0
      %v481 = vsel %vm464, %v449, 0
      %v484 = vsel %vm464, %v450, 0
      %v487 = vsel %vm464, %v451, 0
      %489 = vmatpush.bf16.msra.mxu0 0
      %490 = vmatpush.bf16.msra.mxu0 0
      %491 = vmatpush.bf16.msra.mxu0 0
      %492 = vmatpush.bf16.msra.mxu0 0
      %493 = vmatpush.bf16.msra.mxu0 0
      %494 = vmatpush.bf16.msra.mxu0 0
      %495 = vmatpush.bf16.msra.mxu0 %v461
      %496 = vmatpush.bf16.msra.mxu0 %v460
      %497 = vmatmul.bf16.gmra.mxu0 %v466
      %v498 = vpop.f32.mrf.mxu0
      %v499 = vadd.f32 %v410, %v498
      %v500 = vpop.f32.mrf.mxu0
      %v501 = vadd.f32 %v410, %v500
      %502 = vmatmul.bf16.gmra.mxu0 %v469
      %v503 = vpop.f32.mrf.mxu0
      %v504 = vadd.f32 %v410, %v503
      %v505 = vpop.f32.mrf.mxu0
      %v506 = vadd.f32 %v410, %v505
      %507 = vmatmul.bf16.gmra.mxu0 %v472
      %v508 = vpop.f32.mrf.mxu0
      %v509 = vadd.f32 %v410, %v508
      %v510 = vpop.f32.mrf.mxu0
      %v511 = vadd.f32 %v410, %v510
      %512 = vmatmul.bf16.gmra.mxu0 %v475
      %v513 = vpop.f32.mrf.mxu0
      %v514 = vadd.f32 %v410, %v513
      %v515 = vpop.f32.mrf.mxu0
      %v516 = vadd.f32 %v410, %v515
      %517 = vmatmul.bf16.gmra.mxu0 %v478
      %v518 = vpop.f32.mrf.mxu0
      %v519 = vadd.f32 %v410, %v518
      %v520 = vpop.f32.mrf.mxu0
      %v521 = vadd.f32 %v410, %v520
      %522 = vmatmul.bf16.gmra.mxu0 %v481
      %v523 = vpop.f32.mrf.mxu0
      %v524 = vadd.f32 %v410, %v523
      %v525 = vpop.f32.mrf.mxu0
      %v526 = vadd.f32 %v410, %v525
      %527 = vmatmul.bf16.gmra.mxu0 %v484
      %v528 = vpop.f32.mrf.mxu0
      %v529 = vadd.f32 %v410, %v528
      %v530 = vpop.f32.mrf.mxu0
      %v531 = vadd.f32 %v410, %v530
      %532 = vmatmul.bf16.gmra.mxu0 %v487
      %v533 = vpop.f32.mrf.mxu0
      %v534 = vadd.f32 %v410, %v533
      %v535 = vpop.f32.mrf.mxu0
      %v536 = vadd.f32 %v410, %v535
      %537 = vdwg.mxu0
      %v538 = vstv %s387
      %v539 = vadd.s32 %v538, 1
      %v540 = vadd.s32 %v538, 2
      %v541 = vadd.s32 %v538, 3
      %v542 = vadd.s32 %v538, 4
      %v543 = vadd.s32 %v538, 5
      %v544 = vadd.s32 %v538, 6
      %v545 = vadd.s32 %v538, 7
      %v546 = vlaneseq
      %v547 = vshrl.u32 %v546, 7
      %v548 = vadd.s32 %v547, 8
      %v549 = vsub.s32 %v547, 1
      %v550 = vsub.s32 %v548, 1
      %vm551 = vcmp.lt.s32.totalorder %v538, 8
      %vm552 = vcmp.lt.s32.totalorder %v539, 8
      %vm553 = vcmp.lt.s32.totalorder %v540, 8
      %vm554 = vcmp.lt.s32.totalorder %v541, 8
      %vm555 = vcmp.lt.s32.totalorder %v542, 8
      %vm556 = vcmp.lt.s32.totalorder %v543, 8
      %vm557 = vcmp.lt.s32.totalorder %v544, 8
      %vm558 = vcmp.lt.s32.totalorder %v545, 8
      %vm559 = vcmp.ge.s32.totalorder %v549, 0
      %vm560 = vcmp.ge.s32.totalorder %v550, 0
      %vm561 = vmand %vm551, %vm559
      %vm562 = vmand %vm551, %vm560
      %vm563 = vmand %vm552, %vm559
      %vm564 = vmand %vm552, %vm560
      %vm565 = vmand %vm553, %vm559
      %vm566 = vmand %vm553, %vm560
      %vm567 = vmand %vm554, %vm559
      %vm568 = vmand %vm554, %vm560
      %vm569 = vmand %vm555, %vm559
      %vm570 = vmand %vm555, %vm560
      %vm571 = vmand %vm556, %vm559
      %vm572 = vmand %vm556, %vm560
      %vm573 = vmand %vm557, %vm559
      %vm574 = vmand %vm557, %vm560
      %vm575 = vmand %vm558, %vm559
      %vm576 = vmand %vm558, %vm560
      %vm577 = vcmp.lt.s32.totalorder %v549, 8
      %vm578 = vcmp.lt.s32.totalorder %v550, 8
      %vm579 = vmand %vm561, %vm577
      %vm580 = vmand %vm562, %vm578
      %vm581 = vmand %vm563, %vm577
      %vm582 = vmand %vm564, %vm578
      %vm583 = vmand %vm565, %vm577
      %vm584 = vmand %vm566, %vm578
      %vm585 = vmand %vm567, %vm577
      %vm586 = vmand %vm568, %vm578
      %vm587 = vmand %vm569, %vm577
      %vm588 = vmand %vm570, %vm578
      %vm589 = vmand %vm571, %vm577
      %vm590 = vmand %vm572, %vm578
      %vm591 = vmand %vm573, %vm577
      %vm592 = vmand %vm574, %vm578
      %vm593 = vmand %vm575, %vm577
      %vm594 = vmand %vm576, %vm578
      %v595 = vsel %vm579, 1, 0
      %v596 = vsel %vm580, 1, 0
      %v597 = vsel %vm581, 1, 0
      %v598 = vsel %vm582, 1, 0
      %v599 = vsel %vm583, 1, 0
      %v600 = vsel %vm584, 1, 0
      %v601 = vsel %vm585, 1, 0
      %v602 = vsel %vm586, 1, 0
      %v603 = vsel %vm587, 1, 0
      %v604 = vsel %vm588, 1, 0
      %v605 = vsel %vm589, 1, 0
      %v606 = vsel %vm590, 1, 0
      %v607 = vsel %vm591, 1, 0
      %v608 = vsel %vm592, 1, 0
      %v609 = vsel %vm593, 1, 0
      %v610 = vsel %vm594, 1, 0
      %vm611 = vcmp.eq.s32.totalorder %v595, 1
      %vm612 = vcmp.eq.s32.totalorder %v596, 1
      %vm613 = vcmp.eq.s32.totalorder %v597, 1
      %vm614 = vcmp.eq.s32.totalorder %v598, 1
      %vm615 = vcmp.eq.s32.totalorder %v599, 1
      %vm616 = vcmp.eq.s32.totalorder %v600, 1
      %vm617 = vcmp.eq.s32.totalorder %v601, 1
      %vm618 = vcmp.eq.s32.totalorder %v602, 1
      %vm619 = vcmp.eq.s32.totalorder %v603, 1
      %vm620 = vcmp.eq.s32.totalorder %v604, 1
      %vm621 = vcmp.eq.s32.totalorder %v605, 1
      %vm622 = vcmp.eq.s32.totalorder %v606, 1
      %vm623 = vcmp.eq.s32.totalorder %v607, 1
      %vm624 = vcmp.eq.s32.totalorder %v608, 1
      %vm625 = vcmp.eq.s32.totalorder %v609, 1
      %vm626 = vcmp.eq.s32.totalorder %v610, 1
      %v627 = vsel %vm611, %v499, 0.0
      %v628 = vsel %vm612, %v501, 0.0
      %v629 = vsel %vm613, %v504, 0.0
      %v630 = vsel %vm614, %v506, 0.0
      %v631 = vsel %vm615, %v509, 0.0
      %v632 = vsel %vm616, %v511, 0.0
      %v633 = vsel %vm617, %v514, 0.0
      %v634 = vsel %vm618, %v516, 0.0
      %v635 = vsel %vm619, %v519, 0.0
      %v636 = vsel %vm620, %v521, 0.0
      %v637 = vsel %vm621, %v524, 0.0
      %v638 = vsel %vm622, %v526, 0.0
      %v639 = vsel %vm623, %v529, 0.0
      %v640 = vsel %vm624, %v531, 0.0
      %v641 = vsel %vm625, %v534, 0.0
      %v642 = vsel %vm626, %v536, 0.0
      %v643 = vpack.c.bf16 %v627, %v627
      %v644 = vpack.c.bf16 %v628, %v628
      %v645 = vpack.c.bf16 %v629, %v629
      %v646 = vpack.c.bf16 %v630, %v630
      %v647 = vpack.c.bf16 %v631, %v631
      %v648 = vpack.c.bf16 %v632, %v632
      %v649 = vpack.c.bf16 %v633, %v633
      %v650 = vpack.c.bf16 %v634, %v634
      %v651 = vpack.c.bf16 %v635, %v635
      %v652 = vpack.c.bf16 %v636, %v636
      %v653 = vpack.c.bf16 %v637, %v637
      %v654 = vpack.c.bf16 %v638, %v638
      %v655 = vpack.c.bf16 %v639, %v639
      %v656 = vpack.c.bf16 %v640, %v640
      %v657 = vpack.c.bf16 %v641, %v641
      %v658 = vpack.c.bf16 %v642, %v642
      %s659 = scalar_lea.vmem [#allocation2], 8
      %vm660 = vcmask 257024
      %661 = vst.msk [vmem:[%s659] sm:$0xf] %vm660, %v643
      %662 = vst.msk [vmem:[%s659 + $0x4] sm:$0xf] %vm660, %v644
      %663 = vst.msk [vmem:[%s659 + $0x8] sm:$0xf] %vm660, %v645
      %664 = vst.msk [vmem:[%s659 + $0xc] sm:$0xf] %vm660, %v646
      %665 = vst.msk [vmem:[%s659 + $0x10] sm:$0xf] %vm660, %v647
      %666 = vst.msk [vmem:[%s659 + $0x14] sm:$0xf] %vm660, %v648
      %667 = vst.msk [vmem:[%s659 + $0x18] sm:$0xf] %vm660, %v649
      %668 = vst.msk [vmem:[%s659 + $0x1c] sm:$0xf] %vm660, %v650
      %669 = vst.msk [vmem:[%s659 + $0x20] sm:$0xf] %vm660, %v651
      %670 = vst.msk [vmem:[%s659 + $0x24] sm:$0xf] %vm660, %v652
      %671 = vst.msk [vmem:[%s659 + $0x28] sm:$0xf] %vm660, %v653
      %672 = vst.msk [vmem:[%s659 + $0x2c] sm:$0xf] %vm660, %v654
      %673 = vst.msk [vmem:[%s659 + $0x30] sm:$0xf] %vm660, %v655
      %674 = vst.msk [vmem:[%s659 + $0x34] sm:$0xf] %vm660, %v656
      %675 = vst.msk [vmem:[%s659 + $0x38] sm:$0xf] %vm660, %v657
      %676 = vst.msk [vmem:[%s659 + $0x3c] sm:$0xf] %vm660, %v658
      %v677 = vld [vmem:[%s371] sm:$0xf]
      %v678 = vld [vmem:[%s371 + $0x4] sm:$0xf]
      %v679 = vld [vmem:[%s371 + $0x8] sm:$0xf]
      %v680 = vld [vmem:[%s371 + $0xc] sm:$0xf]
      %v681 = vld [vmem:[%s2] sm:$0xf]
      %v682 = vld [vmem:[%s2 + $0x4] sm:$0xf]
      %v683 = vld [vmem:[%s2 + $0x8] sm:$0xf]
      %v684 = vld [vmem:[%s2 + $0xc] sm:$0xf]
      %v685 = vld [vmem:[%s3] sm:$0x1]
      %v687 = vperm.slane %v685, 0
      %v693 = vunpack.c.l.b16 %v677
      %v694 = vunpack.c.l.b16 %v678
      %v695 = vunpack.c.l.b16 %v679
      %v696 = vunpack.c.l.b16 %v680
      %v697 = vpack.c.b16 %v694, %v693
      %v698 = vpack.c.b16 %v696, %v695
      %v703 = vunpack.c.l.b16 %v681
      %v704 = vunpack.c.l.b16 %v682
      %v705 = vunpack.c.l.b16 %v683
      %v706 = vunpack.c.l.b16 %v684
      %v707 = vpack.c.b16 %v704, %v703
      %v708 = vpack.c.b16 %v706, %v705
      %v712 = vsel %vm464, %v697, 0
      %v715 = vsel %vm464, %v698, 0
      %717 = vmatpush.bf16.msra.mxu0 0
      %718 = vmatpush.bf16.msra.mxu0 0
      %719 = vmatpush.bf16.msra.mxu0 0
      %720 = vmatpush.bf16.msra.mxu0 0
      %721 = vmatpush.bf16.msra.mxu0 0
      %722 = vmatpush.bf16.msra.mxu0 0
      %723 = vmatpush.bf16.msra.mxu0 %v708
      %724 = vmatpush.bf16.msra.mxu0 %v707
      %725 = vmatmul.bf16.gmra.mxu0 %v712
      %v726 = vpop.f32.mrf.mxu0
      %v727 = vadd.f32 %v687, %v726
      %v728 = vpop.f32.mrf.mxu0
      %v729 = vadd.f32 %v687, %v728
      %730 = vmatmul.bf16.gmra.mxu0 %v715
      %v731 = vpop.f32.mrf.mxu0
      %v732 = vadd.f32 %v687, %v731
      %v733 = vpop.f32.mrf.mxu0
      %v734 = vadd.f32 %v687, %v733
      %735 = vdwg.mxu0
      %s736 = ssub.s32 %s387, 1
      %v737 = vstv %s736
      %v738 = vadd.s32 %v737, 1
      %v739 = vadd.s32 %v738, 8
      %vm740 = vcmp.ge.s32.totalorder %v737, 0
      %vm741 = vcmp.ge.s32.totalorder %v739, 0
      %vm742 = vcmp.lt.s32.totalorder %v737, 8
      %vm743 = vcmp.lt.s32.totalorder %v739, 8
      %vm744 = vmand %vm740, %vm742
      %vm745 = vmand %vm741, %vm743
      %vm746 = vmand %vm744, %vm559
      %vm747 = vmand %vm744, %vm560
      %vm748 = vmand %vm745, %vm559
      %vm749 = vmand %vm745, %vm560
      %vm750 = vmand %vm746, %vm577
      %vm751 = vmand %vm747, %vm578
      %vm752 = vmand %vm748, %vm577
      %vm753 = vmand %vm749, %vm578
      %v754 = vsel %vm750, 1, 0
      %v755 = vsel %vm751, 1, 0
      %v756 = vsel %vm752, 1, 0
      %v757 = vsel %vm753, 1, 0
      %vm758 = vcmp.eq.s32.totalorder %v754, 1
      %vm759 = vcmp.eq.s32.totalorder %v755, 1
      %vm760 = vcmp.eq.s32.totalorder %v756, 1
      %vm761 = vcmp.eq.s32.totalorder %v757, 1
      %v762 = vsel %vm758, %v727, 0.0
      %v763 = vsel %vm759, %v729, 0.0
      %v764 = vsel %vm760, %v732, 0.0
      %v765 = vsel %vm761, %v734, 0.0
      %v766 = vpack.c.bf16 %v762, %v762
      %v767 = vpack.c.bf16 %v763, %v763
      %v768 = vpack.c.bf16 %v764, %v764
      %v769 = vpack.c.bf16 %v765, %v765
      %770 = vst.msk [vmem:[#allocation2] sm:$0xf] %vm660, %v766
      %771 = vst.msk [vmem:[#allocation2 + $0x4] sm:$0xf] %vm660, %v767
      %s772 = scalar_lea.vmem [#allocation2], 72
      %773 = vst.msk [vmem:[%s772] sm:$0xf] %vm660, %v768
      %774 = vst.msk [vmem:[%s772 + $0x4] sm:$0xf] %vm660, %v769
      %vm775 = vcmp.lt.s32.totalorder %v547, 8
      %vm776 = vmand %vm551, %vm775
      %vm777 = vmand %vm552, %vm775
      %vm778 = vmand %vm553, %vm775
      %vm779 = vmand %vm554, %vm775
      %vm780 = vmand %vm555, %vm775
      %vm781 = vmand %vm556, %vm775
      %vm782 = vmand %vm557, %vm775
      %vm783 = vmand %vm558, %vm775
      %v784 = vld [vmem:[%s659] sm:$0xf]
      %v785 = vld [vmem:[%s659 + $0x4] sm:$0x1]
      %v786 = vld [vmem:[%s659 + $0x8] sm:$0xf]
      %v787 = vld [vmem:[%s659 + $0xc] sm:$0x1]
      %v788 = vld [vmem:[%s659 + $0x10] sm:$0xf]
      %v789 = vld [vmem:[%s659 + $0x14] sm:$0x1]
      %v790 = vld [vmem:[%s659 + $0x18] sm:$0xf]
      %v791 = vld [vmem:[%s659 + $0x1c] sm:$0x1]
      %v792 = vld [vmem:[%s659 + $0x20] sm:$0xf]
      %v793 = vld [vmem:[%s659 + $0x24] sm:$0x1]
      %v794 = vld [vmem:[%s659 + $0x28] sm:$0xf]
      %v795 = vld [vmem:[%s659 + $0x2c] sm:$0x1]
      %v796 = vld [vmem:[%s659 + $0x30] sm:$0xf]
      %v797 = vld [vmem:[%s659 + $0x34] sm:$0x1]
      %v798 = vld [vmem:[%s659 + $0x38] sm:$0xf]
      %v799 = vld [vmem:[%s659 + $0x3c] sm:$0x1]
      %vm800 = vsmask.f32 3328
      %vm801 = vsmask.f32 7440
      %vm802 = vmor %vm800, %vm801
      %v804 = vshrl.u32 %v784, 16
      %v806 = vrot.slane %v804, 4
      %v807 = vshll.u32 %v784, 16
      %v809 = vrot.slane %v807, 5
      %v810 = vor.u32 %v806, %v809
      %v811 = vrot.slane %v810, 4
      %v813 = vshll.u32 %v785, 16
      %v815 = vrot.slane %v813, 5
      %v816 = vsel %vm802, %v811, %v815
      %v818 = vshrl.u32 %v786, 16
      %v820 = vrot.slane %v818, 4
      %v821 = vshll.u32 %v786, 16
      %v823 = vrot.slane %v821, 5
      %v824 = vor.u32 %v820, %v823
      %v825 = vrot.slane %v824, 4
      %v827 = vshll.u32 %v787, 16
      %v829 = vrot.slane %v827, 5
      %v830 = vsel %vm802, %v825, %v829
      %v832 = vshrl.u32 %v788, 16
      %v834 = vrot.slane %v832, 4
      %v835 = vshll.u32 %v788, 16
      %v837 = vrot.slane %v835, 5
      %v838 = vor.u32 %v834, %v837
      %v839 = vrot.slane %v838, 4
      %v841 = vshll.u32 %v789, 16
      %v843 = vrot.slane %v841, 5
      %v844 = vsel %vm802, %v839, %v843
      %v846 = vshrl.u32 %v790, 16
      %v848 = vrot.slane %v846, 4
      %v849 = vshll.u32 %v790, 16
      %v851 = vrot.slane %v849, 5
      %v852 = vor.u32 %v848, %v851
      %v853 = vrot.slane %v852, 4
      %v855 = vshll.u32 %v791, 16
      %v857 = vrot.slane %v855, 5
      %v858 = vsel %vm802, %v853, %v857
      %v860 = vshrl.u32 %v792, 16
      %v862 = vrot.slane %v860, 4
      %v863 = vshll.u32 %v792, 16
      %v865 = vrot.slane %v863, 5
      %v866 = vor.u32 %v862, %v865
      %v867 = vrot.slane %v866, 4
      %v869 = vshll.u32 %v793, 16
      %v871 = vrot.slane %v869, 5
      %v872 = vsel %vm802, %v867, %v871
      %v874 = vshrl.u32 %v794, 16
      %v876 = vrot.slane %v874, 4
      %v877 = vshll.u32 %v794, 16
      %v879 = vrot.slane %v877, 5
      %v880 = vor.u32 %v876, %v879
      %v881 = vrot.slane %v880, 4
      %v883 = vshll.u32 %v795, 16
      %v885 = vrot.slane %v883, 5
      %v886 = vsel %vm802, %v881, %v885
      %v888 = vshrl.u32 %v796, 16
      %v890 = vrot.slane %v888, 4
      %v891 = vshll.u32 %v796, 16
      %v893 = vrot.slane %v891, 5
      %v894 = vor.u32 %v890, %v893
      %v895 = vrot.slane %v894, 4
      %v897 = vshll.u32 %v797, 16
      %v899 = vrot.slane %v897, 5
      %v900 = vsel %vm802, %v895, %v899
      %v902 = vshrl.u32 %v798, 16
      %v904 = vrot.slane %v902, 4
      %v905 = vshll.u32 %v798, 16
      %v907 = vrot.slane %v905, 5
      %v908 = vor.u32 %v904, %v907
      %v909 = vrot.slane %v908, 4
      %v911 = vshll.u32 %v799, 16
      %v913 = vrot.slane %v911, 5
      %v914 = vsel %vm802, %v909, %v913
      %v915 = vld [vmem:[%s4] sm:$0xf]
      %v916 = vld [vmem:[%s4 + $0x4] sm:$0xf]
      %v917 = vld [vmem:[%s4 + $0x8] sm:$0xf]
      %v918 = vld [vmem:[%s4 + $0xc] sm:$0xf]
      %v919 = vld [vmem:[%s6] sm:$0x1]
      %v921 = vperm.slane %v919, 0
      %v923 = vunpack.c.l.b16 %v816
      %v924 = vunpack.c.l.b16 %v830
      %v925 = vunpack.c.l.b16 %v844
      %v926 = vunpack.c.l.b16 %v858
      %v927 = vunpack.c.l.b16 %v872
      %v928 = vunpack.c.l.b16 %v886
      %v929 = vunpack.c.l.b16 %v900
      %v930 = vunpack.c.l.b16 %v914
      %v931 = vpack.c.b16 %v924, %v923
      %v932 = vpack.c.b16 %v926, %v925
      %v933 = vpack.c.b16 %v928, %v927
      %v934 = vpack.c.b16 %v930, %v929
      %v939 = vunpack.c.l.b16 %v915
      %v940 = vunpack.c.l.b16 %v916
      %v941 = vunpack.c.l.b16 %v917
      %v942 = vunpack.c.l.b16 %v918
      %v943 = vpack.c.b16 %v940, %v939
      %v944 = vpack.c.b16 %v942, %v941
      %v948 = vsel %vm464, %v931, 0
      %v951 = vsel %vm464, %v932, 0
      %v954 = vsel %vm464, %v933, 0
      %v957 = vsel %vm464, %v934, 0
      %959 = vmatpush.bf16.msra.mxu0 0
      %960 = vmatpush.bf16.msra.mxu0 0
      %961 = vmatpush.bf16.msra.mxu0 0
      %962 = vmatpush.bf16.msra.mxu0 0
      %963 = vmatpush.bf16.msra.mxu0 0
      %964 = vmatpush.bf16.msra.mxu0 0
      %965 = vmatpush.bf16.msra.mxu0 %v944
      %966 = vmatpush.bf16.msra.mxu0 %v943
      %967 = vmatmul.bf16.gmra.mxu0 %v948
      %v968 = vpop.f32.mrf.mxu0
      %v969 = vadd.f32 %v921, %v968
      %v970 = vpop.f32.mrf.mxu0
      %v971 = vadd.f32 %v921, %v970
      %972 = vmatmul.bf16.gmra.mxu0 %v951
      %v973 = vpop.f32.mrf.mxu0
      %v974 = vadd.f32 %v921, %v973
      %v975 = vpop.f32.mrf.mxu0
      %v976 = vadd.f32 %v921, %v975
      %977 = vmatmul.bf16.gmra.mxu0 %v954
      %v978 = vpop.f32.mrf.mxu0
      %v979 = vadd.f32 %v921, %v978
      %v980 = vpop.f32.mrf.mxu0
      %v981 = vadd.f32 %v921, %v980
      %982 = vmatmul.bf16.gmra.mxu0 %v957
      %v983 = vpop.f32.mrf.mxu0
      %v984 = vadd.f32 %v921, %v983
      %v985 = vpop.f32.mrf.mxu0
      %v986 = vadd.f32 %v921, %v985
      %987 = vdwg.mxu0
      %vm988 = vcmp.gt.f32.partialorder %v969, 0.0
      %vm989 = vcmp.gt.f32.partialorder %v971, 0.0
      %vm990 = vcmp.gt.f32.partialorder %v974, 0.0
      %vm991 = vcmp.gt.f32.partialorder %v976, 0.0
      %vm992 = vcmp.gt.f32.partialorder %v979, 0.0
      %vm993 = vcmp.gt.f32.partialorder %v981, 0.0
      %vm994 = vcmp.gt.f32.partialorder %v984, 0.0
      %vm995 = vcmp.gt.f32.partialorder %v986, 0.0
      %v996 = vmul.f32 %v969, 0.2
      %v997 = vmul.f32 %v971, 0.2
      %v998 = vmul.f32 %v974, 0.2
      %v999 = vmul.f32 %v976, 0.2
      %v1000 = vmul.f32 %v979, 0.2
      %v1001 = vmul.f32 %v981, 0.2
      %v1002 = vmul.f32 %v984, 0.2
      %v1003 = vmul.f32 %v986, 0.2
      %v1004 = vsel %vm988, %v969, %v996
      %v1005 = vsel %vm989, %v971, %v997
      %v1006 = vsel %vm990, %v974, %v998
      %v1007 = vsel %vm991, %v976, %v999
      %v1008 = vsel %vm992, %v979, %v1000
      %v1009 = vsel %vm993, %v981, %v1001
      %v1010 = vsel %vm994, %v984, %v1002
      %v1011 = vsel %vm995, %v986, %v1003
      %v1012 = vsel %vm776, 1, 0
      %v1013 = vsel %vm777, 1, 0
      %v1014 = vsel %vm778, 1, 0
      %v1015 = vsel %vm779, 1, 0
      %v1016 = vsel %vm780, 1, 0
      %v1017 = vsel %vm781, 1, 0
      %v1018 = vsel %vm782, 1, 0
      %v1019 = vsel %vm783, 1, 0
      %vm1020 = vcmp.eq.s32.totalorder %v1012, 1
      %vm1021 = vcmp.eq.s32.totalorder %v1013, 1
      %vm1022 = vcmp.eq.s32.totalorder %v1014, 1
      %vm1023 = vcmp.eq.s32.totalorder %v1015, 1
      %vm1024 = vcmp.eq.s32.totalorder %v1016, 1
      %vm1025 = vcmp.eq.s32.totalorder %v1017, 1
      %vm1026 = vcmp.eq.s32.totalorder %v1018, 1
      %vm1027 = vcmp.eq.s32.totalorder %v1019, 1
      %v1028 = vsel %vm1020, %v1004, 0.0
      %v1029 = vsel %vm1021, %v1005, 0.0
      %v1030 = vsel %vm1022, %v1006, 0.0
      %v1031 = vsel %vm1023, %v1007, 0.0
      %v1032 = vsel %vm1024, %v1008, 0.0
      %v1033 = vsel %vm1025, %v1009, 0.0
      %v1034 = vsel %vm1026, %v1010, 0.0
      %v1035 = vsel %vm1027, %v1011, 0.0
      %v1036 = vsel %vm464, %v1028, 0.0
      %v1037 = vsel %vm464, %v1029, 0.0
      %v1038 = vadd.f32 %v1036, %v1037
      %v1039 = vsel %vm464, %v1030, 0.0
      %v1040 = vadd.f32 %v1038, %v1039
      %v1041 = vsel %vm464, %v1031, 0.0
      %v1042 = vadd.f32 %v1040, %v1041
      %v1043 = vsel %vm464, %v1032, 0.0
      %v1044 = vadd.f32 %v1042, %v1043
      %v1045 = vsel %vm464, %v1033, 0.0
      %v1046 = vadd.f32 %v1044, %v1045
      %v1047 = vsel %vm464, %v1034, 0.0
      %v1048 = vadd.f32 %v1046, %v1047
      %v1049 = vsel %vm464, %v1035, 0.0
      %v1050 = vadd.f32 %v1048, %v1049
      %v1051 = vrot.slane %v1050, 4
      %v1052 = vadd.f32 %v1050, %v1051
      %v1053 = vrot.slane %v1052, 2
      %v1054 = vadd.f32 %v1052, %v1053
      %v1055 = vrot.slane %v1054, 1
      %v1056 = vadd.f32 %v1054, %v1055
      %vm1057 = vcmask 253952
      %1058 = vst.msk [vmem:[%s385] sm:$0x1] %vm1057, %v1056
      %v1059 = vpack.c.bf16 %v1004, %v1004
      %v1060 = vpack.c.bf16 %v1005, %v1005
      %v1061 = vpack.c.bf16 %v1006, %v1006
      %v1062 = vpack.c.bf16 %v1007, %v1007
      %v1063 = vpack.c.bf16 %v1008, %v1008
      %v1064 = vpack.c.bf16 %v1009, %v1009
      %v1065 = vpack.c.bf16 %v1010, %v1010
      %v1066 = vpack.c.bf16 %v1011, %v1011
      %1067 = vst.msk [vmem:[%s378] sm:$0xf] %vm660, %v1059
      %1068 = vst.msk [vmem:[%s378 + $0x4] sm:$0xf] %vm660, %v1060
      %1069 = vst.msk [vmem:[%s378 + $0x8] sm:$0xf] %vm660, %v1061
      %1070 = vst.msk [vmem:[%s378 + $0xc] sm:$0xf] %vm660, %v1062
      %1071 = vst.msk [vmem:[%s378 + $0x10] sm:$0xf] %vm660, %v1063
      %1072 = vst.msk [vmem:[%s378 + $0x14] sm:$0xf] %vm660, %v1064
      %1073 = vst.msk [vmem:[%s378 + $0x18] sm:$0xf] %vm660, %v1065
      %1074 = vst.msk [vmem:[%s378 + $0x1c] sm:$0xf] %vm660, %v1066
      %v1075 = vld [vmem:[#allocation2] sm:$0xf]
      %v1076 = vld [vmem:[#allocation2 + $0x8] sm:$0xf]
      %v1077 = vld [vmem:[#allocation2 + $0x10] sm:$0xf]
      %v1078 = vld [vmem:[#allocation2 + $0x18] sm:$0xf]
      %v1079 = vld [vmem:[#allocation2 + $0x20] sm:$0xf]
      %v1080 = vld [vmem:[#allocation2 + $0x28] sm:$0xf]
      %v1081 = vld [vmem:[#allocation2 + $0x30] sm:$0xf]
      %v1082 = vld [vmem:[#allocation2 + $0x38] sm:$0xf]
      %v1083 = vld [vmem:[#allocation2 + $0x4] sm:$0x1]
      %v1084 = vld [vmem:[#allocation2 + $0xc] sm:$0x1]
      %v1085 = vld [vmem:[#allocation2 + $0x14] sm:$0x1]
      %v1086 = vld [vmem:[#allocation2 + $0x1c] sm:$0x1]
      %v1087 = vld [vmem:[#allocation2 + $0x24] sm:$0x1]
      %v1088 = vld [vmem:[#allocation2 + $0x2c] sm:$0x1]
      %v1089 = vld [vmem:[#allocation2 + $0x34] sm:$0x1]
      %v1090 = vld [vmem:[#allocation2 + $0x3c] sm:$0x1]
      %v1092 = vshrl.u32 %v1075, 16
      %v1094 = vrot.slane %v1092, 4
      %v1095 = vshll.u32 %v1075, 16
      %v1097 = vrot.slane %v1095, 5
      %v1098 = vor.u32 %v1094, %v1097
      %v1099 = vrot.slane %v1098, 4
      %v1101 = vshll.u32 %v1083, 16
      %v1103 = vrot.slane %v1101, 5
      %v1104 = vsel %vm802, %v1099, %v1103
      %v1106 = vshrl.u32 %v1076, 16
      %v1108 = vrot.slane %v1106, 4
      %v1109 = vshll.u32 %v1076, 16
      %v1111 = vrot.slane %v1109, 5
      %v1112 = vor.u32 %v1108, %v1111
      %v1113 = vrot.slane %v1112, 4
      %v1115 = vshll.u32 %v1084, 16
      %v1117 = vrot.slane %v1115, 5
      %v1118 = vsel %vm802, %v1113, %v1117
      %v1120 = vshrl.u32 %v1077, 16
      %v1122 = vrot.slane %v1120, 4
      %v1123 = vshll.u32 %v1077, 16
      %v1125 = vrot.slane %v1123, 5
      %v1126 = vor.u32 %v1122, %v1125
      %v1127 = vrot.slane %v1126, 4
      %v1129 = vshll.u32 %v1085, 16
      %v1131 = vrot.slane %v1129, 5
      %v1132 = vsel %vm802, %v1127, %v1131
      %v1134 = vshrl.u32 %v1078, 16
      %v1136 = vrot.slane %v1134, 4
      %v1137 = vshll.u32 %v1078, 16
      %v1139 = vrot.slane %v1137, 5
      %v1140 = vor.u32 %v1136, %v1139
      %v1141 = vrot.slane %v1140, 4
      %v1143 = vshll.u32 %v1086, 16
      %v1145 = vrot.slane %v1143, 5
      %v1146 = vsel %vm802, %v1141, %v1145
      %v1148 = vshrl.u32 %v1079, 16
      %v1150 = vrot.slane %v1148, 4
      %v1151 = vshll.u32 %v1079, 16
      %v1153 = vrot.slane %v1151, 5
      %v1154 = vor.u32 %v1150, %v1153
      %v1155 = vrot.slane %v1154, 4
      %v1157 = vshll.u32 %v1087, 16
      %v1159 = vrot.slane %v1157, 5
      %v1160 = vsel %vm802, %v1155, %v1159
      %v1162 = vshrl.u32 %v1080, 16
      %v1164 = vrot.slane %v1162, 4
      %v1165 = vshll.u32 %v1080, 16
      %v1167 = vrot.slane %v1165, 5
      %v1168 = vor.u32 %v1164, %v1167
      %v1169 = vrot.slane %v1168, 4
      %v1171 = vshll.u32 %v1088, 16
      %v1173 = vrot.slane %v1171, 5
      %v1174 = vsel %vm802, %v1169, %v1173
      %v1176 = vshrl.u32 %v1081, 16
      %v1178 = vrot.slane %v1176, 4
      %v1179 = vshll.u32 %v1081, 16
      %v1181 = vrot.slane %v1179, 5
      %v1182 = vor.u32 %v1178, %v1181
      %v1183 = vrot.slane %v1182, 4
      %v1185 = vshll.u32 %v1089, 16
      %v1187 = vrot.slane %v1185, 5
      %v1188 = vsel %vm802, %v1183, %v1187
      %v1190 = vshrl.u32 %v1082, 16
      %v1192 = vrot.slane %v1190, 4
      %v1193 = vshll.u32 %v1082, 16
      %v1195 = vrot.slane %v1193, 5
      %v1196 = vor.u32 %v1192, %v1195
      %v1197 = vrot.slane %v1196, 4
      %v1199 = vshll.u32 %v1090, 16
      %v1201 = vrot.slane %v1199, 5
      %v1202 = vsel %vm802, %v1197, %v1201
      %v1203 = vld [vmem:[#allocation2] sm:$0xe]
      %v1204 = vld [vmem:[#allocation2 + $0x8] sm:$0xe]
      %v1205 = vld [vmem:[#allocation2 + $0x10] sm:$0xe]
      %v1206 = vld [vmem:[#allocation2 + $0x18] sm:$0xe]
      %v1207 = vld [vmem:[#allocation2 + $0x20] sm:$0xe]
      %v1208 = vld [vmem:[#allocation2 + $0x28] sm:$0xe]
      %v1209 = vld [vmem:[#allocation2 + $0x30] sm:$0xe]
      %v1210 = vld [vmem:[#allocation2 + $0x38] sm:$0xe]
      %vm1227 = vcmask 1042432
      %vm1228 = vcmask 1046532
      %vm1229 = vmor %vm1227, %vm1228
      %v1230 = vrot.slane %v1203, 5
      %v1231 = vrot.slane %v1230, 4
      %v1232 = vrot.slane %v1083, 5
      %v1233 = vsel %vm1229, %v1231, %v1232
      %v1234 = vrot.slane %v1204, 5
      %v1235 = vrot.slane %v1234, 4
      %v1236 = vrot.slane %v1084, 5
      %v1237 = vsel %vm1229, %v1235, %v1236
      %v1238 = vrot.slane %v1205, 5
      %v1239 = vrot.slane %v1238, 4
      %v1240 = vrot.slane %v1085, 5
      %v1241 = vsel %vm1229, %v1239, %v1240
      %v1242 = vrot.slane %v1206, 5
      %v1243 = vrot.slane %v1242, 4
      %v1244 = vrot.slane %v1086, 5
      %v1245 = vsel %vm1229, %v1243, %v1244
      %v1246 = vrot.slane %v1207, 5
      %v1247 = vrot.slane %v1246, 4
      %v1248 = vrot.slane %v1087, 5
      %v1249 = vsel %vm1229, %v1247, %v1248
      %v1250 = vrot.slane %v1208, 5
      %v1251 = vrot.slane %v1250, 4
      %v1252 = vrot.slane %v1088, 5
      %v1253 = vsel %vm1229, %v1251, %v1252
      %v1254 = vrot.slane %v1209, 5
      %v1255 = vrot.slane %v1254, 4
      %v1256 = vrot.slane %v1089, 5
      %v1257 = vsel %vm1229, %v1255, %v1256
      %v1258 = vrot.slane %v1210, 5
      %v1259 = vrot.slane %v1258, 4
      %v1260 = vrot.slane %v1090, 5
      %v1261 = vsel %vm1229, %v1259, %v1260
      %v1262 = vld [vmem:[%s659] sm:$0xf]
      %v1263 = vld [vmem:[%s659 + $0x8] sm:$0xf]
      %v1264 = vld [vmem:[%s659 + $0x10] sm:$0xf]
      %v1265 = vld [vmem:[%s659 + $0x18] sm:$0xf]
      %v1266 = vld [vmem:[%s659 + $0x20] sm:$0xf]
      %v1267 = vld [vmem:[%s659 + $0x28] sm:$0xf]
      %v1268 = vld [vmem:[%s659 + $0x30] sm:$0xf]
      %v1269 = vld [vmem:[%s659 + $0x38] sm:$0xf]
      %v1270 = vld [vmem:[%s659 + $0x4] sm:$0x1]
      %v1271 = vld [vmem:[%s659 + $0xc] sm:$0x1]
      %v1272 = vld [vmem:[%s659 + $0x14] sm:$0x1]
      %v1273 = vld [vmem:[%s659 + $0x1c] sm:$0x1]
      %v1274 = vld [vmem:[%s659 + $0x24] sm:$0x1]
      %v1275 = vld [vmem:[%s659 + $0x2c] sm:$0x1]
      %v1276 = vld [vmem:[%s659 + $0x34] sm:$0x1]
      %v1277 = vld [vmem:[%s659 + $0x3c] sm:$0x1]
      %v1279 = vshrl.u32 %v1262, 16
      %v1281 = vrot.slane %v1279, 4
      %v1282 = vshll.u32 %v1262, 16
      %v1284 = vrot.slane %v1282, 5
      %v1285 = vor.u32 %v1281, %v1284
      %v1286 = vrot.slane %v1285, 4
      %v1288 = vshll.u32 %v1270, 16
      %v1290 = vrot.slane %v1288, 5
      %v1291 = vsel %vm802, %v1286, %v1290
      %v1293 = vshrl.u32 %v1263, 16
      %v1295 = vrot.slane %v1293, 4
      %v1296 = vshll.u32 %v1263, 16
      %v1298 = vrot.slane %v1296, 5
      %v1299 = vor.u32 %v1295, %v1298
      %v1300 = vrot.slane %v1299, 4
      %v1302 = vshll.u32 %v1271, 16
      %v1304 = vrot.slane %v1302, 5
      %v1305 = vsel %vm802, %v1300, %v1304
      %v1307 = vshrl.u32 %v1264, 16
      %v1309 = vrot.slane %v1307, 4
      %v1310 = vshll.u32 %v1264, 16
      %v1312 = vrot.slane %v1310, 5
      %v1313 = vor.u32 %v1309, %v1312
      %v1314 = vrot.slane %v1313, 4
      %v1316 = vshll.u32 %v1272, 16
      %v1318 = vrot.slane %v1316, 5
      %v1319 = vsel %vm802, %v1314, %v1318
      %v1321 = vshrl.u32 %v1265, 16
      %v1323 = vrot.slane %v1321, 4
      %v1324 = vshll.u32 %v1265, 16
      %v1326 = vrot.slane %v1324, 5
      %v1327 = vor.u32 %v1323, %v1326
      %v1328 = vrot.slane %v1327, 4
      %v1330 = vshll.u32 %v1273, 16
      %v1332 = vrot.slane %v1330, 5
      %v1333 = vsel %vm802, %v1328, %v1332
      %v1335 = vshrl.u32 %v1266, 16
      %v1337 = vrot.slane %v1335, 4
      %v1338 = vshll.u32 %v1266, 16
      %v1340 = vrot.slane %v1338, 5
      %v1341 = vor.u32 %v1337, %v1340
      %v1342 = vrot.slane %v1341, 4
      %v1344 = vshll.u32 %v1274, 16
      %v1346 = vrot.slane %v1344, 5
      %v1347 = vsel %vm802, %v1342, %v1346
      %v1349 = vshrl.u32 %v1267, 16
      %v1351 = vrot.slane %v1349, 4
      %v1352 = vshll.u32 %v1267, 16
      %v1354 = vrot.slane %v1352, 5
      %v1355 = vor.u32 %v1351, %v1354
      %v1356 = vrot.slane %v1355, 4
      %v1358 = vshll.u32 %v1275, 16
      %v1360 = vrot.slane %v1358, 5
      %v1361 = vsel %vm802, %v1356, %v1360
      %v1363 = vshrl.u32 %v1268, 16
      %v1365 = vrot.slane %v1363, 4
      %v1366 = vshll.u32 %v1268, 16
      %v1368 = vrot.slane %v1366, 5
      %v1369 = vor.u32 %v1365, %v1368
      %v1370 = vrot.slane %v1369, 4
      %v1372 = vshll.u32 %v1276, 16
      %v1374 = vrot.slane %v1372, 5
      %v1375 = vsel %vm802, %v1370, %v1374
      %v1377 = vshrl.u32 %v1269, 16
      %v1379 = vrot.slane %v1377, 4
      %v1380 = vshll.u32 %v1269, 16
      %v1382 = vrot.slane %v1380, 5
      %v1383 = vor.u32 %v1379, %v1382
      %v1384 = vrot.slane %v1383, 4
      %v1386 = vshll.u32 %v1277, 16
      %v1388 = vrot.slane %v1386, 5
      %v1389 = vsel %vm802, %v1384, %v1388
      %v1390 = vld [vmem:[%s659] sm:$0xe]
      %v1391 = vld [vmem:[%s659 + $0x8] sm:$0xe]
      %v1392 = vld [vmem:[%s659 + $0x10] sm:$0xe]
      %v1393 = vld [vmem:[%s659 + $0x18] sm:$0xe]
      %v1394 = vld [vmem:[%s659 + $0x20] sm:$0xe]
      %v1395 = vld [vmem:[%s659 + $0x28] sm:$0xe]
      %v1396 = vld [vmem:[%s659 + $0x30] sm:$0xe]
      %v1397 = vld [vmem:[%s659 + $0x38] sm:$0xe]
      %v1414 = vrot.slane %v1390, 5
      %v1415 = vrot.slane %v1414, 4
      %v1416 = vrot.slane %v1270, 5
      %v1417 = vsel %vm1229, %v1415, %v1416
      %v1418 = vrot.slane %v1391, 5
      %v1419 = vrot.slane %v1418, 4
      %v1420 = vrot.slane %v1271, 5
      %v1421 = vsel %vm1229, %v1419, %v1420
      %v1422 = vrot.slane %v1392, 5
      %v1423 = vrot.slane %v1422, 4
      %v1424 = vrot.slane %v1272, 5
      %v1425 = vsel %vm1229, %v1423, %v1424
      %v1426 = vrot.slane %v1393, 5
      %v1427 = vrot.slane %v1426, 4
      %v1428 = vrot.slane %v1273, 5
      %v1429 = vsel %vm1229, %v1427, %v1428
      %v1430 = vrot.slane %v1394, 5
      %v1431 = vrot.slane %v1430, 4
      %v1432 = vrot.slane %v1274, 5
      %v1433 = vsel %vm1229, %v1431, %v1432
      %v1434 = vrot.slane %v1395, 5
      %v1435 = vrot.slane %v1434, 4
      %v1436 = vrot.slane %v1275, 5
      %v1437 = vsel %vm1229, %v1435, %v1436
      %v1438 = vrot.slane %v1396, 5
      %v1439 = vrot.slane %v1438, 4
      %v1440 = vrot.slane %v1276, 5
      %v1441 = vsel %vm1229, %v1439, %v1440
      %v1442 = vrot.slane %v1397, 5
      %v1443 = vrot.slane %v1442, 4
      %v1444 = vrot.slane %v1277, 5
      %v1445 = vsel %vm1229, %v1443, %v1444
      %s1446 = scalar_lea.vmem [#allocation2], 16
      %v1447 = vld [vmem:[%s1446] sm:$0xf]
      %v1448 = vld [vmem:[%s1446 + $0x8] sm:$0xf]
      %v1449 = vld [vmem:[%s1446 + $0x10] sm:$0xf]
      %v1450 = vld [vmem:[%s1446 + $0x18] sm:$0xf]
      %v1451 = vld [vmem:[%s1446 + $0x20] sm:$0xf]
      %v1452 = vld [vmem:[%s1446 + $0x28] sm:$0xf]
      %v1453 = vld [vmem:[%s1446 + $0x30] sm:$0xf]
      %v1454 = vld [vmem:[%s1446 + $0x38] sm:$0xf]
      %v1455 = vld [vmem:[%s1446 + $0x4] sm:$0x1]
      %v1456 = vld [vmem:[%s1446 + $0xc] sm:$0x1]
      %v1457 = vld [vmem:[%s1446 + $0x14] sm:$0x1]
      %v1458 = vld [vmem:[%s1446 + $0x1c] sm:$0x1]
      %v1459 = vld [vmem:[%s1446 + $0x24] sm:$0x1]
      %v1460 = vld [vmem:[%s1446 + $0x2c] sm:$0x1]
      %v1461 = vld [vmem:[%s1446 + $0x34] sm:$0x1]
      %v1462 = vld [vmem:[%s1446 + $0x3c] sm:$0x1]
      %v1464 = vshrl.u32 %v1447, 16
      %v1466 = vrot.slane %v1464, 4
      %v1467 = vshll.u32 %v1447, 16
      %v1469 = vrot.slane %v1467, 5
      %v1470 = vor.u32 %v1466, %v1469
      %v1471 = vrot.slane %v1470, 4
      %v1473 = vshll.u32 %v1455, 16
      %v1475 = vrot.slane %v1473, 5
      %v1476 = vsel %vm802, %v1471, %v1475
      %v1478 = vshrl.u32 %v1448, 16
      %v1480 = vrot.slane %v1478, 4
      %v1481 = vshll.u32 %v1448, 16
      %v1483 = vrot.slane %v1481, 5
      %v1484 = vor.u32 %v1480, %v1483
      %v1485 = vrot.slane %v1484, 4
      %v1487 = vshll.u32 %v1456, 16
      %v1489 = vrot.slane %v1487, 5
      %v1490 = vsel %vm802, %v1485, %v1489
      %v1492 = vshrl.u32 %v1449, 16
      %v1494 = vrot.slane %v1492, 4
      %v1495 = vshll.u32 %v1449, 16
      %v1497 = vrot.slane %v1495, 5
      %v1498 = vor.u32 %v1494, %v1497
      %v1499 = vrot.slane %v1498, 4
      %v1501 = vshll.u32 %v1457, 16
      %v1503 = vrot.slane %v1501, 5
      %v1504 = vsel %vm802, %v1499, %v1503
      %v1506 = vshrl.u32 %v1450, 16
      %v1508 = vrot.slane %v1506, 4
      %v1509 = vshll.u32 %v1450, 16
      %v1511 = vrot.slane %v1509, 5
      %v1512 = vor.u32 %v1508, %v1511
      %v1513 = vrot.slane %v1512, 4
      %v1515 = vshll.u32 %v1458, 16
      %v1517 = vrot.slane %v1515, 5
      %v1518 = vsel %vm802, %v1513, %v1517
      %v1520 = vshrl.u32 %v1451, 16
      %v1522 = vrot.slane %v1520, 4
      %v1523 = vshll.u32 %v1451, 16
      %v1525 = vrot.slane %v1523, 5
      %v1526 = vor.u32 %v1522, %v1525
      %v1527 = vrot.slane %v1526, 4
      %v1529 = vshll.u32 %v1459, 16
      %v1531 = vrot.slane %v1529, 5
      %v1532 = vsel %vm802, %v1527, %v1531
      %v1534 = vshrl.u32 %v1452, 16
      %v1536 = vrot.slane %v1534, 4
      %v1537 = vshll.u32 %v1452, 16
      %v1539 = vrot.slane %v1537, 5
      %v1540 = vor.u32 %v1536, %v1539
      %v1541 = vrot.slane %v1540, 4
      %v1543 = vshll.u32 %v1460, 16
      %v1545 = vrot.slane %v1543, 5
      %v1546 = vsel %vm802, %v1541, %v1545
      %v1548 = vshrl.u32 %v1453, 16
      %v1550 = vrot.slane %v1548, 4
      %v1551 = vshll.u32 %v1453, 16
      %v1553 = vrot.slane %v1551, 5
      %v1554 = vor.u32 %v1550, %v1553
      %v1555 = vrot.slane %v1554, 4
      %v1557 = vshll.u32 %v1461, 16
      %v1559 = vrot.slane %v1557, 5
      %v1560 = vsel %vm802, %v1555, %v1559
      %v1562 = vshrl.u32 %v1454, 16
      %v1564 = vrot.slane %v1562, 4
      %v1565 = vshll.u32 %v1454, 16
      %v1567 = vrot.slane %v1565, 5
      %v1568 = vor.u32 %v1564, %v1567
      %v1569 = vrot.slane %v1568, 4
      %v1571 = vshll.u32 %v1462, 16
      %v1573 = vrot.slane %v1571, 5
      %v1574 = vsel %vm802, %v1569, %v1573
      %v1575 = vld [vmem:[%s1446] sm:$0xe]
      %v1576 = vld [vmem:[%s1446 + $0x8] sm:$0xe]
      %v1577 = vld [vmem:[%s1446 + $0x10] sm:$0xe]
      %v1578 = vld [vmem:[%s1446 + $0x18] sm:$0xe]
      %v1579 = vld [vmem:[%s1446 + $0x20] sm:$0xe]
      %v1580 = vld [vmem:[%s1446 + $0x28] sm:$0xe]
      %v1581 = vld [vmem:[%s1446 + $0x30] sm:$0xe]
      %v1582 = vld [vmem:[%s1446 + $0x38] sm:$0xe]
      %v1599 = vrot.slane %v1575, 5
      %v1600 = vrot.slane %v1599, 4
      %v1601 = vrot.slane %v1455, 5
      %v1602 = vsel %vm1229, %v1600, %v1601
      %v1603 = vrot.slane %v1576, 5
      %v1604 = vrot.slane %v1603, 4
      %v1605 = vrot.slane %v1456, 5
      %v1606 = vsel %vm1229, %v1604, %v1605
      %v1607 = vrot.slane %v1577, 5
      %v1608 = vrot.slane %v1607, 4
      %v1609 = vrot.slane %v1457, 5
      %v1610 = vsel %vm1229, %v1608, %v1609
      %v1611 = vrot.slane %v1578, 5
      %v1612 = vrot.slane %v1611, 4
      %v1613 = vrot.slane %v1458, 5
      %v1614 = vsel %vm1229, %v1612, %v1613
      %v1615 = vrot.slane %v1579, 5
      %v1616 = vrot.slane %v1615, 4
      %v1617 = vrot.slane %v1459, 5
      %v1618 = vsel %vm1229, %v1616, %v1617
      %v1619 = vrot.slane %v1580, 5
      %v1620 = vrot.slane %v1619, 4
      %v1621 = vrot.slane %v1460, 5
      %v1622 = vsel %vm1229, %v1620, %v1621
      %v1623 = vrot.slane %v1581, 5
      %v1624 = vrot.slane %v1623, 4
      %v1625 = vrot.slane %v1461, 5
      %v1626 = vsel %vm1229, %v1624, %v1625
      %v1627 = vrot.slane %v1582, 5
      %v1628 = vrot.slane %v1627, 4
      %v1629 = vrot.slane %v1462, 5
      %v1630 = vsel %vm1229, %v1628, %v1629
      %v1639 = vunpack.c.l.b16 %v1075
      %v1640 = vunpack.c.l.b16 %v1076
      %v1641 = vunpack.c.l.b16 %v1077
      %v1642 = vunpack.c.l.b16 %v1078
      %v1643 = vunpack.c.l.b16 %v1079
      %v1644 = vunpack.c.l.b16 %v1080
      %v1645 = vunpack.c.l.b16 %v1081
      %v1646 = vunpack.c.l.b16 %v1082
      %v1647 = vpack.c.b16 %v1640, %v1639
      %v1648 = vpack.c.b16 %v1642, %v1641
      %v1649 = vpack.c.b16 %v1644, %v1643
      %v1650 = vpack.c.b16 %v1646, %v1645
      %v1651 = vunpack.c.l.b16 %v1104
      %v1652 = vunpack.c.l.b16 %v1118
      %v1653 = vunpack.c.l.b16 %v1132
      %v1654 = vunpack.c.l.b16 %v1146
      %v1655 = vunpack.c.l.b16 %v1160
      %v1656 = vunpack.c.l.b16 %v1174
      %v1657 = vunpack.c.l.b16 %v1188
      %v1658 = vunpack.c.l.b16 %v1202
      %v1659 = vpack.c.b16 %v1652, %v1651
      %v1660 = vpack.c.b16 %v1654, %v1653
      %v1661 = vpack.c.b16 %v1656, %v1655
      %v1662 = vpack.c.b16 %v1658, %v1657
      %1663 = vrot.lane.b32.xlu0 %v1659, 32
      %v1664 = vpop.permute.xlu0 %1663
      %1665 = vrot.lane.b32.xlu0 %v1660, 32
      %v1666 = vpop.permute.xlu0 %1665
      %1667 = vrot.lane.b32.xlu0 %v1661, 32
      %v1668 = vpop.permute.xlu0 %1667
      %1669 = vrot.lane.b32.xlu0 %v1662, 32
      %v1670 = vpop.permute.xlu0 %1669
      %v1671 = vunpack.c.l.b16 %v1233
      %v1672 = vunpack.c.l.b16 %v1237
      %v1673 = vunpack.c.l.b16 %v1241
      %v1674 = vunpack.c.l.b16 %v1245
      %v1675 = vunpack.c.l.b16 %v1249
      %v1676 = vunpack.c.l.b16 %v1253
      %v1677 = vunpack.c.l.b16 %v1257
      %v1678 = vunpack.c.l.b16 %v1261
      %v1679 = vpack.c.b16 %v1672, %v1671
      %v1680 = vpack.c.b16 %v1674, %v1673
      %v1681 = vpack.c.b16 %v1676, %v1675
      %v1682 = vpack.c.b16 %v1678, %v1677
      %1683 = vrot.lane.b32.xlu0 %v1679, 64
      %v1684 = vpop.permute.xlu0 %1683
      %1685 = vrot.lane.b32.xlu0 %v1680, 64
      %v1686 = vpop.permute.xlu0 %1685
      %1687 = vrot.lane.b32.xlu0 %v1681, 64
      %v1688 = vpop.permute.xlu0 %1687
      %1689 = vrot.lane.b32.xlu0 %v1682, 64
      %v1690 = vpop.permute.xlu0 %1689
      %v1699 = vunpack.c.l.b16 %v1262
      %v1700 = vunpack.c.l.b16 %v1263
      %v1701 = vunpack.c.l.b16 %v1264
      %v1702 = vunpack.c.l.b16 %v1265
      %v1703 = vunpack.c.l.b16 %v1266
      %v1704 = vunpack.c.l.b16 %v1267
      %v1705 = vunpack.c.l.b16 %v1268
      %v1706 = vunpack.c.l.b16 %v1269
      %v1707 = vpack.c.b16 %v1700, %v1699
      %v1708 = vpack.c.b16 %v1702, %v1701
      %v1709 = vpack.c.b16 %v1704, %v1703
      %v1710 = vpack.c.b16 %v1706, %v1705
      %1711 = vrot.lane.b32.xlu0 %v1707, 96
      %v1712 = vpop.permute.xlu0 %1711
      %1713 = vrot.lane.b32.xlu0 %v1708, 96
      %v1714 = vpop.permute.xlu0 %1713
      %1715 = vrot.lane.b32.xlu0 %v1709, 96
      %v1716 = vpop.permute.xlu0 %1715
      %1717 = vrot.lane.b32.xlu0 %v1710, 96
      %v1718 = vpop.permute.xlu0 %1717
      %v1719 = vunpack.c.l.b16 %v1291
      %v1720 = vunpack.c.l.b16 %v1305
      %v1721 = vunpack.c.l.b16 %v1319
      %v1722 = vunpack.c.l.b16 %v1333
      %v1723 = vunpack.c.l.b16 %v1347
      %v1724 = vunpack.c.l.b16 %v1361
      %v1725 = vunpack.c.l.b16 %v1375
      %v1726 = vunpack.c.l.b16 %v1389
      %v1727 = vpack.c.b16 %v1720, %v1719
      %v1728 = vpack.c.b16 %v1722, %v1721
      %v1729 = vpack.c.b16 %v1724, %v1723
      %v1730 = vpack.c.b16 %v1726, %v1725
      %v1731 = vunpack.c.l.b16 %v1417
      %v1732 = vunpack.c.l.b16 %v1421
      %v1733 = vunpack.c.l.b16 %v1425
      %v1734 = vunpack.c.l.b16 %v1429
      %v1735 = vunpack.c.l.b16 %v1433
      %v1736 = vunpack.c.l.b16 %v1437
      %v1737 = vunpack.c.l.b16 %v1441
      %v1738 = vunpack.c.l.b16 %v1445
      %v1739 = vpack.c.b16 %v1732, %v1731
      %v1740 = vpack.c.b16 %v1734, %v1733
      %v1741 = vpack.c.b16 %v1736, %v1735
      %v1742 = vpack.c.b16 %v1738, %v1737
      %1743 = vrot.lane.b32.xlu0 %v1739, 32
      %v1744 = vpop.permute.xlu0 %1743
      %1745 = vrot.lane.b32.xlu0 %v1740, 32
      %v1746 = vpop.permute.xlu0 %1745
      %1747 = vrot.lane.b32.xlu0 %v1741, 32
      %v1748 = vpop.permute.xlu0 %1747
      %1749 = vrot.lane.b32.xlu0 %v1742, 32
      %v1750 = vpop.permute.xlu0 %1749
      %v1759 = vunpack.c.l.b16 %v1447
      %v1760 = vunpack.c.l.b16 %v1448
      %v1761 = vunpack.c.l.b16 %v1449
      %v1762 = vunpack.c.l.b16 %v1450
      %v1763 = vunpack.c.l.b16 %v1451
      %v1764 = vunpack.c.l.b16 %v1452
      %v1765 = vunpack.c.l.b16 %v1453
      %v1766 = vunpack.c.l.b16 %v1454
      %v1767 = vpack.c.b16 %v1760, %v1759
      %v1768 = vpack.c.b16 %v1762, %v1761
      %v1769 = vpack.c.b16 %v1764, %v1763
      %v1770 = vpack.c.b16 %v1766, %v1765
      %1771 = vrot.lane.b32.xlu0 %v1767, 64
      %v1772 = vpop.permute.xlu0 %1771
      %1773 = vrot.lane.b32.xlu0 %v1768, 64
      %v1774 = vpop.permute.xlu0 %1773
      %1775 = vrot.lane.b32.xlu0 %v1769, 64
      %v1776 = vpop.permute.xlu0 %1775
      %1777 = vrot.lane.b32.xlu0 %v1770, 64
      %v1778 = vpop.permute.xlu0 %1777
      %v1779 = vunpack.c.l.b16 %v1476
      %v1780 = vunpack.c.l.b16 %v1490
      %v1781 = vunpack.c.l.b16 %v1504
      %v1782 = vunpack.c.l.b16 %v1518
      %v1783 = vunpack.c.l.b16 %v1532
      %v1784 = vunpack.c.l.b16 %v1546
      %v1785 = vunpack.c.l.b16 %v1560
      %v1786 = vunpack.c.l.b16 %v1574
      %v1787 = vpack.c.b16 %v1780, %v1779
      %v1788 = vpack.c.b16 %v1782, %v1781
      %v1789 = vpack.c.b16 %v1784, %v1783
      %v1790 = vpack.c.b16 %v1786, %v1785
      %1791 = vrot.lane.b32.xlu0 %v1787, 96
      %v1792 = vpop.permute.xlu0 %1791
      %1793 = vrot.lane.b32.xlu0 %v1788, 96
      %v1794 = vpop.permute.xlu0 %1793
      %1795 = vrot.lane.b32.xlu0 %v1789, 96
      %v1796 = vpop.permute.xlu0 %1795
      %1797 = vrot.lane.b32.xlu0 %v1790, 96
      %v1798 = vpop.permute.xlu0 %1797
      %v1799 = vunpack.c.l.b16 %v1602
      %v1800 = vunpack.c.l.b16 %v1606
      %v1801 = vunpack.c.l.b16 %v1610
      %v1802 = vunpack.c.l.b16 %v1614
      %v1803 = vunpack.c.l.b16 %v1618
      %v1804 = vunpack.c.l.b16 %v1622
      %v1805 = vunpack.c.l.b16 %v1626
      %v1806 = vunpack.c.l.b16 %v1630
      %v1807 = vpack.c.b16 %v1800, %v1799
      %v1808 = vpack.c.b16 %v1802, %v1801
      %v1809 = vpack.c.b16 %v1804, %v1803
      %v1810 = vpack.c.b16 %v1806, %v1805
      %v1813 = vsel %vm464, %v1647, %v1664
      %v1816 = vsel %vm464, %v1648, %v1666
      %v1819 = vsel %vm464, %v1649, %v1668
      %v1822 = vsel %vm464, %v1650, %v1670
      %vm1823 = vcmask 523264
      %v1825 = vsel %vm1823, %v1813, %v1684
      %v1827 = vsel %vm1823, %v1816, %v1686
      %v1829 = vsel %vm1823, %v1819, %v1688
      %v1831 = vsel %vm1823, %v1822, %v1690
      %vm1832 = vcmask 785408
      %v1834 = vsel %vm1832, %v1825, %v1712
      %v1837 = vsel %vm1832, %v1827, %v1714
      %v1840 = vsel %vm1832, %v1829, %v1716
      %v1843 = vsel %vm1832, %v1831, %v1718
      %v1847 = vsel %vm464, %v1727, %v1744
      %v1850 = vsel %vm464, %v1728, %v1746
      %v1853 = vsel %vm464, %v1729, %v1748
      %v1856 = vsel %vm464, %v1730, %v1750
      %v1858 = vsel %vm1823, %v1847, %v1772
      %v1860 = vsel %vm1823, %v1850, %v1774
      %v1862 = vsel %vm1823, %v1853, %v1776
      %v1864 = vsel %vm1823, %v1856, %v1778
      %v1866 = vsel %vm1832, %v1858, %v1792
      %v1869 = vsel %vm1832, %v1860, %v1794
      %v1872 = vsel %vm1832, %v1862, %v1796
      %v1875 = vsel %vm1832, %v1864, %v1798
      %v1877 = vld [vmem:[%s5] sm:$0xf]
      %v1878 = vld [vmem:[%s5 + $0x4] sm:$0xf]
      %v1879 = vld [vmem:[%s5 + $0x8] sm:$0xf]
      %v1880 = vld [vmem:[%s5 + $0xc] sm:$0xf]
      %v1881 = vld [vmem:[%s5 + $0x10] sm:$0xf]
      %v1882 = vld [vmem:[%s5 + $0x14] sm:$0xf]
      %v1883 = vld [vmem:[%s5 + $0x18] sm:$0xf]
      %v1884 = vld [vmem:[%s5 + $0x1c] sm:$0xf]
      %v1885 = vld [vmem:[%s5 + $0x20] sm:$0xf]
      %v1886 = vld [vmem:[%s5 + $0x24] sm:$0xf]
      %v1887 = vld [vmem:[%s5 + $0x28] sm:$0xf]
      %v1888 = vld [vmem:[%s5 + $0x2c] sm:$0xf]
      %v1889 = vld [vmem:[%s5 + $0x30] sm:$0xf]
      %v1890 = vld [vmem:[%s5 + $0x34] sm:$0xf]
      %v1891 = vld [vmem:[%s5 + $0x38] sm:$0xf]
      %v1892 = vld [vmem:[%s5 + $0x3c] sm:$0xf]
      %v1893 = vld [vmem:[%s5 + $0x40] sm:$0xf]
      %v1894 = vld [vmem:[%s5 + $0x44] sm:$0xf]
      %v1895 = vld [vmem:[%s5 + $0x48] sm:$0xf]
      %v1896 = vld [vmem:[%s5 + $0x4c] sm:$0xf]
      %v1897 = vld [vmem:[%s5 + $0x50] sm:$0xf]
      %v1898 = vld [vmem:[%s5 + $0x54] sm:$0xf]
      %v1899 = vld [vmem:[%s5 + $0x58] sm:$0xf]
      %v1900 = vld [vmem:[%s5 + $0x5c] sm:$0xf]
      %v1901 = vld [vmem:[%s5 + $0x60] sm:$0xf]
      %v1902 = vld [vmem:[%s5 + $0x64] sm:$0xf]
      %v1903 = vld [vmem:[%s5 + $0x68] sm:$0xf]
      %v1904 = vld [vmem:[%s5 + $0x6c] sm:$0xf]
      %v1905 = vld [vmem:[%s5 + $0x70] sm:$0xf]
      %v1906 = vld [vmem:[%s5 + $0x74] sm:$0xf]
      %v1907 = vld [vmem:[%s5 + $0x78] sm:$0xf]
      %v1908 = vld [vmem:[%s5 + $0x7c] sm:$0xf]
      %v1909 = vld [vmem:[%s5 + $0x80] sm:$0xf]
      %v1910 = vld [vmem:[%s5 + $0x84] sm:$0xf]
      %v1911 = vld [vmem:[%s5 + $0x88] sm:$0xf]
      %v1912 = vld [vmem:[%s5 + $0x8c] sm:$0xf]
      %s1913 = scalar_lea.vmem %s6, 1
      %v1914 = vld [vmem:[%s1913] sm:$0x1]
      %v1916 = vperm.slane %v1914, 0
      %v1954 = vunpack.c.l.b16 %v1877
      %v1955 = vunpack.c.l.b16 %v1878
      %v1956 = vunpack.c.l.b16 %v1879
      %v1957 = vunpack.c.l.b16 %v1880
      %v1958 = vunpack.c.l.b16 %v1881
      %v1959 = vunpack.c.l.b16 %v1882
      %v1960 = vunpack.c.l.b16 %v1883
      %v1961 = vunpack.c.l.b16 %v1884
      %v1962 = vunpack.c.l.b16 %v1885
      %v1963 = vunpack.c.l.b16 %v1886
      %v1964 = vunpack.c.l.b16 %v1887
      %v1965 = vunpack.c.l.b16 %v1888
      %v1966 = vunpack.c.l.b16 %v1889
      %v1967 = vunpack.c.l.b16 %v1890
      %v1968 = vunpack.c.l.b16 %v1891
      %v1969 = vunpack.c.l.b16 %v1892
      %v1970 = vunpack.c.l.b16 %v1893
      %v1971 = vunpack.c.l.b16 %v1894
      %v1972 = vunpack.c.l.b16 %v1895
      %v1973 = vunpack.c.l.b16 %v1896
      %v1974 = vunpack.c.l.b16 %v1897
      %v1975 = vunpack.c.l.b16 %v1898
      %v1976 = vunpack.c.l.b16 %v1899
      %v1977 = vunpack.c.l.b16 %v1900
      %v1978 = vunpack.c.l.b16 %v1901
      %v1979 = vunpack.c.l.b16 %v1902
      %v1980 = vunpack.c.l.b16 %v1903
      %v1981 = vunpack.c.l.b16 %v1904
      %v1982 = vunpack.c.l.b16 %v1905
      %v1983 = vunpack.c.l.b16 %v1906
      %v1984 = vunpack.c.l.b16 %v1907
      %v1985 = vunpack.c.l.b16 %v1908
      %v1986 = vunpack.c.l.b16 %v1909
      %v1987 = vunpack.c.l.b16 %v1910
      %v1988 = vunpack.c.l.b16 %v1911
      %v1989 = vunpack.c.l.b16 %v1912
      %v1990 = vpack.c.b16 %v1955, %v1954
      %v1991 = vpack.c.b16 %v1957, %v1956
      %v1992 = vpack.c.b16 %v1959, %v1958
      %v1993 = vpack.c.b16 %v1961, %v1960
      %v1994 = vpack.c.b16 %v1963, %v1962
      %v1995 = vpack.c.b16 %v1965, %v1964
      %v1996 = vpack.c.b16 %v1967, %v1966
      %v1997 = vpack.c.b16 %v1969, %v1968
      %v1998 = vpack.c.b16 %v1971, %v1970
      %v1999 = vpack.c.b16 %v1973, %v1972
      %v2000 = vpack.c.b16 %v1975, %v1974
      %v2001 = vpack.c.b16 %v1977, %v1976
      %v2002 = vpack.c.b16 %v1979, %v1978
      %v2003 = vpack.c.b16 %v1981, %v1980
      %v2004 = vpack.c.b16 %v1983, %v1982
      %v2005 = vpack.c.b16 %v1985, %v1984
      %v2006 = vpack.c.b16 %v1987, %v1986
      %v2007 = vpack.c.b16 %v1989, %v1988
      %v2027 = vsel %vm464, %v1807, 0
      %v2030 = vsel %vm464, %v1808, 0
      %v2033 = vsel %vm464, %v1809, 0
      %v2036 = vsel %vm464, %v1810, 0
      %2038 = vmatpush.bf16.msra.mxu0 %v1997
      %2039 = vmatpush.bf16.msra.mxu0 %v1996
      %2040 = vmatpush.bf16.msra.mxu0 %v1995
      %2041 = vmatpush.bf16.msra.mxu0 %v1994
      %2042 = vmatpush.bf16.msra.mxu0 %v1993
      %2043 = vmatpush.bf16.msra.mxu0 %v1992
      %2044 = vmatpush.bf16.msra.mxu0 %v1991
      %2045 = vmatpush.bf16.msra.mxu0 %v1990
      %2046 = vmatmul.bf16.gmra.mxu0 %v1834
      %v2047 = vpop.f32.mrf.mxu0
      %v2048 = vadd.f32 %v1916, %v2047
      %v2049 = vpop.f32.mrf.mxu0
      %v2050 = vadd.f32 %v1916, %v2049
      %2051 = vmatmul.bf16.gmra.mxu0 %v1837
      %v2052 = vpop.f32.mrf.mxu0
      %v2053 = vadd.f32 %v1916, %v2052
      %v2054 = vpop.f32.mrf.mxu0
      %v2055 = vadd.f32 %v1916, %v2054
      %2056 = vmatmul.bf16.gmra.mxu0 %v1840
      %v2057 = vpop.f32.mrf.mxu0
      %v2058 = vadd.f32 %v1916, %v2057
      %v2059 = vpop.f32.mrf.mxu0
      %v2060 = vadd.f32 %v1916, %v2059
      %2061 = vmatmul.bf16.gmra.mxu0 %v1843
      %v2062 = vpop.f32.mrf.mxu0
      %v2063 = vadd.f32 %v1916, %v2062
      %v2064 = vpop.f32.mrf.mxu0
      %v2065 = vadd.f32 %v1916, %v2064
      %2066 = vdwg.mxu0
      %2067 = vmatpush.bf16.msra.mxu0 %v2005
      %2068 = vmatpush.bf16.msra.mxu0 %v2004
      %2069 = vmatpush.bf16.msra.mxu0 %v2003
      %2070 = vmatpush.bf16.msra.mxu0 %v2002
      %2071 = vmatpush.bf16.msra.mxu0 %v2001
      %2072 = vmatpush.bf16.msra.mxu0 %v2000
      %2073 = vmatpush.bf16.msra.mxu0 %v1999
      %2074 = vmatpush.bf16.msra.mxu0 %v1998
      %2075 = vmatmul.bf16.gmra.mxu0 %v1866
      %v2076 = vpop.f32.mrf.mxu0
      %v2077 = vadd.f32 %v2048, %v2076
      %v2078 = vpop.f32.mrf.mxu0
      %v2079 = vadd.f32 %v2050, %v2078
      %2080 = vmatmul.bf16.gmra.mxu0 %v1869
      %v2081 = vpop.f32.mrf.mxu0
      %v2082 = vadd.f32 %v2053, %v2081
      %v2083 = vpop.f32.mrf.mxu0
      %v2084 = vadd.f32 %v2055, %v2083
      %2085 = vmatmul.bf16.gmra.mxu0 %v1872
      %v2086 = vpop.f32.mrf.mxu0
      %v2087 = vadd.f32 %v2058, %v2086
      %v2088 = vpop.f32.mrf.mxu0
      %v2089 = vadd.f32 %v2060, %v2088
      %2090 = vmatmul.bf16.gmra.mxu0 %v1875
      %v2091 = vpop.f32.mrf.mxu0
      %v2092 = vadd.f32 %v2063, %v2091
      %v2093 = vpop.f32.mrf.mxu0
      %v2094 = vadd.f32 %v2065, %v2093
      %2095 = vdwg.mxu0
      %2096 = vmatpush.bf16.msra.mxu0 0
      %2097 = vmatpush.bf16.msra.mxu0 0
      %2098 = vmatpush.bf16.msra.mxu0 0
      %2099 = vmatpush.bf16.msra.mxu0 0
      %2100 = vmatpush.bf16.msra.mxu0 0
      %2101 = vmatpush.bf16.msra.mxu0 0
      %2102 = vmatpush.bf16.msra.mxu0 %v2007
      %2103 = vmatpush.bf16.msra.mxu0 %v2006
      %2104 = vmatmul.bf16.gmra.mxu0 %v2027
      %v2105 = vpop.f32.mrf.mxu0
      %v2106 = vadd.f32 %v2077, %v2105
      %v2107 = vpop.f32.mrf.mxu0
      %v2108 = vadd.f32 %v2079, %v2107
      %2109 = vmatmul.bf16.gmra.mxu0 %v2030
      %v2110 = vpop.f32.mrf.mxu0
      %v2111 = vadd.f32 %v2082, %v2110
      %v2112 = vpop.f32.mrf.mxu0
      %v2113 = vadd.f32 %v2084, %v2112
      %2114 = vmatmul.bf16.gmra.mxu0 %v2033
      %v2115 = vpop.f32.mrf.mxu0
      %v2116 = vadd.f32 %v2087, %v2115
      %v2117 = vpop.f32.mrf.mxu0
      %v2118 = vadd.f32 %v2089, %v2117
      %2119 = vmatmul.bf16.gmra.mxu0 %v2036
      %v2120 = vpop.f32.mrf.mxu0
      %v2121 = vadd.f32 %v2092, %v2120
      %v2122 = vpop.f32.mrf.mxu0
      %v2123 = vadd.f32 %v2094, %v2122
      %2124 = vdwg.mxu0
      %vm2125 = vcmp.gt.f32.partialorder %v2106, 0.0
      %vm2126 = vcmp.gt.f32.partialorder %v2108, 0.0
      %vm2127 = vcmp.gt.f32.partialorder %v2111, 0.0
      %vm2128 = vcmp.gt.f32.partialorder %v2113, 0.0
      %vm2129 = vcmp.gt.f32.partialorder %v2116, 0.0
      %vm2130 = vcmp.gt.f32.partialorder %v2118, 0.0
      %vm2131 = vcmp.gt.f32.partialorder %v2121, 0.0
      %vm2132 = vcmp.gt.f32.partialorder %v2123, 0.0
      %v2133 = vmul.f32 %v2106, 0.2
      %v2134 = vmul.f32 %v2108, 0.2
      %v2135 = vmul.f32 %v2111, 0.2
      %v2136 = vmul.f32 %v2113, 0.2
      %v2137 = vmul.f32 %v2116, 0.2
      %v2138 = vmul.f32 %v2118, 0.2
      %v2139 = vmul.f32 %v2121, 0.2
      %v2140 = vmul.f32 %v2123, 0.2
      %v2141 = vsel %vm2125, %v2106, %v2133
      %v2142 = vsel %vm2126, %v2108, %v2134
      %v2143 = vsel %vm2127, %v2111, %v2135
      %v2144 = vsel %vm2128, %v2113, %v2136
      %v2145 = vsel %vm2129, %v2116, %v2137
      %v2146 = vsel %vm2130, %v2118, %v2138
      %v2147 = vsel %vm2131, %v2121, %v2139
      %v2148 = vsel %vm2132, %v2123, %v2140
      %v2149 = vsel %vm1020, %v2141, 0.0
      %v2150 = vsel %vm1021, %v2142, 0.0
      %v2151 = vsel %vm1022, %v2143, 0.0
      %v2152 = vsel %vm1023, %v2144, 0.0
      %v2153 = vsel %vm1024, %v2145, 0.0
      %v2154 = vsel %vm1025, %v2146, 0.0
      %v2155 = vsel %vm1026, %v2147, 0.0
      %v2156 = vsel %vm1027, %v2148, 0.0
      %v2157 = vsel %vm464, %v2149, 0.0
      %v2158 = vsel %vm464, %v2150, 0.0
      %v2159 = vadd.f32 %v2157, %v2158
      %v2160 = vsel %vm464, %v2151, 0.0
      %v2161 = vadd.f32 %v2159, %v2160
      %v2162 = vsel %vm464, %v2152, 0.0
      %v2163 = vadd.f32 %v2161, %v2162
      %v2164 = vsel %vm464, %v2153, 0.0
      %v2165 = vadd.f32 %v2163, %v2164
      %v2166 = vsel %vm464, %v2154, 0.0
      %v2167 = vadd.f32 %v2165, %v2166
      %v2168 = vsel %vm464, %v2155, 0.0
      %v2169 = vadd.f32 %v2167, %v2168
      %v2170 = vsel %vm464, %v2156, 0.0
      %v2171 = vadd.f32 %v2169, %v2170
      %v2172 = vrot.slane %v2171, 4
      %v2173 = vadd.f32 %v2171, %v2172
      %v2174 = vrot.slane %v2173, 2
      %v2175 = vadd.f32 %v2173, %v2174
      %v2176 = vrot.slane %v2175, 1
      %v2177 = vadd.f32 %v2175, %v2176
      %2179 = vrot.lane.b32.xlu0 %v2177, 32
      %v2180 = vpop.permute.xlu0 %2179
      %vm2182 = vcmask 516352
      %2183 = vst.msk [vmem:[%s385] sm:$0x1] %vm2182, %v2180
      %v2184 = vpack.c.bf16 %v2141, %v2141
      %v2185 = vpack.c.bf16 %v2142, %v2142
      %v2186 = vpack.c.bf16 %v2143, %v2143
      %v2187 = vpack.c.bf16 %v2144, %v2144
      %v2188 = vpack.c.bf16 %v2145, %v2145
      %v2189 = vpack.c.bf16 %v2146, %v2146
      %v2190 = vpack.c.bf16 %v2147, %v2147
      %v2191 = vpack.c.bf16 %v2148, %v2148
      %2200 = vrot.lane.b32.xlu0 %v2184, 32
      %v2201 = vpop.permute.xlu0 %2200
      %2202 = vrot.lane.b32.xlu0 %v2185, 32
      %v2203 = vpop.permute.xlu0 %2202
      %2204 = vrot.lane.b32.xlu0 %v2186, 32
      %v2205 = vpop.permute.xlu0 %2204
      %2206 = vrot.lane.b32.xlu0 %v2187, 32
      %v2207 = vpop.permute.xlu0 %2206
      %2208 = vrot.lane.b32.xlu0 %v2188, 32
      %v2209 = vpop.permute.xlu0 %2208
      %2210 = vrot.lane.b32.xlu0 %v2189, 32
      %v2211 = vpop.permute.xlu0 %2210
      %2212 = vrot.lane.b32.xlu0 %v2190, 32
      %v2213 = vpop.permute.xlu0 %2212
      %2214 = vrot.lane.b32.xlu0 %v2191, 32
      %v2215 = vpop.permute.xlu0 %2214
      %vm2224 = vcmask 519424
      %2225 = vst.msk [vmem:[%s378] sm:$0xf] %vm2224, %v2201
      %2226 = vst.msk [vmem:[%s378 + $0x4] sm:$0xf] %vm2224, %v2203
      %2227 = vst.msk [vmem:[%s378 + $0x8] sm:$0xf] %vm2224, %v2205
      %2228 = vst.msk [vmem:[%s378 + $0xc] sm:$0xf] %vm2224, %v2207
      %2229 = vst.msk [vmem:[%s378 + $0x10] sm:$0xf] %vm2224, %v2209
      %2230 = vst.msk [vmem:[%s378 + $0x14] sm:$0xf] %vm2224, %v2211
      %2231 = vst.msk [vmem:[%s378 + $0x18] sm:$0xf] %vm2224, %v2213
      %2232 = vst.msk [vmem:[%s378 + $0x1c] sm:$0xf] %vm2224, %v2215
      %s2233 = sadd.s32 %s24, %s25
      %p2234 = scmp.lt.s32.totalorder %s2233, 1
      %s2235 = scalar_select %p2234, %s2233, 1
      %s2236 = smul.addr %s2235, 8
      %s2237 = smul.addr %s2236, 4
      %s2238 = scalar_lea.vmem %s7, %s2237
      %p2239 = scmp.lt.s32.totalorder %s24, 1
      %s2240 = scalar_select %p2239, %s24, 1
      %p2241 = scmp.lt.s32.totalorder %s25, 0
      %s2242 = scalar_select %p2241, %s25, 0
      %s2243 = sadd.s32 %s2242, %s2240
      %s2244 = scalar_lea.vmem %s8, %s2243
      // Predicated region
      $region49: #{sk_unit_forward.3} parent=47 // pred_check
        %p2245 = pneg %p213
      $region50: #{sk_unit_forward.3} parent=47 // pred_check_branch
        %2247 = sbr.rel (%p2245) target = $region52
      $region51: #{sk_unit_forward.3} parent=47 // pred_region
        %s2248 = sadd.s32 %s24, %s25
      $region52: #{sk_unit_forward.3} parent=47 // pred_fallthru
        _
      // Predicated region
      $region53: #{sk_unit_forward.3} parent=47 // pred_check
        %p2249 = pneg %p241
      $region54: #{sk_unit_forward.3} parent=47 // pred_check_branch
        %2251 = sbr.rel (%p2249) target = $region56
      $region55: #{sk_unit_forward.3} parent=47 // pred_region
        _
      $region56: #{sk_unit_forward.3} parent=47 // pred_fallthru
        _
    $region48: #{sk_unit_forward.3} parent=5 // pred_fallthru
      _
    %p2252 = scmp.le.s32.totalorder 2, %s15
    // Predicated region
    $region57: #{sk_unit_forward.3} parent=5 // pred_check
      %p2253 = pneg %p2252
    $region58: #{sk_unit_forward.3} parent=5 // pred_check_branch
      %2255 = sbr.rel (%p2253) target = $region60
    $region59: #{sk_unit_forward.3} parent=5 // pred_region
      %s2256 = ssub.s32 %s15, 2
      // Predicated region
      $region61: #{sk_unit_forward.3} parent=59 // pred_check
        %p2257 = pneg %p219
      $region62: #{sk_unit_forward.3} parent=59 // pred_check_branch
        %2259 = sbr.rel (%p2257) target = $region64
      $region63: #{sk_unit_forward.3} parent=59 // pred_region
        %s2260 = sadd.s32 %s26, %s27
        %p2261 = scmp.lt.s32.totalorder %s2260, 1
        %s2262 = scalar_select %p2261, %s2260, 1
        %s2263 = smul.addr %s2262, 8
        %s2264 = smul.addr %s2263, 4
        %s2265 = scalar_lea.vmem %s7, %s2264
      $region64: #{sk_unit_forward.3} parent=59 // pred_fallthru
        _
      // Predicated region
      $region65: #{sk_unit_forward.3} parent=59 // pred_check
        %p2266 = pneg %p247
      $region66: #{sk_unit_forward.3} parent=59 // pred_check_branch
        %2268 = sbr.rel (%p2266) target = $region68
      $region67: #{sk_unit_forward.3} parent=59 // pred_region
        %p2269 = scmp.lt.s32.totalorder %s26, 1
        %s2270 = scalar_select %p2269, %s26, 1
        %p2271 = scmp.lt.s32.totalorder %s27, 0
        %s2272 = scalar_select %p2271, %s27, 0
        %s2273 = sadd.s32 %s2272, %s2270
        %s2274 = scalar_lea.vmem %s8, %s2273
      $region68: #{sk_unit_forward.3} parent=59 // pred_fallthru
        _
    $region60: #{sk_unit_forward.3} parent=5 // pred_fallthru
      _
  $region6: #{sk_unit_forward.3} parent=0 // loop_footer
    %s19 = sadd.s32 1, %s15
  $region7: #{sk_unit_forward.3} parent=0 // loop_footer_branch
    %14 = sbr.rel target = $region3
  $region8: #{sk_unit_forward.3} parent=0 // loop_exit
    _

</llo_original>
